<compile_context>
chip_gen: v5e
topology: v5e:2x2
jax: 0.10.0
libtpu: 0.0.40
codegen_flags: <defaults>
</compile_context>

<pallas_src>
import math

import jax
import jax.numpy as jnp
from jax.experimental import pallas as pl
from jax.experimental.pallas import tpu as pltpu

K_IN = 384 * 58          # 22272 = 174 * 128
LAST_DIMS = 128          # last_dims (lane-dense multiple of 128)
TK = 11136               # K tile (87 * 128): 2 grid steps over K


def _linear_kernel(x_ref, w_ref, b_ref, o_ref):
    """One K-tile of: out = x @ w (+ b on the last step).

    The resident f32 output block is the accumulator.
    x_ref : (B, K_IN) f32, fully resident
    w_ref : (TK, N)   bf16, streamed per K step
    b_ref : (1, N)    f32, resident
    o_ref : (B, N)    f32, resident accumulator
    """
    k = pl.program_id(0)

    @pl.when(k == 0)
    def _():
        o_ref[...] = jnp.zeros_like(o_ref)

    start = pl.multiple_of(k * TK, TK)
    x_tile = x_ref[:, pl.ds(start, TK)].astype(jnp.bfloat16)
    o_ref[...] += jnp.dot(x_tile, w_ref[...], preferred_element_type=jnp.float32)

    @pl.when(k == pl.num_programs(0) - 1)
    def _():
        o_ref[...] += b_ref[...]


def meta_fc1_forward(x1, w_t_bf16, b):
    """x1: (B, 384, 58) f32; w_t_bf16: (K_IN, last_dims) bf16 (pre-cast once);
    b: (last_dims,) f32.

    Returns (B, last_dims) f32, matching torch's Linear on x1.view(B, -1)
    (computed with bf16 operands / f32 accumulation).
    """
    batch = x1.shape[0]
    k_in, n = w_t_bf16.shape
    assert k_in == K_IN and k_in % TK == 0
    ksteps = k_in // TK

    # Flatten like torch .view (free metadata reshape); keep f32, cast in-kernel.
    x_flat = x1.reshape(batch, -1)           # (B, K_IN) f32
    b2d = b.reshape(1, n)                    # (1, N) f32, lane-dense

    return pl.pallas_call(
        _linear_kernel,
        out_shape=jax.ShapeDtypeStruct((batch, n), jnp.float32),
        grid_spec=pltpu.PrefetchScalarGridSpec(
            num_scalar_prefetch=0,
            grid=(ksteps,),
            in_specs=[
                # x: single resident block (~178 KB f32), sliced per K step.
                pl.BlockSpec((batch, k_in), lambda k: (0, 0)),
                # W: (TK, N) bf16 tile (~2.85 MB), double-buffered by Pallas.
                pl.BlockSpec((TK, n), lambda k: (k, 0)),
                # bias: tiny resident block, consumed in the epilogue.
                pl.BlockSpec((1, n), lambda k: (0, 0)),
            ],
            # Resident f32 output block = accumulator across the K reduction.
            out_specs=pl.BlockSpec((batch, n), lambda k: (0, 0)),
        ),
        compiler_params=pltpu.CompilerParams(
            dimension_semantics=("arbitrary",),   # K is a reduction axis
        ),
    )(x_flat, w_t_bf16, b2d)


def init_params(key, in_features, out_features):
    """Deterministic init matching nn.Linear default: U(-1/sqrt(K), 1/sqrt(K)).

    The weight is stored transposed (K, N) and pre-cast to bf16 ONCE so the
    per-call forward never pays a cast op.
    """
    kw, kb = jax.random.split(key)
    bound = 1.0 / math.sqrt(in_features)
    w_t = jax.random.uniform(
        kw, (in_features, out_features), jnp.float32, minval=-bound, maxval=bound
    )
    b = jax.random.uniform(
        kb, (out_features,), jnp.float32, minval=-bound, maxval=bound
    )
    return w_t.astype(jnp.bfloat16), b


if __name__ == "__main__":
    key = jax.random.PRNGKey(0)
    k0, k1, kp = jax.random.split(key, 3)

    batch = 2
    # x_list[0] is only used for its batch dimension in the PyTorch forward.
    x0 = jax.random.normal(k0, (batch, 2, 2), jnp.float32)
    x1 = jax.random.normal(k1, (batch, 384, 58), jnp.float32)
    x_list = [x0, x1]

    w_t_bf16, b = init_params(kp, K_IN, LAST_DIMS)

    out = meta_fc1_forward(x_list[1], w_t_bf16, b)
    out = jax.block_until_ready(out)

    # References.
    x_flat = x_list[1].reshape(batch, -1)
    wb = w_t_bf16.astype(jnp.float32)
    xb = x_flat.astype(jnp.bfloat16).astype(jnp.float32)
    # bf16-operand / f32-accumulation reference (kernel's math), tight tol.
    ref_bf16 = xb @ wb + b
    # Pure f32 reference (original module semantics), looser tolerance.
    ref_f32 = x_flat @ wb + b

    assert out.shape == (batch, LAST_DIMS)
    assert jnp.allclose(out, ref_bf16, atol=2e-3, rtol=2e-3), (
        float(jnp.max(jnp.abs(out - ref_bf16)))
    )
    assert jnp.allclose(out, ref_f32, atol=5e-2, rtol=5e-2), (
        float(jnp.max(jnp.abs(out - ref_f32)))
    )

    print("KERNEL_OK")
</pallas_src>

<mosaic_0001>
module attributes {stable_mosaic.version = 11 : i64} {
  func.func @_linear_kernel(%arg0: i32, %arg1: memref<2x22272xf32, #tpu.memory_space<vmem>>, %arg2: memref<11136x128xbf16, #tpu.memory_space<vmem>>, %arg3: memref<1x128xf32, #tpu.memory_space<vmem>>, %arg4: memref<2x128xf32, #tpu.memory_space<vmem>>) attributes {dimension_semantics = [#tpu.dimension_semantics<arbitrary>], iteration_bounds = array<i64: 2>, scalar_prefetch = 0 : i64, scratch_operands = 0 : i64, tpu.core_type = #tpu.core_type<tc>, window_params = [{pipeline_mode = #tpu.pipeline_mode<synchronous>, transform_indices = @transform_0, window_bounds = array<i64: 2, 22272>}, {transform_indices = @transform_1, window_bounds = array<i64: 11136, 128>}, {pipeline_mode = #tpu.pipeline_mode<synchronous>, transform_indices = @transform_2, window_bounds = array<i64: 1, 128>}, {pipeline_mode = #tpu.pipeline_mode<synchronous>, transform_indices = @transform_3, window_bounds = array<i64: 2, 128>}]} {
    %c0_i32 = arith.constant 0 : i32
    %0 = arith.cmpi eq, %arg0, %c0_i32 : i32
    %1 = arith.extui %0 : i1 to i32
    %c0_i32_0 = arith.constant 0 : i32
    %2 = arith.cmpi ne, %1, %c0_i32_0 : i32
    scf.if %2 {
      %cst_8 = arith.constant 0.000000e+00 : f32
      %16 = vector.broadcast %cst_8 : f32 to vector<2x128xf32>
      %c0_9 = arith.constant 0 : index
      %c0_10 = arith.constant 0 : index
      %17 = vector.load %arg4[%c0_9, %c0_10] : memref<2x128xf32, #tpu.memory_space<vmem>>, vector<2x128xf32>
      tpu.vector_store %arg4[%c0_9, %c0_10], %16 {strides = array<i32>} : memref<2x128xf32, #tpu.memory_space<vmem>>, vector<2x128xf32>,
    } else {
    }
    %c11136_i32 = arith.constant 11136 : i32
    %3 = arith.muli %arg0, %c11136_i32 : i32
    %4 = tpu.assume_multiple %3, 11136 : i32
    %c0 = arith.constant 0 : index
    %5 = arith.index_cast %4 : i32 to index
    %6 = vector.load %arg1[%c0, %5] : memref<2x22272xf32, #tpu.memory_space<vmem>>, vector<2x11136xf32>
    %7 = arith.truncf %6 : vector<2x11136xf32> to vector<2x11136xbf16>
    %c0_1 = arith.constant 0 : index
    %c0_2 = arith.constant 0 : index
    %8 = vector.load %arg4[%c0_1, %c0_2] : memref<2x128xf32, #tpu.memory_space<vmem>>, vector<2x128xf32>
    %c0_3 = arith.constant 0 : index
    %c0_4 = arith.constant 0 : index
    %9 = vector.load %arg2[%c0_3, %c0_4] : memref<11136x128xbf16, #tpu.memory_space<vmem>>, vector<11136x128xbf16>
    %cst = arith.constant dense<0.000000e+00> : vector<2x128xf32>
    %10 = tpu.matmul %7, %9, %cst {dimension_numbers = #tpu.dot_dimension_numbers<[1], [0], [0], [1], [0, 0, 1, 1], [], []>} : vector<2x11136xbf16>, vector<11136x128xbf16>, vector<2x128xf32> -> vector<2x128xf32>
    %11 = arith.addf %8, %10 : vector<2x128xf32>
    %c0_5 = arith.constant 0 : index
    %c0_6 = arith.constant 0 : index
    %12 = vector.load %arg4[%c0_5, %c0_6] : memref<2x128xf32, #tpu.memory_space<vmem>>, vector<2x128xf32>
    tpu.vector_store %arg4[%c0_5, %c0_6], %11 {strides = array<i32>} : memref<2x128xf32, #tpu.memory_space<vmem>>, vector<2x128xf32>,
    %c1_i32 = arith.constant 1 : i32
    %13 = arith.cmpi eq, %arg0, %c1_i32 : i32
    %14 = arith.extui %13 : i1 to i32
    %c0_i32_7 = arith.constant 0 : i32
    %15 = arith.cmpi ne, %14, %c0_i32_7 : i32
    scf.if %15 {
      %c0_8 = arith.constant 0 : index
      %c0_9 = arith.constant 0 : index
      %16 = vector.load %arg4[%c0_8, %c0_9] : memref<2x128xf32, #tpu.memory_space<vmem>>, vector<2x128xf32>
      %c0_10 = arith.constant 0 : index
      %c0_11 = arith.constant 0 : index
      %17 = vector.load %arg3[%c0_10, %c0_11] : memref<1x128xf32, #tpu.memory_space<vmem>>, vector<1x128xf32>
      %18 = vector.broadcast %17 : vector<1x128xf32> to vector<2x128xf32>
      %19 = arith.addf %16, %18 : vector<2x128xf32>
      %c0_12 = arith.constant 0 : index
      %c0_13 = arith.constant 0 : index
      %20 = vector.load %arg4[%c0_12, %c0_13] : memref<2x128xf32, #tpu.memory_space<vmem>>, vector<2x128xf32>
      tpu.vector_store %arg4[%c0_12, %c0_13], %19 {strides = array<i32>} : memref<2x128xf32, #tpu.memory_space<vmem>>, vector<2x128xf32>,
    } else {
    }
    return
  }
  func.func @transform_0(%arg0: i32) -> (i32, i32) {
    %c0_i32 = arith.constant 0 : i32
    %c0_i32_0 = arith.constant 0 : i32
    %c0_i32_1 = arith.constant 0 : i32
    return %c0_i32, %c0_i32_0 : i32, i32
  }
  func.func @transform_1(%arg0: i32) -> (i32, i32) {
    %c0_i32 = arith.constant 0 : i32
    %c0_i32_0 = arith.constant 0 : i32
    return %arg0, %c0_i32 : i32, i32
  }
  func.func @transform_2(%arg0: i32) -> (i32, i32) {
    %c0_i32 = arith.constant 0 : i32
    %c0_i32_0 = arith.constant 0 : i32
    %c0_i32_1 = arith.constant 0 : i32
    return %c0_i32, %c0_i32_0 : i32, i32
  }
  func.func @transform_3(%arg0: i32) -> (i32, i32) {
    %c0_i32 = arith.constant 0 : i32
    %c0_i32_0 = arith.constant 0 : i32
    %c0_i32_1 = arith.constant 0 : i32
    return %c0_i32, %c0_i32_0 : i32, i32
  }
}

</mosaic_0001>

<llo_original>
// kernel: tpu_custom_call.1
$region0: #{tpu_custom_call.1}
  #allocation0 [shape = 'u32[]', space=smem, size = 0x4, offset = 0x4, fixed_abs, tag = 'smem constant byte address 0x4 - core index']
  #allocation1 [shape = 'u32[72,128]{1,0:T(1,128)}', space=vmem, size = 0x9000, scoped, tag = 'internal scratch']
  %s0 = inlined_call_operand.hbm [shape: f32[2,22272], index: 0, kind: input, shape index: {}]
  %s1 = inlined_call_operand.hbm [shape: bf16[22272,128], index: 1, kind: input, shape index: {}]
  %s2 = inlined_call_operand.hbm [shape: f32[1,128], index: 2, kind: input, shape index: {}]
  %s3 = inlined_call_operand.hbm [shape: f32[2,128], index: 3, kind: output, shape index: {}]
  %s4 = sld [smem:[#allocation0]]
  $region65: #{tpu_custom_call.1} parent=0
    _
  %s6 = ssub.s32 1, %s4
  %s7 = scalar_select 0, %s6, %s4
  $region1: #{tpu_custom_call.1} parent=0
    #allocation2 [shape = 'u8[178176]{0}', space=vmem, size = 0x2b800, scoped, tag = 'input window, operand 0, single buffered']
    #allocation3 [shape = 's32[2]{0}', space=sflag, size = 0x8, scoped, tag = 'scoped memory for tpu_custom_call.1']
    #allocation4 [shape = 's32[2]{0}', space=sflag, size = 0x8, scoped, tag = 'scoped memory for tpu_custom_call.1']
    #allocation5 [shape = 'u8[5701632]{0}', space=vmem, size = 0x570000, scoped, tag = 'input window, operand 1']
    #allocation6 [shape = 's32[2]{0}', space=sflag, size = 0x8, scoped, tag = 'scoped memory for tpu_custom_call.1']
    #allocation7 [shape = 'u8[512]{0}', space=vmem, size = 0x400, scoped, tag = 'input window, operand 2, single buffered']
    #allocation8 [shape = 'u8[1024]{0}', space=vmem, size = 0x400, scoped, tag = 'output window, operand 0, single buffered']
    %8 = vsyncpa [#allocation3], 0
    %9 = vsyncpa [#allocation6], 0
    %s10 = scalar_lea.sflag [#allocation6], 1
    %11 = vsyncpa %s10, 0
    %12 = vsyncpa [#allocation4], 0
    loop: start=0, step=1, limit=4
    $region2: #{tpu_custom_call.1} parent=1 // loop_pre_header
      _
    $region3: #{tpu_custom_call.1} parent=1 // loop_header
      %s14 = sphi 0, %s18
      %p15 = scmp.ge.s32.totalorder %s14, 4
      %s22 = sphi 0, %s22
      %s24 = sphi 0, %s22
      %s25 = sphi 0, %s24
      %s39 = sphi 0, %s25
      %s45 = sphi 0, %s47
      %s48 = sphi 0, %s45
      %s49 = sphi 0, %s48
      %s65 = sphi 0, %s49
      %s69 = sphi 0, %s69
      %s71 = sphi 0, %s69
      %s72 = sphi 0, %s71
      %s86 = sphi 0, %s72
      %s90 = sphi 0, %s90
      %s92 = sphi 0, %s90
      %s93 = sphi 0, %s92
      %s107 = sphi 0, %s93
    $region4: #{tpu_custom_call.1} parent=1 // loop_header_branch
      %17 = sbr.rel (%p15) target = $region8
    $region5: #{tpu_custom_call.1} parent=1 // loop_body
      %s19 = ssub.s32 %s14, 1
      %s20 = ssub.s32 %s14, 2
      %s21 = sadd.s32 %s14, 1
      %s23 = sadd.s32 %s22, 1
      %p26 = scmp.eq.s32.totalorder %s14, 1
      %p27 = scmp.ne.s32.totalorder %s22, %s24
      %p28 = scmp.eq.s32.totalorder %s14, 0
      %p29 = por %p27, %p28
      %p30 = scmp.ne.s32.totalorder %s22, %s24
      %p31 = scmp.eq.s32.totalorder %s19, 1
      %p32 = por %p30, %p31
      %p33 = scmp.ne.s32.totalorder %s24, %s25
      %p34 = scmp.eq.s32.totalorder %s19, 0
      %p35 = por %p33, %p34
      %p36 = scmp.ne.s32.totalorder %s24, %s25
      %p37 = scmp.eq.s32.totalorder %s20, 1
      %p38 = por %p36, %p37
      %p40 = scmp.ne.s32.totalorder %s25, %s39
      %p41 = scmp.eq.s32.totalorder %s20, 0
      %p42 = por %p40, %p41
      %s43 = ssub.s32 %s14, %s21
      %p44 = scmp.eq.s32.totalorder %s43, 0
      %s46 = sadd.s32 %s45, 1
      %s47 = scalar_select %p44, %s45, %s46
      %p50 = pneg %p44
      %p51 = scmp.eq.s32.totalorder %s14, 1
      %p52 = por %p50, %p51
      %p53 = scmp.ne.s32.totalorder %s45, %s48
      %p54 = scmp.eq.s32.totalorder %s14, 0
      %p55 = por %p53, %p54
      %p56 = scmp.ne.s32.totalorder %s45, %s48
      %p57 = scmp.eq.s32.totalorder %s19, 1
      %p58 = por %p56, %p57
      %p59 = scmp.ne.s32.totalorder %s48, %s49
      %p60 = scmp.eq.s32.totalorder %s19, 0
      %p61 = por %p59, %p60
      %p62 = scmp.ne.s32.totalorder %s48, %s49
      %p63 = scmp.eq.s32.totalorder %s20, 1
      %p64 = por %p62, %p63
      %p66 = scmp.ne.s32.totalorder %s49, %s65
      %p67 = scmp.eq.s32.totalorder %s20, 0
      %p68 = por %p66, %p67
      %s70 = sadd.s32 %s69, 1
      %p73 = scmp.eq.s32.totalorder %s14, 1
      %p74 = scmp.ne.s32.totalorder %s69, %s71
      %p75 = scmp.eq.s32.totalorder %s14, 0
      %p76 = por %p74, %p75
      %p77 = scmp.ne.s32.totalorder %s69, %s71
      %p78 = scmp.eq.s32.totalorder %s19, 1
      %p79 = por %p77, %p78
      %p80 = scmp.ne.s32.totalorder %s71, %s72
      %p81 = scmp.eq.s32.totalorder %s19, 0
      %p82 = por %p80, %p81
      %p83 = scmp.ne.s32.totalorder %s71, %s72
      %p84 = scmp.eq.s32.totalorder %s20, 1
      %p85 = por %p83, %p84
      %p87 = scmp.ne.s32.totalorder %s72, %s86
      %p88 = scmp.eq.s32.totalorder %s20, 0
      %p89 = por %p87, %p88
      %s91 = sadd.s32 %s90, 1
      %p94 = scmp.eq.s32.totalorder %s14, 1
      %p95 = scmp.ne.s32.totalorder %s90, %s92
      %p96 = scmp.eq.s32.totalorder %s14, 0
      %p97 = por %p95, %p96
      %p98 = scmp.ne.s32.totalorder %s90, %s92
      %p99 = scmp.eq.s32.totalorder %s19, 1
      %p100 = por %p98, %p99
      %p101 = scmp.ne.s32.totalorder %s92, %s93
      %p102 = scmp.eq.s32.totalorder %s19, 0
      %p103 = por %p101, %p102
      %p104 = scmp.ne.s32.totalorder %s92, %s93
      %p105 = scmp.eq.s32.totalorder %s20, 1
      %p106 = por %p104, %p105
      %p108 = scmp.ne.s32.totalorder %s93, %s107
      %p109 = scmp.eq.s32.totalorder %s20, 0
      %p110 = por %p108, %p109
      %p111 = scmp.le.s32.totalorder 1, %s14
      %p112 = scmp.lt.s32.totalorder %s14, 3
      %p113 = pnand %p111, %p112
      %p114 = pneg %p113
      // Predicated region
      $region9: #{tpu_custom_call.1} parent=5 // pred_check
        _
      $region10: #{tpu_custom_call.1} parent=5 // pred_check_branch
        %116 = sbr.rel (%p113) target = $region12
      $region11: #{tpu_custom_call.1} parent=5 // pred_region
        %s117 = ssub.s32 %s14, 1
        // Predicated region
        $region13: #{tpu_custom_call.1} parent=11 // pred_check
          %p118 = pneg %p35
        $region14: #{tpu_custom_call.1} parent=11 // pred_check_branch
          %120 = sbr.rel (%p118) target = $region16
        $region15: #{tpu_custom_call.1} parent=11 // pred_region
          %122 = vsyncadd [#allocation3], 0
          %s124 = sshll.u32 %s0, 4
          %s125 = int_to_ptr.hbm [resolvable:$true] %s124
          %s126 = sshll.u32 [#allocation2], 4
          %s127 = int_to_ptr.vmem [resolvable:$true] %s126
          %129 = dma.hbm_to_vmem [thread:$0]  %s125, 5568, %s127, [#allocation3]
        $region16: #{tpu_custom_call.1} parent=11 // pred_fallthru
          _
        // Predicated region
        $region17: #{tpu_custom_call.1} parent=11 // pred_check
          %p130 = pneg %p82
        $region18: #{tpu_custom_call.1} parent=11 // pred_check_branch
          %132 = sbr.rel (%p130) target = $region20
        $region19: #{tpu_custom_call.1} parent=11 // pred_region
          %134 = vsyncadd [#allocation6], 0
          %s136 = sshll.u32 %s2, 4
          %s137 = int_to_ptr.hbm [resolvable:$true] %s136
          %s138 = sshll.u32 [#allocation7], 4
          %s139 = int_to_ptr.vmem [resolvable:$true] %s138
          %141 = dma.hbm_to_vmem [thread:$0]  %s137, 16, %s139, [#allocation6]
        $region20: #{tpu_custom_call.1} parent=11 // pred_fallthru
          _
      $region12: #{tpu_custom_call.1} parent=5 // pred_fallthru
        _
      %p142 = scmp.lt.s32.totalorder %s14, 2
      // Predicated region
      $region21: #{tpu_custom_call.1} parent=5 // pred_check
        %p143 = pneg %p142
      $region22: #{tpu_custom_call.1} parent=5 // pred_check_branch
        %145 = sbr.rel (%p143) target = $region24
      $region23: #{tpu_custom_call.1} parent=5 // pred_region
        // Predicated region
        $region25: #{tpu_custom_call.1} parent=23 // pred_check
          %p146 = pneg %p55
        $region26: #{tpu_custom_call.1} parent=23 // pred_check_branch
          %148 = sbr.rel (%p146) target = $region28
        $region27: #{tpu_custom_call.1} parent=23 // pred_region
          %s149 = sand.u32 %s14, 1
          %s150 = scalar_lea.sflag [#allocation6], %s149
          %s151 = sand.u32 %s45, 1
          %s152 = smul.addr %s151, 5568
          %s153 = scalar_lea.vmem [#allocation5], %s152
          %s154 = smul.u32 1392, %s14
          %156 = vsyncadd %s150, 0
          %s157 = smul.addr %s154, 4
          %s158 = scalar_lea.hbm %s1, %s157
          %s159 = sshll.u32 %s158, 4
          %s160 = int_to_ptr.hbm [resolvable:$true] %s159
          %s161 = sshll.u32 %s153, 4
          %s162 = int_to_ptr.vmem [resolvable:$true] %s161
          %167 = dma.hbm_to_vmem [thread:$0]  %s160, 89088, %s162, %s150, 64, 64, 4
        $region28: #{tpu_custom_call.1} parent=23 // pred_fallthru
          _
      $region24: #{tpu_custom_call.1} parent=5 // pred_fallthru
        _
      %p168 = scmp.le.s32.totalorder 1, %s14
      %p169 = scmp.lt.s32.totalorder %s14, 3
      %p170 = pnand %p168, %p169
      %p171 = pneg %p170
      // Predicated region
      $region29: #{tpu_custom_call.1} parent=5 // pred_check
        _
      $region30: #{tpu_custom_call.1} parent=5 // pred_check_branch
        %173 = sbr.rel (%p170) target = $region32
      $region31: #{tpu_custom_call.1} parent=5 // pred_region
        %s174 = ssub.s32 %s14, 1
        // Predicated region
        $region33: #{tpu_custom_call.1} parent=31 // pred_check
          %p175 = pneg %p35
        $region34: #{tpu_custom_call.1} parent=31 // pred_check_branch
          %177 = sbr.rel (%p175) target = $region36
        $region35: #{tpu_custom_call.1} parent=31 // pred_region
          %179 = dma.done [#allocation3], 5568
        $region36: #{tpu_custom_call.1} parent=31 // pred_fallthru
          _
        %s180 = sand.u32 %s19, 1
        %s181 = scalar_lea.sflag [#allocation6], %s180
        %s182 = sand.u32 %s48, 1
        %s183 = smul.addr %s182, 5568
        %s184 = scalar_lea.vmem [#allocation5], %s183
        // Predicated region
        $region37: #{tpu_custom_call.1} parent=31 // pred_check
          %p185 = pneg %p61
        $region38: #{tpu_custom_call.1} parent=31 // pred_check_branch
          %187 = sbr.rel (%p185) target = $region40
        $region39: #{tpu_custom_call.1} parent=31 // pred_region
          %189 = dma.done %s181, 89088
        $region40: #{tpu_custom_call.1} parent=31 // pred_fallthru
          _
        // Predicated region
        $region41: #{tpu_custom_call.1} parent=31 // pred_check
          %p190 = pneg %p82
        $region42: #{tpu_custom_call.1} parent=31 // pred_check_branch
          %192 = sbr.rel (%p190) target = $region44
        $region43: #{tpu_custom_call.1} parent=31 // pred_region
          %194 = dma.done [#allocation6], 16
        $region44: #{tpu_custom_call.1} parent=31 // pred_fallthru
          _
        %p195 = pneg %p35
        %p196 = pneg %p32
        %s197 = sand.u32 %s19, 1
        %s198 = scalar_lea.sflag [#allocation6], %s197
        %s199 = sand.u32 %s48, 1
        %s200 = smul.addr %s199, 5568
        %s201 = scalar_lea.vmem [#allocation5], %s200
        %p202 = pneg %p61
        %p203 = pneg %p58
        %p204 = pneg %p82
        %p205 = pneg %p79
        %p206 = pneg %p103
        %p207 = pneg %p100
        %s208 = smul.u32 1392, %s19
        %p209 = scmp.eq.s32.totalorder %s19, 0
        // Predicated region
        $region45: #{tpu_custom_call.1} parent=31 // pred_check
          %p210 = pneg %p209
        $region46: #{tpu_custom_call.1} parent=31 // pred_check_branch
          %212 = sbr.rel (%p210) target = $region48
        $region47: #{tpu_custom_call.1} parent=31 // pred_region
          %213 = vst [vmem:[#allocation8] sm:$0x3] 0.0
        $region48: #{tpu_custom_call.1} parent=31 // pred_fallthru
          _
        %s214 = smul.u32 %s19, 11136
        %s215 = sshra.s32 %s214, 7
        %s216 = sand.u32 %s214, 127
        %s217 = smul.addr %s215, 2
        %s218 = scalar_lea.vmem [#allocation2], %s217
        %v219 = vld [vmem:[%s218] sm:$0xff]
        %v220 = vld [vmem:[%s218 + $0x8] sm:$0xff]
        %v221 = vld [vmem:[%s218 + $0x10] sm:$0xff]
        %v222 = vld [vmem:[%s218 + $0x18] sm:$0xff]
        %v223 = vld [vmem:[%s218 + $0x20] sm:$0xff]
        %v224 = vld [vmem:[%s218 + $0x28] sm:$0xff]
        %v225 = vld [vmem:[%s218 + $0x30] sm:$0xff]
        %v226 = vld [vmem:[%s218 + $0x38] sm:$0xff]
        %v227 = vld [vmem:[%s218 + $0x40] sm:$0xff]
        %v228 = vld [vmem:[%s218 + $0x48] sm:$0xff]
        %v229 = vld [vmem:[%s218 + $0x50] sm:$0xff]
        %v230 = vld [vmem:[%s218 + $0x58] sm:$0xff]
        %v231 = vld [vmem:[%s218 + $0x60] sm:$0xff]
        %v232 = vld [vmem:[%s218 + $0x68] sm:$0xff]
        %v233 = vld [vmem:[%s218 + $0x70] sm:$0xff]
        %v234 = vld [vmem:[%s218 + $0x78] sm:$0xff]
        %v235 = vld [vmem:[%s218 + $0x80] sm:$0xff]
        %v236 = vld [vmem:[%s218 + $0x88] sm:$0xff]
        %v237 = vld [vmem:[%s218 + $0x90] sm:$0xff]
        %v238 = vld [vmem:[%s218 + $0x98] sm:$0xff]
        %v239 = vld [vmem:[%s218 + $0xa0] sm:$0xff]
        %v240 = vld [vmem:[%s218 + $0xa8] sm:$0x3f]
        %263 = vst [vmem:[#allocation1] ss:$4 sm:$0xff] %v219
        %s264 = scalar_lea.vmem [#allocation1], 32
        %265 = vst [vmem:[%s264] ss:$4 sm:$0xff] %v220
        %v266 = vld.sshfl [vmem:[#allocation1] sm:$0xff pattern:$0x73625140]
        %v267 = vld.sshfl [vmem:[#allocation1 + $0x8] sm:$0xff pattern:$0x73625140]
        %v268 = vld.sshfl [vmem:[#allocation1 + $0x10] sm:$0xff pattern:$0x73625140]
        %v269 = vld.sshfl [vmem:[#allocation1 + $0x18] sm:$0xff pattern:$0x73625140]
        %v270 = vld.sshfl [vmem:[#allocation1 + $0x20] sm:$0xff pattern:$0x73625140]
        %v271 = vld.sshfl [vmem:[#allocation1 + $0x28] sm:$0xff pattern:$0x73625140]
        %v272 = vld.sshfl [vmem:[#allocation1 + $0x30] sm:$0xff pattern:$0x73625140]
        %v273 = vld.sshfl [vmem:[#allocation1 + $0x38] sm:$0xff pattern:$0x73625140]
        %274 = vst [vmem:[#allocation1] ss:$4 sm:$0xff] %v221
        %275 = vst [vmem:[%s264] ss:$4 sm:$0xff] %v222
        %v276 = vld.sshfl [vmem:[#allocation1] sm:$0xff pattern:$0x73625140]
        %v277 = vld.sshfl [vmem:[#allocation1 + $0x8] sm:$0xff pattern:$0x73625140]
        %v278 = vld.sshfl [vmem:[#allocation1 + $0x10] sm:$0xff pattern:$0x73625140]
        %v279 = vld.sshfl [vmem:[#allocation1 + $0x18] sm:$0xff pattern:$0x73625140]
        %v280 = vld.sshfl [vmem:[#allocation1 + $0x20] sm:$0xff pattern:$0x73625140]
        %v281 = vld.sshfl [vmem:[#allocation1 + $0x28] sm:$0xff pattern:$0x73625140]
        %v282 = vld.sshfl [vmem:[#allocation1 + $0x30] sm:$0xff pattern:$0x73625140]
        %v283 = vld.sshfl [vmem:[#allocation1 + $0x38] sm:$0xff pattern:$0x73625140]
        %284 = vst [vmem:[#allocation1] ss:$4 sm:$0xff] %v223
        %285 = vst [vmem:[%s264] ss:$4 sm:$0xff] %v224
        %v286 = vld.sshfl [vmem:[#allocation1] sm:$0xff pattern:$0x73625140]
        %v287 = vld.sshfl [vmem:[#allocation1 + $0x8] sm:$0xff pattern:$0x73625140]
        %v288 = vld.sshfl [vmem:[#allocation1 + $0x10] sm:$0xff pattern:$0x73625140]
        %v289 = vld.sshfl [vmem:[#allocation1 + $0x18] sm:$0xff pattern:$0x73625140]
        %v290 = vld.sshfl [vmem:[#allocation1 + $0x20] sm:$0xff pattern:$0x73625140]
        %v291 = vld.sshfl [vmem:[#allocation1 + $0x28] sm:$0xff pattern:$0x73625140]
        %v292 = vld.sshfl [vmem:[#allocation1 + $0x30] sm:$0xff pattern:$0x73625140]
        %v293 = vld.sshfl [vmem:[#allocation1 + $0x38] sm:$0xff pattern:$0x73625140]
        %294 = vst [vmem:[#allocation1] ss:$4 sm:$0xff] %v225
        %295 = vst [vmem:[%s264] ss:$4 sm:$0xff] %v226
        %v296 = vld.sshfl [vmem:[#allocation1] sm:$0xff pattern:$0x73625140]
        %v297 = vld.sshfl [vmem:[#allocation1 + $0x8] sm:$0xff pattern:$0x73625140]
        %v298 = vld.sshfl [vmem:[#allocation1 + $0x10] sm:$0xff pattern:$0x73625140]
        %v299 = vld.sshfl [vmem:[#allocation1 + $0x18] sm:$0xff pattern:$0x73625140]
        %v300 = vld.sshfl [vmem:[#allocation1 + $0x20] sm:$0xff pattern:$0x73625140]
        %v301 = vld.sshfl [vmem:[#allocation1 + $0x28] sm:$0xff pattern:$0x73625140]
        %v302 = vld.sshfl [vmem:[#allocation1 + $0x30] sm:$0xff pattern:$0x73625140]
        %v303 = vld.sshfl [vmem:[#allocation1 + $0x38] sm:$0xff pattern:$0x73625140]
        %304 = vst [vmem:[#allocation1] ss:$4 sm:$0xff] %v227
        %305 = vst [vmem:[%s264] ss:$4 sm:$0xff] %v228
        %v306 = vld.sshfl [vmem:[#allocation1] sm:$0xff pattern:$0x73625140]
        %v307 = vld.sshfl [vmem:[#allocation1 + $0x8] sm:$0xff pattern:$0x73625140]
        %v308 = vld.sshfl [vmem:[#allocation1 + $0x10] sm:$0xff pattern:$0x73625140]
        %v309 = vld.sshfl [vmem:[#allocation1 + $0x18] sm:$0xff pattern:$0x73625140]
        %v310 = vld.sshfl [vmem:[#allocation1 + $0x20] sm:$0xff pattern:$0x73625140]
        %v311 = vld.sshfl [vmem:[#allocation1 + $0x28] sm:$0xff pattern:$0x73625140]
        %v312 = vld.sshfl [vmem:[#allocation1 + $0x30] sm:$0xff pattern:$0x73625140]
        %v313 = vld.sshfl [vmem:[#allocation1 + $0x38] sm:$0xff pattern:$0x73625140]
        %314 = vst [vmem:[#allocation1] ss:$4 sm:$0xff] %v229
        %315 = vst [vmem:[%s264] ss:$4 sm:$0xff] %v230
        %v316 = vld.sshfl [vmem:[#allocation1] sm:$0xff pattern:$0x73625140]
        %v317 = vld.sshfl [vmem:[#allocation1 + $0x8] sm:$0xff pattern:$0x73625140]
        %v318 = vld.sshfl [vmem:[#allocation1 + $0x10] sm:$0xff pattern:$0x73625140]
        %v319 = vld.sshfl [vmem:[#allocation1 + $0x18] sm:$0xff pattern:$0x73625140]
        %v320 = vld.sshfl [vmem:[#allocation1 + $0x20] sm:$0xff pattern:$0x73625140]
        %v321 = vld.sshfl [vmem:[#allocation1 + $0x28] sm:$0xff pattern:$0x73625140]
        %v322 = vld.sshfl [vmem:[#allocation1 + $0x30] sm:$0xff pattern:$0x73625140]
        %v323 = vld.sshfl [vmem:[#allocation1 + $0x38] sm:$0xff pattern:$0x73625140]
        %324 = vst [vmem:[#allocation1] ss:$4 sm:$0xff] %v231
        %325 = vst [vmem:[%s264] ss:$4 sm:$0xff] %v232
        %v326 = vld.sshfl [vmem:[#allocation1] sm:$0xff pattern:$0x73625140]
        %v327 = vld.sshfl [vmem:[#allocation1 + $0x8] sm:$0xff pattern:$0x73625140]
        %v328 = vld.sshfl [vmem:[#allocation1 + $0x10] sm:$0xff pattern:$0x73625140]
        %v329 = vld.sshfl [vmem:[#allocation1 + $0x18] sm:$0xff pattern:$0x73625140]
        %v330 = vld.sshfl [vmem:[#allocation1 + $0x20] sm:$0xff pattern:$0x73625140]
        %v331 = vld.sshfl [vmem:[#allocation1 + $0x28] sm:$0xff pattern:$0x73625140]
        %v332 = vld.sshfl [vmem:[#allocation1 + $0x30] sm:$0xff pattern:$0x73625140]
        %v333 = vld.sshfl [vmem:[#allocation1 + $0x38] sm:$0xff pattern:$0x73625140]
        %334 = vst [vmem:[#allocation1] ss:$4 sm:$0xff] %v233
        %335 = vst [vmem:[%s264] ss:$4 sm:$0xff] %v234
        %v336 = vld.sshfl [vmem:[#allocation1] sm:$0xff pattern:$0x73625140]
        %v337 = vld.sshfl [vmem:[#allocation1 + $0x8] sm:$0xff pattern:$0x73625140]
        %v338 = vld.sshfl [vmem:[#allocation1 + $0x10] sm:$0xff pattern:$0x73625140]
        %v339 = vld.sshfl [vmem:[#allocation1 + $0x18] sm:$0xff pattern:$0x73625140]
        %v340 = vld.sshfl [vmem:[#allocation1 + $0x20] sm:$0xff pattern:$0x73625140]
        %v341 = vld.sshfl [vmem:[#allocation1 + $0x28] sm:$0xff pattern:$0x73625140]
        %v342 = vld.sshfl [vmem:[#allocation1 + $0x30] sm:$0xff pattern:$0x73625140]
        %v343 = vld.sshfl [vmem:[#allocation1 + $0x38] sm:$0xff pattern:$0x73625140]
        %344 = vst [vmem:[#allocation1] ss:$4 sm:$0xff] %v235
        %345 = vst [vmem:[%s264] ss:$4 sm:$0xff] %v236
        %v346 = vld.sshfl [vmem:[#allocation1] sm:$0xff pattern:$0x73625140]
        %v347 = vld.sshfl [vmem:[#allocation1 + $0x8] sm:$0xff pattern:$0x73625140]
        %v348 = vld.sshfl [vmem:[#allocation1 + $0x10] sm:$0xff pattern:$0x73625140]
        %v349 = vld.sshfl [vmem:[#allocation1 + $0x18] sm:$0xff pattern:$0x73625140]
        %v350 = vld.sshfl [vmem:[#allocation1 + $0x20] sm:$0xff pattern:$0x73625140]
        %v351 = vld.sshfl [vmem:[#allocation1 + $0x28] sm:$0xff pattern:$0x73625140]
        %v352 = vld.sshfl [vmem:[#allocation1 + $0x30] sm:$0xff pattern:$0x73625140]
        %v353 = vld.sshfl [vmem:[#allocation1 + $0x38] sm:$0xff pattern:$0x73625140]
        %354 = vst [vmem:[#allocation1] ss:$4 sm:$0xff] %v237
        %355 = vst [vmem:[%s264] ss:$4 sm:$0xff] %v238
        %v356 = vld.sshfl [vmem:[#allocation1] sm:$0xff pattern:$0x73625140]
        %v357 = vld.sshfl [vmem:[#allocation1 + $0x8] sm:$0xff pattern:$0x73625140]
        %v358 = vld.sshfl [vmem:[#allocation1 + $0x10] sm:$0xff pattern:$0x73625140]
        %v359 = vld.sshfl [vmem:[#allocation1 + $0x18] sm:$0xff pattern:$0x73625140]
        %v360 = vld.sshfl [vmem:[#allocation1 + $0x20] sm:$0xff pattern:$0x73625140]
        %v361 = vld.sshfl [vmem:[#allocation1 + $0x28] sm:$0xff pattern:$0x73625140]
        %v362 = vld.sshfl [vmem:[#allocation1 + $0x30] sm:$0xff pattern:$0x73625140]
        %v363 = vld.sshfl [vmem:[#allocation1 + $0x38] sm:$0xff pattern:$0x73625140]
        %364 = vst [vmem:[#allocation1] ss:$4 sm:$0xff] %v239
        %365 = vst [vmem:[%s264] ss:$4 sm:$0xff] %v240
        %v366 = vld.sshfl [vmem:[#allocation1] sm:$0xff pattern:$0x73625140]
        %v367 = vld.sshfl [vmem:[#allocation1 + $0x8] sm:$0xff pattern:$0x73625140]
        %v368 = vld.sshfl [vmem:[#allocation1 + $0x10] sm:$0xff pattern:$0x73625140]
        %v369 = vld.sshfl [vmem:[#allocation1 + $0x18] sm:$0xff pattern:$0x73625140]
        %v370 = vld.sshfl [vmem:[#allocation1 + $0x20] sm:$0xff pattern:$0x73625140]
        %v371 = vld.sshfl [vmem:[#allocation1 + $0x28] sm:$0xff pattern:$0x73625140]
        %v372 = vld.sshfl [vmem:[#allocation1 + $0x30] sm:$0xff pattern:$0x73625140]
        %v460 = vpack.c.bf16 %v266, %v266
        %v461 = vpack.c.bf16 %v267, %v267
        %v462 = vpack.c.bf16 %v268, %v268
        %v463 = vpack.c.bf16 %v269, %v269
        %v464 = vpack.c.bf16 %v270, %v270
        %v465 = vpack.c.bf16 %v271, %v271
        %v466 = vpack.c.bf16 %v272, %v272
        %v467 = vpack.c.bf16 %v273, %v273
        %v468 = vpack.c.bf16 %v276, %v276
        %v469 = vpack.c.bf16 %v277, %v277
        %v470 = vpack.c.bf16 %v278, %v278
        %v471 = vpack.c.bf16 %v279, %v279
        %v472 = vpack.c.bf16 %v280, %v280
        %v473 = vpack.c.bf16 %v281, %v281
        %v474 = vpack.c.bf16 %v282, %v282
        %v475 = vpack.c.bf16 %v283, %v283
        %v476 = vpack.c.bf16 %v286, %v286
        %v477 = vpack.c.bf16 %v287, %v287
        %v478 = vpack.c.bf16 %v288, %v288
        %v479 = vpack.c.bf16 %v289, %v289
        %v480 = vpack.c.bf16 %v290, %v290
        %v481 = vpack.c.bf16 %v291, %v291
        %v482 = vpack.c.bf16 %v292, %v292
        %v483 = vpack.c.bf16 %v293, %v293
        %v484 = vpack.c.bf16 %v296, %v296
        %v485 = vpack.c.bf16 %v297, %v297
        %v486 = vpack.c.bf16 %v298, %v298
        %v487 = vpack.c.bf16 %v299, %v299
        %v488 = vpack.c.bf16 %v300, %v300
        %v489 = vpack.c.bf16 %v301, %v301
        %v490 = vpack.c.bf16 %v302, %v302
        %v491 = vpack.c.bf16 %v303, %v303
        %v492 = vpack.c.bf16 %v306, %v306
        %v493 = vpack.c.bf16 %v307, %v307
        %v494 = vpack.c.bf16 %v308, %v308
        %v495 = vpack.c.bf16 %v309, %v309
        %v496 = vpack.c.bf16 %v310, %v310
        %v497 = vpack.c.bf16 %v311, %v311
        %v498 = vpack.c.bf16 %v312, %v312
        %v499 = vpack.c.bf16 %v313, %v313
        %v500 = vpack.c.bf16 %v316, %v316
        %v501 = vpack.c.bf16 %v317, %v317
        %v502 = vpack.c.bf16 %v318, %v318
        %v503 = vpack.c.bf16 %v319, %v319
        %v504 = vpack.c.bf16 %v320, %v320
        %v505 = vpack.c.bf16 %v321, %v321
        %v506 = vpack.c.bf16 %v322, %v322
        %v507 = vpack.c.bf16 %v323, %v323
        %v508 = vpack.c.bf16 %v326, %v326
        %v509 = vpack.c.bf16 %v327, %v327
        %v510 = vpack.c.bf16 %v328, %v328
        %v511 = vpack.c.bf16 %v329, %v329
        %v512 = vpack.c.bf16 %v330, %v330
        %v513 = vpack.c.bf16 %v331, %v331
        %v514 = vpack.c.bf16 %v332, %v332
        %v515 = vpack.c.bf16 %v333, %v333
        %v516 = vpack.c.bf16 %v336, %v336
        %v517 = vpack.c.bf16 %v337, %v337
        %v518 = vpack.c.bf16 %v338, %v338
        %v519 = vpack.c.bf16 %v339, %v339
        %v520 = vpack.c.bf16 %v340, %v340
        %v521 = vpack.c.bf16 %v341, %v341
        %v522 = vpack.c.bf16 %v342, %v342
        %v523 = vpack.c.bf16 %v343, %v343
        %v524 = vpack.c.bf16 %v346, %v346
        %v525 = vpack.c.bf16 %v347, %v347
        %v526 = vpack.c.bf16 %v348, %v348
        %v527 = vpack.c.bf16 %v349, %v349
        %v528 = vpack.c.bf16 %v350, %v350
        %v529 = vpack.c.bf16 %v351, %v351
        %v530 = vpack.c.bf16 %v352, %v352
        %v531 = vpack.c.bf16 %v353, %v353
        %v532 = vpack.c.bf16 %v356, %v356
        %v533 = vpack.c.bf16 %v357, %v357
        %v534 = vpack.c.bf16 %v358, %v358
        %v535 = vpack.c.bf16 %v359, %v359
        %v536 = vpack.c.bf16 %v360, %v360
        %v537 = vpack.c.bf16 %v361, %v361
        %v538 = vpack.c.bf16 %v362, %v362
        %v539 = vpack.c.bf16 %v363, %v363
        %v540 = vpack.c.bf16 %v366, %v366
        %v541 = vpack.c.bf16 %v367, %v367
        %v542 = vpack.c.bf16 %v368, %v368
        %v543 = vpack.c.bf16 %v369, %v369
        %v544 = vpack.c.bf16 %v370, %v370
        %v545 = vpack.c.bf16 %v371, %v371
        %v546 = vpack.c.bf16 %v372, %v372
        %v547 = vld [vmem:[#allocation8] sm:$0x3]
        %v548 = vld [vmem:[%s184] sm:$0xf]
        %v549 = vld [vmem:[%s184 + $0x4] sm:$0xf]
        %v550 = vld [vmem:[%s184 + $0x8] sm:$0xf]
        %v551 = vld [vmem:[%s184 + $0xc] sm:$0xf]
        %v552 = vld [vmem:[%s184 + $0x10] sm:$0xf]
        %v553 = vld [vmem:[%s184 + $0x14] sm:$0xf]
        %v554 = vld [vmem:[%s184 + $0x18] sm:$0xf]
        %v555 = vld [vmem:[%s184 + $0x1c] sm:$0xf]
        %v556 = vld [vmem:[%s184 + $0x20] sm:$0xf]
        %v557 = vld [vmem:[%s184 + $0x24] sm:$0xf]
        %v558 = vld [vmem:[%s184 + $0x28] sm:$0xf]
        %v559 = vld [vmem:[%s184 + $0x2c] sm:$0xf]
        %v560 = vld [vmem:[%s184 + $0x30] sm:$0xf]
        %v561 = vld [vmem:[%s184 + $0x34] sm:$0xf]
        %v562 = vld [vmem:[%s184 + $0x38] sm:$0xf]
        %v563 = vld [vmem:[%s184 + $0x3c] sm:$0xf]
        %v564 = vld [vmem:[%s184 + $0x40] sm:$0xf]
        %v565 = vld [vmem:[%s184 + $0x44] sm:$0xf]
        %v566 = vld [vmem:[%s184 + $0x48] sm:$0xf]
        %v567 = vld [vmem:[%s184 + $0x4c] sm:$0xf]
        %v568 = vld [vmem:[%s184 + $0x50] sm:$0xf]
        %v569 = vld [vmem:[%s184 + $0x54] sm:$0xf]
        %v570 = vld [vmem:[%s184 + $0x58] sm:$0xf]
        %v571 = vld [vmem:[%s184 + $0x5c] sm:$0xf]
        %v572 = vld [vmem:[%s184 + $0x60] sm:$0xf]
        %v573 = vld [vmem:[%s184 + $0x64] sm:$0xf]
        %v574 = vld [vmem:[%s184 + $0x68] sm:$0xf]
        %v575 = vld [vmem:[%s184 + $0x6c] sm:$0xf]
        %v576 = vld [vmem:[%s184 + $0x70] sm:$0xf]
        %v577 = vld [vmem:[%s184 + $0x74] sm:$0xf]
        %v578 = vld [vmem:[%s184 + $0x78] sm:$0xf]
        %v579 = vld [vmem:[%s184 + $0x7c] sm:$0xf]
        %v580 = vld [vmem:[%s184 + $0x80] sm:$0xf]
        %v581 = vld [vmem:[%s184 + $0x84] sm:$0xf]
        %v582 = vld [vmem:[%s184 + $0x88] sm:$0xf]
        %v583 = vld [vmem:[%s184 + $0x8c] sm:$0xf]
        %v584 = vld [vmem:[%s184 + $0x90] sm:$0xf]
        %v585 = vld [vmem:[%s184 + $0x94] sm:$0xf]
        %v586 = vld [vmem:[%s184 + $0x98] sm:$0xf]
        %v587 = vld [vmem:[%s184 + $0x9c] sm:$0xf]
        %v588 = vld [vmem:[%s184 + $0xa0] sm:$0xf]
        %v589 = vld [vmem:[%s184 + $0xa4] sm:$0xf]
        %v590 = vld [vmem:[%s184 + $0xa8] sm:$0xf]
        %v591 = vld [vmem:[%s184 + $0xac] sm:$0xf]
        %v592 = vld [vmem:[%s184 + $0xb0] sm:$0xf]
        %v593 = vld [vmem:[%s184 + $0xb4] sm:$0xf]
        %v594 = vld [vmem:[%s184 + $0xb8] sm:$0xf]
        %v595 = vld [vmem:[%s184 + $0xbc] sm:$0xf]
        %v596 = vld [vmem:[%s184 + $0xc0] sm:$0xf]
        %v597 = vld [vmem:[%s184 + $0xc4] sm:$0xf]
        %v598 = vld [vmem:[%s184 + $0xc8] sm:$0xf]
        %v599 = vld [vmem:[%s184 + $0xcc] sm:$0xf]
        %v600 = vld [vmem:[%s184 + $0xd0] sm:$0xf]
        %v601 = vld [vmem:[%s184 + $0xd4] sm:$0xf]
        %v602 = vld [vmem:[%s184 + $0xd8] sm:$0xf]
        %v603 = vld [vmem:[%s184 + $0xdc] sm:$0xf]
        %v604 = vld [vmem:[%s184 + $0xe0] sm:$0xf]
        %v605 = vld [vmem:[%s184 + $0xe4] sm:$0xf]
        %v606 = vld [vmem:[%s184 + $0xe8] sm:$0xf]
        %v607 = vld [vmem:[%s184 + $0xec] sm:$0xf]
        %v608 = vld [vmem:[%s184 + $0xf0] sm:$0xf]
        %v609 = vld [vmem:[%s184 + $0xf4] sm:$0xf]
        %v610 = vld [vmem:[%s184 + $0xf8] sm:$0xf]
        %v611 = vld [vmem:[%s184 + $0xfc] sm:$0xf]
        %v612 = vld [vmem:[%s184 + $0x100] sm:$0xf]
        %v613 = vld [vmem:[%s184 + $0x104] sm:$0xf]
        %v614 = vld [vmem:[%s184 + $0x108] sm:$0xf]
        %v615 = vld [vmem:[%s184 + $0x10c] sm:$0xf]
        %v616 = vld [vmem:[%s184 + $0x110] sm:$0xf]
        %v617 = vld [vmem:[%s184 + $0x114] sm:$0xf]
        %v618 = vld [vmem:[%s184 + $0x118] sm:$0xf]
        %v619 = vld [vmem:[%s184 + $0x11c] sm:$0xf]
        %v620 = vld [vmem:[%s184 + $0x120] sm:$0xf]
        %v621 = vld [vmem:[%s184 + $0x124] sm:$0xf]
        %v622 = vld [vmem:[%s184 + $0x128] sm:$0xf]
        %v623 = vld [vmem:[%s184 + $0x12c] sm:$0xf]
        %v624 = vld [vmem:[%s184 + $0x130] sm:$0xf]
        %v625 = vld [vmem:[%s184 + $0x134] sm:$0xf]
        %v626 = vld [vmem:[%s184 + $0x138] sm:$0xf]
        %v627 = vld [vmem:[%s184 + $0x13c] sm:$0xf]
        %v628 = vld [vmem:[%s184 + $0x140] sm:$0xf]
        %v629 = vld [vmem:[%s184 + $0x144] sm:$0xf]
        %v630 = vld [vmem:[%s184 + $0x148] sm:$0xf]
        %v631 = vld [vmem:[%s184 + $0x14c] sm:$0xf]
        %v632 = vld [vmem:[%s184 + $0x150] sm:$0xf]
        %v633 = vld [vmem:[%s184 + $0x154] sm:$0xf]
        %v634 = vld [vmem:[%s184 + $0x158] sm:$0xf]
        %v635 = vld [vmem:[%s184 + $0x15c] sm:$0xf]
        %v636 = vld [vmem:[%s184 + $0x160] sm:$0xf]
        %v637 = vld [vmem:[%s184 + $0x164] sm:$0xf]
        %v638 = vld [vmem:[%s184 + $0x168] sm:$0xf]
        %v639 = vld [vmem:[%s184 + $0x16c] sm:$0xf]
        %v640 = vld [vmem:[%s184 + $0x170] sm:$0xf]
        %v641 = vld [vmem:[%s184 + $0x174] sm:$0xf]
        %v642 = vld [vmem:[%s184 + $0x178] sm:$0xf]
        %v643 = vld [vmem:[%s184 + $0x17c] sm:$0xf]
        %v644 = vld [vmem:[%s184 + $0x180] sm:$0xf]
        %v645 = vld [vmem:[%s184 + $0x184] sm:$0xf]
        %v646 = vld [vmem:[%s184 + $0x188] sm:$0xf]
        %v647 = vld [vmem:[%s184 + $0x18c] sm:$0xf]
        %v648 = vld [vmem:[%s184 + $0x190] sm:$0xf]
        %v649 = vld [vmem:[%s184 + $0x194] sm:$0xf]
        %v650 = vld [vmem:[%s184 + $0x198] sm:$0xf]
        %v651 = vld [vmem:[%s184 + $0x19c] sm:$0xf]
        %v652 = vld [vmem:[%s184 + $0x1a0] sm:$0xf]
        %v653 = vld [vmem:[%s184 + $0x1a4] sm:$0xf]
        %v654 = vld [vmem:[%s184 + $0x1a8] sm:$0xf]
        %v655 = vld [vmem:[%s184 + $0x1ac] sm:$0xf]
        %v656 = vld [vmem:[%s184 + $0x1b0] sm:$0xf]
        %v657 = vld [vmem:[%s184 + $0x1b4] sm:$0xf]
        %v658 = vld [vmem:[%s184 + $0x1b8] sm:$0xf]
        %v659 = vld [vmem:[%s184 + $0x1bc] sm:$0xf]
        %v660 = vld [vmem:[%s184 + $0x1c0] sm:$0xf]
        %v661 = vld [vmem:[%s184 + $0x1c4] sm:$0xf]
        %v662 = vld [vmem:[%s184 + $0x1c8] sm:$0xf]
        %v663 = vld [vmem:[%s184 + $0x1cc] sm:$0xf]
        %v664 = vld [vmem:[%s184 + $0x1d0] sm:$0xf]
        %v665 = vld [vmem:[%s184 + $0x1d4] sm:$0xf]
        %v666 = vld [vmem:[%s184 + $0x1d8] sm:$0xf]
        %v667 = vld [vmem:[%s184 + $0x1dc] sm:$0xf]
        %v668 = vld [vmem:[%s184 + $0x1e0] sm:$0xf]
        %v669 = vld [vmem:[%s184 + $0x1e4] sm:$0xf]
        %v670 = vld [vmem:[%s184 + $0x1e8] sm:$0xf]
        %v671 = vld [vmem:[%s184 + $0x1ec] sm:$0xf]
        %v672 = vld [vmem:[%s184 + $0x1f0] sm:$0xf]
        %v673 = vld [vmem:[%s184 + $0x1f4] sm:$0xf]
        %v674 = vld [vmem:[%s184 + $0x1f8] sm:$0xf]
        %v675 = vld [vmem:[%s184 + $0x1fc] sm:$0xf]
        %v676 = vld [vmem:[%s184 + $0x200] sm:$0xf]
        %v677 = vld [vmem:[%s184 + $0x204] sm:$0xf]
        %v678 = vld [vmem:[%s184 + $0x208] sm:$0xf]
        %v679 = vld [vmem:[%s184 + $0x20c] sm:$0xf]
        %v680 = vld [vmem:[%s184 + $0x210] sm:$0xf]
        %v681 = vld [vmem:[%s184 + $0x214] sm:$0xf]
        %v682 = vld [vmem:[%s184 + $0x218] sm:$0xf]
        %v683 = vld [vmem:[%s184 + $0x21c] sm:$0xf]
        %v684 = vld [vmem:[%s184 + $0x220] sm:$0xf]
        %v685 = vld [vmem:[%s184 + $0x224] sm:$0xf]
        %v686 = vld [vmem:[%s184 + $0x228] sm:$0xf]
        %v687 = vld [vmem:[%s184 + $0x22c] sm:$0xf]
        %v688 = vld [vmem:[%s184 + $0x230] sm:$0xf]
        %v689 = vld [vmem:[%s184 + $0x234] sm:$0xf]
        %v690 = vld [vmem:[%s184 + $0x238] sm:$0xf]
        %v691 = vld [vmem:[%s184 + $0x23c] sm:$0xf]
        %v692 = vld [vmem:[%s184 + $0x240] sm:$0xf]
        %v693 = vld [vmem:[%s184 + $0x244] sm:$0xf]
        %v694 = vld [vmem:[%s184 + $0x248] sm:$0xf]
        %v695 = vld [vmem:[%s184 + $0x24c] sm:$0xf]
        %v696 = vld [vmem:[%s184 + $0x250] sm:$0xf]
        %v697 = vld [vmem:[%s184 + $0x254] sm:$0xf]
        %v698 = vld [vmem:[%s184 + $0x258] sm:$0xf]
        %v699 = vld [vmem:[%s184 + $0x25c] sm:$0xf]
        %v700 = vld [vmem:[%s184 + $0x260] sm:$0xf]
        %v701 = vld [vmem:[%s184 + $0x264] sm:$0xf]
        %v702 = vld [vmem:[%s184 + $0x268] sm:$0xf]
        %v703 = vld [vmem:[%s184 + $0x26c] sm:$0xf]
        %v704 = vld [vmem:[%s184 + $0x270] sm:$0xf]
        %v705 = vld [vmem:[%s184 + $0x274] sm:$0xf]
        %v706 = vld [vmem:[%s184 + $0x278] sm:$0xf]
        %v707 = vld [vmem:[%s184 + $0x27c] sm:$0xf]
        %v708 = vld [vmem:[%s184 + $0x280] sm:$0xf]
        %v709 = vld [vmem:[%s184 + $0x284] sm:$0xf]
        %v710 = vld [vmem:[%s184 + $0x288] sm:$0xf]
        %v711 = vld [vmem:[%s184 + $0x28c] sm:$0xf]
        %v712 = vld [vmem:[%s184 + $0x290] sm:$0xf]
        %v713 = vld [vmem:[%s184 + $0x294] sm:$0xf]
        %v714 = vld [vmem:[%s184 + $0x298] sm:$0xf]
        %v715 = vld [vmem:[%s184 + $0x29c] sm:$0xf]
        %v716 = vld [vmem:[%s184 + $0x2a0] sm:$0xf]
        %v717 = vld [vmem:[%s184 + $0x2a4] sm:$0xf]
        %v718 = vld [vmem:[%s184 + $0x2a8] sm:$0xf]
        %v719 = vld [vmem:[%s184 + $0x2ac] sm:$0xf]
        %v720 = vld [vmem:[%s184 + $0x2b0] sm:$0xf]
        %v721 = vld [vmem:[%s184 + $0x2b4] sm:$0xf]
        %v722 = vld [vmem:[%s184 + $0x2b8] sm:$0xf]
        %v723 = vld [vmem:[%s184 + $0x2bc] sm:$0xf]
        %v724 = vld [vmem:[%s184 + $0x2c0] sm:$0xf]
        %v725 = vld [vmem:[%s184 + $0x2c4] sm:$0xf]
        %v726 = vld [vmem:[%s184 + $0x2c8] sm:$0xf]
        %v727 = vld [vmem:[%s184 + $0x2cc] sm:$0xf]
        %v728 = vld [vmem:[%s184 + $0x2d0] sm:$0xf]
        %v729 = vld [vmem:[%s184 + $0x2d4] sm:$0xf]
        %v730 = vld [vmem:[%s184 + $0x2d8] sm:$0xf]
        %v731 = vld [vmem:[%s184 + $0x2dc] sm:$0xf]
        %v732 = vld [vmem:[%s184 + $0x2e0] sm:$0xf]
        %v733 = vld [vmem:[%s184 + $0x2e4] sm:$0xf]
        %v734 = vld [vmem:[%s184 + $0x2e8] sm:$0xf]
        %v735 = vld [vmem:[%s184 + $0x2ec] sm:$0xf]
        %v736 = vld [vmem:[%s184 + $0x2f0] sm:$0xf]
        %v737 = vld [vmem:[%s184 + $0x2f4] sm:$0xf]
        %v738 = vld [vmem:[%s184 + $0x2f8] sm:$0xf]
        %v739 = vld [vmem:[%s184 + $0x2fc] sm:$0xf]
        %v740 = vld [vmem:[%s184 + $0x300] sm:$0xf]
        %v741 = vld [vmem:[%s184 + $0x304] sm:$0xf]
        %v742 = vld [vmem:[%s184 + $0x308] sm:$0xf]
        %v743 = vld [vmem:[%s184 + $0x30c] sm:$0xf]
        %v744 = vld [vmem:[%s184 + $0x310] sm:$0xf]
        %v745 = vld [vmem:[%s184 + $0x314] sm:$0xf]
        %v746 = vld [vmem:[%s184 + $0x318] sm:$0xf]
        %v747 = vld [vmem:[%s184 + $0x31c] sm:$0xf]
        %v748 = vld [vmem:[%s184 + $0x320] sm:$0xf]
        %v749 = vld [vmem:[%s184 + $0x324] sm:$0xf]
        %v750 = vld [vmem:[%s184 + $0x328] sm:$0xf]
        %v751 = vld [vmem:[%s184 + $0x32c] sm:$0xf]
        %v752 = vld [vmem:[%s184 + $0x330] sm:$0xf]
        %v753 = vld [vmem:[%s184 + $0x334] sm:$0xf]
        %v754 = vld [vmem:[%s184 + $0x338] sm:$0xf]
        %v755 = vld [vmem:[%s184 + $0x33c] sm:$0xf]
        %v756 = vld [vmem:[%s184 + $0x340] sm:$0xf]
        %v757 = vld [vmem:[%s184 + $0x344] sm:$0xf]
        %v758 = vld [vmem:[%s184 + $0x348] sm:$0xf]
        %v759 = vld [vmem:[%s184 + $0x34c] sm:$0xf]
        %v760 = vld [vmem:[%s184 + $0x350] sm:$0xf]
        %v761 = vld [vmem:[%s184 + $0x354] sm:$0xf]
        %v762 = vld [vmem:[%s184 + $0x358] sm:$0xf]
        %v763 = vld [vmem:[%s184 + $0x35c] sm:$0xf]
        %v764 = vld [vmem:[%s184 + $0x360] sm:$0xf]
        %v765 = vld [vmem:[%s184 + $0x364] sm:$0xf]
        %v766 = vld [vmem:[%s184 + $0x368] sm:$0xf]
        %v767 = vld [vmem:[%s184 + $0x36c] sm:$0xf]
        %v768 = vld [vmem:[%s184 + $0x370] sm:$0xf]
        %v769 = vld [vmem:[%s184 + $0x374] sm:$0xf]
        %v770 = vld [vmem:[%s184 + $0x378] sm:$0xf]
        %v771 = vld [vmem:[%s184 + $0x37c] sm:$0xf]
        %v772 = vld [vmem:[%s184 + $0x380] sm:$0xf]
        %v773 = vld [vmem:[%s184 + $0x384] sm:$0xf]
        %v774 = vld [vmem:[%s184 + $0x388] sm:$0xf]
        %v775 = vld [vmem:[%s184 + $0x38c] sm:$0xf]
        %v776 = vld [vmem:[%s184 + $0x390] sm:$0xf]
        %v777 = vld [vmem:[%s184 + $0x394] sm:$0xf]
        %v778 = vld [vmem:[%s184 + $0x398] sm:$0xf]
        %v779 = vld [vmem:[%s184 + $0x39c] sm:$0xf]
        %v780 = vld [vmem:[%s184 + $0x3a0] sm:$0xf]
        %v781 = vld [vmem:[%s184 + $0x3a4] sm:$0xf]
        %v782 = vld [vmem:[%s184 + $0x3a8] sm:$0xf]
        %v783 = vld [vmem:[%s184 + $0x3ac] sm:$0xf]
        %v784 = vld [vmem:[%s184 + $0x3b0] sm:$0xf]
        %v785 = vld [vmem:[%s184 + $0x3b4] sm:$0xf]
        %v786 = vld [vmem:[%s184 + $0x3b8] sm:$0xf]
        %v787 = vld [vmem:[%s184 + $0x3bc] sm:$0xf]
        %v788 = vld [vmem:[%s184 + $0x3c0] sm:$0xf]
        %v789 = vld [vmem:[%s184 + $0x3c4] sm:$0xf]
        %v790 = vld [vmem:[%s184 + $0x3c8] sm:$0xf]
        %v791 = vld [vmem:[%s184 + $0x3cc] sm:$0xf]
        %v792 = vld [vmem:[%s184 + $0x3d0] sm:$0xf]
        %v793 = vld [vmem:[%s184 + $0x3d4] sm:$0xf]
        %v794 = vld [vmem:[%s184 + $0x3d8] sm:$0xf]
        %v795 = vld [vmem:[%s184 + $0x3dc] sm:$0xf]
        %v796 = vld [vmem:[%s184 + $0x3e0] sm:$0xf]
        %v797 = vld [vmem:[%s184 + $0x3e4] sm:$0xf]
        %v798 = vld [vmem:[%s184 + $0x3e8] sm:$0xf]
        %v799 = vld [vmem:[%s184 + $0x3ec] sm:$0xf]
        %v800 = vld [vmem:[%s184 + $0x3f0] sm:$0xf]
        %v801 = vld [vmem:[%s184 + $0x3f4] sm:$0xf]
        %v802 = vld [vmem:[%s184 + $0x3f8] sm:$0xf]
        %v803 = vld [vmem:[%s184 + $0x3fc] sm:$0xf]
        %v804 = vld [vmem:[%s184 + $0x400] sm:$0xf]
        %v805 = vld [vmem:[%s184 + $0x404] sm:$0xf]
        %v806 = vld [vmem:[%s184 + $0x408] sm:$0xf]
        %v807 = vld [vmem:[%s184 + $0x40c] sm:$0xf]
        %v808 = vld [vmem:[%s184 + $0x410] sm:$0xf]
        %v809 = vld [vmem:[%s184 + $0x414] sm:$0xf]
        %v810 = vld [vmem:[%s184 + $0x418] sm:$0xf]
        %v811 = vld [vmem:[%s184 + $0x41c] sm:$0xf]
        %v812 = vld [vmem:[%s184 + $0x420] sm:$0xf]
        %v813 = vld [vmem:[%s184 + $0x424] sm:$0xf]
        %v814 = vld [vmem:[%s184 + $0x428] sm:$0xf]
        %v815 = vld [vmem:[%s184 + $0x42c] sm:$0xf]
        %v816 = vld [vmem:[%s184 + $0x430] sm:$0xf]
        %v817 = vld [vmem:[%s184 + $0x434] sm:$0xf]
        %v818 = vld [vmem:[%s184 + $0x438] sm:$0xf]
        %v819 = vld [vmem:[%s184 + $0x43c] sm:$0xf]
        %v820 = vld [vmem:[%s184 + $0x440] sm:$0xf]
        %v821 = vld [vmem:[%s184 + $0x444] sm:$0xf]
        %v822 = vld [vmem:[%s184 + $0x448] sm:$0xf]
        %v823 = vld [vmem:[%s184 + $0x44c] sm:$0xf]
        %v824 = vld [vmem:[%s184 + $0x450] sm:$0xf]
        %v825 = vld [vmem:[%s184 + $0x454] sm:$0xf]
        %v826 = vld [vmem:[%s184 + $0x458] sm:$0xf]
        %v827 = vld [vmem:[%s184 + $0x45c] sm:$0xf]
        %v828 = vld [vmem:[%s184 + $0x460] sm:$0xf]
        %v829 = vld [vmem:[%s184 + $0x464] sm:$0xf]
        %v830 = vld [vmem:[%s184 + $0x468] sm:$0xf]
        %v831 = vld [vmem:[%s184 + $0x46c] sm:$0xf]
        %v832 = vld [vmem:[%s184 + $0x470] sm:$0xf]
        %v833 = vld [vmem:[%s184 + $0x474] sm:$0xf]
        %v834 = vld [vmem:[%s184 + $0x478] sm:$0xf]
        %v835 = vld [vmem:[%s184 + $0x47c] sm:$0xf]
        %v836 = vld [vmem:[%s184 + $0x480] sm:$0xf]
        %v837 = vld [vmem:[%s184 + $0x484] sm:$0xf]
        %v838 = vld [vmem:[%s184 + $0x488] sm:$0xf]
        %v839 = vld [vmem:[%s184 + $0x48c] sm:$0xf]
        %v840 = vld [vmem:[%s184 + $0x490] sm:$0xf]
        %v841 = vld [vmem:[%s184 + $0x494] sm:$0xf]
        %v842 = vld [vmem:[%s184 + $0x498] sm:$0xf]
        %v843 = vld [vmem:[%s184 + $0x49c] sm:$0xf]
        %v844 = vld [vmem:[%s184 + $0x4a0] sm:$0xf]
        %v845 = vld [vmem:[%s184 + $0x4a4] sm:$0xf]
        %v846 = vld [vmem:[%s184 + $0x4a8] sm:$0xf]
        %v847 = vld [vmem:[%s184 + $0x4ac] sm:$0xf]
        %v848 = vld [vmem:[%s184 + $0x4b0] sm:$0xf]
        %v849 = vld [vmem:[%s184 + $0x4b4] sm:$0xf]
        %v850 = vld [vmem:[%s184 + $0x4b8] sm:$0xf]
        %v851 = vld [vmem:[%s184 + $0x4bc] sm:$0xf]
        %v852 = vld [vmem:[%s184 + $0x4c0] sm:$0xf]
        %v853 = vld [vmem:[%s184 + $0x4c4] sm:$0xf]
        %v854 = vld [vmem:[%s184 + $0x4c8] sm:$0xf]
        %v855 = vld [vmem:[%s184 + $0x4cc] sm:$0xf]
        %v856 = vld [vmem:[%s184 + $0x4d0] sm:$0xf]
        %v857 = vld [vmem:[%s184 + $0x4d4] sm:$0xf]
        %v858 = vld [vmem:[%s184 + $0x4d8] sm:$0xf]
        %v859 = vld [vmem:[%s184 + $0x4dc] sm:$0xf]
        %v860 = vld [vmem:[%s184 + $0x4e0] sm:$0xf]
        %v861 = vld [vmem:[%s184 + $0x4e4] sm:$0xf]
        %v862 = vld [vmem:[%s184 + $0x4e8] sm:$0xf]
        %v863 = vld [vmem:[%s184 + $0x4ec] sm:$0xf]
        %v864 = vld [vmem:[%s184 + $0x4f0] sm:$0xf]
        %v865 = vld [vmem:[%s184 + $0x4f4] sm:$0xf]
        %v866 = vld [vmem:[%s184 + $0x4f8] sm:$0xf]
        %v867 = vld [vmem:[%s184 + $0x4fc] sm:$0xf]
        %v868 = vld [vmem:[%s184 + $0x500] sm:$0xf]
        %v869 = vld [vmem:[%s184 + $0x504] sm:$0xf]
        %v870 = vld [vmem:[%s184 + $0x508] sm:$0xf]
        %v871 = vld [vmem:[%s184 + $0x50c] sm:$0xf]
        %v872 = vld [vmem:[%s184 + $0x510] sm:$0xf]
        %v873 = vld [vmem:[%s184 + $0x514] sm:$0xf]
        %v874 = vld [vmem:[%s184 + $0x518] sm:$0xf]
        %v875 = vld [vmem:[%s184 + $0x51c] sm:$0xf]
        %v876 = vld [vmem:[%s184 + $0x520] sm:$0xf]
        %v877 = vld [vmem:[%s184 + $0x524] sm:$0xf]
        %v878 = vld [vmem:[%s184 + $0x528] sm:$0xf]
        %v879 = vld [vmem:[%s184 + $0x52c] sm:$0xf]
        %v880 = vld [vmem:[%s184 + $0x530] sm:$0xf]
        %v881 = vld [vmem:[%s184 + $0x534] sm:$0xf]
        %v882 = vld [vmem:[%s184 + $0x538] sm:$0xf]
        %v883 = vld [vmem:[%s184 + $0x53c] sm:$0xf]
        %v884 = vld [vmem:[%s184 + $0x540] sm:$0xf]
        %v885 = vld [vmem:[%s184 + $0x544] sm:$0xf]
        %v886 = vld [vmem:[%s184 + $0x548] sm:$0xf]
        %v887 = vld [vmem:[%s184 + $0x54c] sm:$0xf]
        %v888 = vld [vmem:[%s184 + $0x550] sm:$0xf]
        %v889 = vld [vmem:[%s184 + $0x554] sm:$0xf]
        %v890 = vld [vmem:[%s184 + $0x558] sm:$0xf]
        %v891 = vld [vmem:[%s184 + $0x55c] sm:$0xf]
        %v892 = vld [vmem:[%s184 + $0x560] sm:$0xf]
        %v893 = vld [vmem:[%s184 + $0x564] sm:$0xf]
        %v894 = vld [vmem:[%s184 + $0x568] sm:$0xf]
        %v895 = vld [vmem:[%s184 + $0x56c] sm:$0xf]
        %v896 = vld [vmem:[%s184 + $0x570] sm:$0xf]
        %v897 = vld [vmem:[%s184 + $0x574] sm:$0xf]
        %v898 = vld [vmem:[%s184 + $0x578] sm:$0xf]
        %v899 = vld [vmem:[%s184 + $0x57c] sm:$0xf]
        %v900 = vld [vmem:[%s184 + $0x580] sm:$0xf]
        %v901 = vld [vmem:[%s184 + $0x584] sm:$0xf]
        %v902 = vld [vmem:[%s184 + $0x588] sm:$0xf]
        %v903 = vld [vmem:[%s184 + $0x58c] sm:$0xf]
        %v904 = vld [vmem:[%s184 + $0x590] sm:$0xf]
        %v905 = vld [vmem:[%s184 + $0x594] sm:$0xf]
        %v906 = vld [vmem:[%s184 + $0x598] sm:$0xf]
        %v907 = vld [vmem:[%s184 + $0x59c] sm:$0xf]
        %v908 = vld [vmem:[%s184 + $0x5a0] sm:$0xf]
        %v909 = vld [vmem:[%s184 + $0x5a4] sm:$0xf]
        %v910 = vld [vmem:[%s184 + $0x5a8] sm:$0xf]
        %v911 = vld [vmem:[%s184 + $0x5ac] sm:$0xf]
        %v912 = vld [vmem:[%s184 + $0x5b0] sm:$0xf]
        %v913 = vld [vmem:[%s184 + $0x5b4] sm:$0xf]
        %v914 = vld [vmem:[%s184 + $0x5b8] sm:$0xf]
        %v915 = vld [vmem:[%s184 + $0x5bc] sm:$0xf]
        %v916 = vld [vmem:[%s184 + $0x5c0] sm:$0xf]
        %v917 = vld [vmem:[%s184 + $0x5c4] sm:$0xf]
        %v918 = vld [vmem:[%s184 + $0x5c8] sm:$0xf]
        %v919 = vld [vmem:[%s184 + $0x5cc] sm:$0xf]
        %v920 = vld [vmem:[%s184 + $0x5d0] sm:$0xf]
        %v921 = vld [vmem:[%s184 + $0x5d4] sm:$0xf]
        %v922 = vld [vmem:[%s184 + $0x5d8] sm:$0xf]
        %v923 = vld [vmem:[%s184 + $0x5dc] sm:$0xf]
        %v924 = vld [vmem:[%s184 + $0x5e0] sm:$0xf]
        %v925 = vld [vmem:[%s184 + $0x5e4] sm:$0xf]
        %v926 = vld [vmem:[%s184 + $0x5e8] sm:$0xf]
        %v927 = vld [vmem:[%s184 + $0x5ec] sm:$0xf]
        %v928 = vld [vmem:[%s184 + $0x5f0] sm:$0xf]
        %v929 = vld [vmem:[%s184 + $0x5f4] sm:$0xf]
        %v930 = vld [vmem:[%s184 + $0x5f8] sm:$0xf]
        %v931 = vld [vmem:[%s184 + $0x5fc] sm:$0xf]
        %v932 = vld [vmem:[%s184 + $0x600] sm:$0xf]
        %v933 = vld [vmem:[%s184 + $0x604] sm:$0xf]
        %v934 = vld [vmem:[%s184 + $0x608] sm:$0xf]
        %v935 = vld [vmem:[%s184 + $0x60c] sm:$0xf]
        %v936 = vld [vmem:[%s184 + $0x610] sm:$0xf]
        %v937 = vld [vmem:[%s184 + $0x614] sm:$0xf]
        %v938 = vld [vmem:[%s184 + $0x618] sm:$0xf]
        %v939 = vld [vmem:[%s184 + $0x61c] sm:$0xf]
        %v940 = vld [vmem:[%s184 + $0x620] sm:$0xf]
        %v941 = vld [vmem:[%s184 + $0x624] sm:$0xf]
        %v942 = vld [vmem:[%s184 + $0x628] sm:$0xf]
        %v943 = vld [vmem:[%s184 + $0x62c] sm:$0xf]
        %v944 = vld [vmem:[%s184 + $0x630] sm:$0xf]
        %v945 = vld [vmem:[%s184 + $0x634] sm:$0xf]
        %v946 = vld [vmem:[%s184 + $0x638] sm:$0xf]
        %v947 = vld [vmem:[%s184 + $0x63c] sm:$0xf]
        %v948 = vld [vmem:[%s184 + $0x640] sm:$0xf]
        %v949 = vld [vmem:[%s184 + $0x644] sm:$0xf]
        %v950 = vld [vmem:[%s184 + $0x648] sm:$0xf]
        %v951 = vld [vmem:[%s184 + $0x64c] sm:$0xf]
        %v952 = vld [vmem:[%s184 + $0x650] sm:$0xf]
        %v953 = vld [vmem:[%s184 + $0x654] sm:$0xf]
        %v954 = vld [vmem:[%s184 + $0x658] sm:$0xf]
        %v955 = vld [vmem:[%s184 + $0x65c] sm:$0xf]
        %v956 = vld [vmem:[%s184 + $0x660] sm:$0xf]
        %v957 = vld [vmem:[%s184 + $0x664] sm:$0xf]
        %v958 = vld [vmem:[%s184 + $0x668] sm:$0xf]
        %v959 = vld [vmem:[%s184 + $0x66c] sm:$0xf]
        %v960 = vld [vmem:[%s184 + $0x670] sm:$0xf]
        %v961 = vld [vmem:[%s184 + $0x674] sm:$0xf]
        %v962 = vld [vmem:[%s184 + $0x678] sm:$0xf]
        %v963 = vld [vmem:[%s184 + $0x67c] sm:$0xf]
        %v964 = vld [vmem:[%s184 + $0x680] sm:$0xf]
        %v965 = vld [vmem:[%s184 + $0x684] sm:$0xf]
        %v966 = vld [vmem:[%s184 + $0x688] sm:$0xf]
        %v967 = vld [vmem:[%s184 + $0x68c] sm:$0xf]
        %v968 = vld [vmem:[%s184 + $0x690] sm:$0xf]
        %v969 = vld [vmem:[%s184 + $0x694] sm:$0xf]
        %v970 = vld [vmem:[%s184 + $0x698] sm:$0xf]
        %v971 = vld [vmem:[%s184 + $0x69c] sm:$0xf]
        %v972 = vld [vmem:[%s184 + $0x6a0] sm:$0xf]
        %v973 = vld [vmem:[%s184 + $0x6a4] sm:$0xf]
        %v974 = vld [vmem:[%s184 + $0x6a8] sm:$0xf]
        %v975 = vld [vmem:[%s184 + $0x6ac] sm:$0xf]
        %v976 = vld [vmem:[%s184 + $0x6b0] sm:$0xf]
        %v977 = vld [vmem:[%s184 + $0x6b4] sm:$0xf]
        %v978 = vld [vmem:[%s184 + $0x6b8] sm:$0xf]
        %v979 = vld [vmem:[%s184 + $0x6bc] sm:$0xf]
        %v980 = vld [vmem:[%s184 + $0x6c0] sm:$0xf]
        %v981 = vld [vmem:[%s184 + $0x6c4] sm:$0xf]
        %v982 = vld [vmem:[%s184 + $0x6c8] sm:$0xf]
        %v983 = vld [vmem:[%s184 + $0x6cc] sm:$0xf]
        %v984 = vld [vmem:[%s184 + $0x6d0] sm:$0xf]
        %v985 = vld [vmem:[%s184 + $0x6d4] sm:$0xf]
        %v986 = vld [vmem:[%s184 + $0x6d8] sm:$0xf]
        %v987 = vld [vmem:[%s184 + $0x6dc] sm:$0xf]
        %v988 = vld [vmem:[%s184 + $0x6e0] sm:$0xf]
        %v989 = vld [vmem:[%s184 + $0x6e4] sm:$0xf]
        %v990 = vld [vmem:[%s184 + $0x6e8] sm:$0xf]
        %v991 = vld [vmem:[%s184 + $0x6ec] sm:$0xf]
        %v992 = vld [vmem:[%s184 + $0x6f0] sm:$0xf]
        %v993 = vld [vmem:[%s184 + $0x6f4] sm:$0xf]
        %v994 = vld [vmem:[%s184 + $0x6f8] sm:$0xf]
        %v995 = vld [vmem:[%s184 + $0x6fc] sm:$0xf]
        %v996 = vld [vmem:[%s184 + $0x700] sm:$0xf]
        %v997 = vld [vmem:[%s184 + $0x704] sm:$0xf]
        %v998 = vld [vmem:[%s184 + $0x708] sm:$0xf]
        %v999 = vld [vmem:[%s184 + $0x70c] sm:$0xf]
        %v1000 = vld [vmem:[%s184 + $0x710] sm:$0xf]
        %v1001 = vld [vmem:[%s184 + $0x714] sm:$0xf]
        %v1002 = vld [vmem:[%s184 + $0x718] sm:$0xf]
        %v1003 = vld [vmem:[%s184 + $0x71c] sm:$0xf]
        %v1004 = vld [vmem:[%s184 + $0x720] sm:$0xf]
        %v1005 = vld [vmem:[%s184 + $0x724] sm:$0xf]
        %v1006 = vld [vmem:[%s184 + $0x728] sm:$0xf]
        %v1007 = vld [vmem:[%s184 + $0x72c] sm:$0xf]
        %v1008 = vld [vmem:[%s184 + $0x730] sm:$0xf]
        %v1009 = vld [vmem:[%s184 + $0x734] sm:$0xf]
        %v1010 = vld [vmem:[%s184 + $0x738] sm:$0xf]
        %v1011 = vld [vmem:[%s184 + $0x73c] sm:$0xf]
        %v1012 = vld [vmem:[%s184 + $0x740] sm:$0xf]
        %v1013 = vld [vmem:[%s184 + $0x744] sm:$0xf]
        %v1014 = vld [vmem:[%s184 + $0x748] sm:$0xf]
        %v1015 = vld [vmem:[%s184 + $0x74c] sm:$0xf]
        %v1016 = vld [vmem:[%s184 + $0x750] sm:$0xf]
        %v1017 = vld [vmem:[%s184 + $0x754] sm:$0xf]
        %v1018 = vld [vmem:[%s184 + $0x758] sm:$0xf]
        %v1019 = vld [vmem:[%s184 + $0x75c] sm:$0xf]
        %v1020 = vld [vmem:[%s184 + $0x760] sm:$0xf]
        %v1021 = vld [vmem:[%s184 + $0x764] sm:$0xf]
        %v1022 = vld [vmem:[%s184 + $0x768] sm:$0xf]
        %v1023 = vld [vmem:[%s184 + $0x76c] sm:$0xf]
        %v1024 = vld [vmem:[%s184 + $0x770] sm:$0xf]
        %v1025 = vld [vmem:[%s184 + $0x774] sm:$0xf]
        %v1026 = vld [vmem:[%s184 + $0x778] sm:$0xf]
        %v1027 = vld [vmem:[%s184 + $0x77c] sm:$0xf]
        %v1028 = vld [vmem:[%s184 + $0x780] sm:$0xf]
        %v1029 = vld [vmem:[%s184 + $0x784] sm:$0xf]
        %v1030 = vld [vmem:[%s184 + $0x788] sm:$0xf]
        %v1031 = vld [vmem:[%s184 + $0x78c] sm:$0xf]
        %v1032 = vld [vmem:[%s184 + $0x790] sm:$0xf]
        %v1033 = vld [vmem:[%s184 + $0x794] sm:$0xf]
        %v1034 = vld [vmem:[%s184 + $0x798] sm:$0xf]
        %v1035 = vld [vmem:[%s184 + $0x79c] sm:$0xf]
        %v1036 = vld [vmem:[%s184 + $0x7a0] sm:$0xf]
        %v1037 = vld [vmem:[%s184 + $0x7a4] sm:$0xf]
        %v1038 = vld [vmem:[%s184 + $0x7a8] sm:$0xf]
        %v1039 = vld [vmem:[%s184 + $0x7ac] sm:$0xf]
        %v1040 = vld [vmem:[%s184 + $0x7b0] sm:$0xf]
        %v1041 = vld [vmem:[%s184 + $0x7b4] sm:$0xf]
        %v1042 = vld [vmem:[%s184 + $0x7b8] sm:$0xf]
        %v1043 = vld [vmem:[%s184 + $0x7bc] sm:$0xf]
        %v1044 = vld [vmem:[%s184 + $0x7c0] sm:$0xf]
        %v1045 = vld [vmem:[%s184 + $0x7c4] sm:$0xf]
        %v1046 = vld [vmem:[%s184 + $0x7c8] sm:$0xf]
        %v1047 = vld [vmem:[%s184 + $0x7cc] sm:$0xf]
        %v1048 = vld [vmem:[%s184 + $0x7d0] sm:$0xf]
        %v1049 = vld [vmem:[%s184 + $0x7d4] sm:$0xf]
        %v1050 = vld [vmem:[%s184 + $0x7d8] sm:$0xf]
        %v1051 = vld [vmem:[%s184 + $0x7dc] sm:$0xf]
        %v1052 = vld [vmem:[%s184 + $0x7e0] sm:$0xf]
        %v1053 = vld [vmem:[%s184 + $0x7e4] sm:$0xf]
        %v1054 = vld [vmem:[%s184 + $0x7e8] sm:$0xf]
        %v1055 = vld [vmem:[%s184 + $0x7ec] sm:$0xf]
        %v1056 = vld [vmem:[%s184 + $0x7f0] sm:$0xf]
        %v1057 = vld [vmem:[%s184 + $0x7f4] sm:$0xf]
        %v1058 = vld [vmem:[%s184 + $0x7f8] sm:$0xf]
        %v1059 = vld [vmem:[%s184 + $0x7fc] sm:$0xf]
        %v1060 = vld [vmem:[%s184 + $0x800] sm:$0xf]
        %v1061 = vld [vmem:[%s184 + $0x804] sm:$0xf]
        %v1062 = vld [vmem:[%s184 + $0x808] sm:$0xf]
        %v1063 = vld [vmem:[%s184 + $0x80c] sm:$0xf]
        %v1064 = vld [vmem:[%s184 + $0x810] sm:$0xf]
        %v1065 = vld [vmem:[%s184 + $0x814] sm:$0xf]
        %v1066 = vld [vmem:[%s184 + $0x818] sm:$0xf]
        %v1067 = vld [vmem:[%s184 + $0x81c] sm:$0xf]
        %v1068 = vld [vmem:[%s184 + $0x820] sm:$0xf]
        %v1069 = vld [vmem:[%s184 + $0x824] sm:$0xf]
        %v1070 = vld [vmem:[%s184 + $0x828] sm:$0xf]
        %v1071 = vld [vmem:[%s184 + $0x82c] sm:$0xf]
        %v1072 = vld [vmem:[%s184 + $0x830] sm:$0xf]
        %v1073 = vld [vmem:[%s184 + $0x834] sm:$0xf]
        %v1074 = vld [vmem:[%s184 + $0x838] sm:$0xf]
        %v1075 = vld [vmem:[%s184 + $0x83c] sm:$0xf]
        %v1076 = vld [vmem:[%s184 + $0x840] sm:$0xf]
        %v1077 = vld [vmem:[%s184 + $0x844] sm:$0xf]
        %v1078 = vld [vmem:[%s184 + $0x848] sm:$0xf]
        %v1079 = vld [vmem:[%s184 + $0x84c] sm:$0xf]
        %v1080 = vld [vmem:[%s184 + $0x850] sm:$0xf]
        %v1081 = vld [vmem:[%s184 + $0x854] sm:$0xf]
        %v1082 = vld [vmem:[%s184 + $0x858] sm:$0xf]
        %v1083 = vld [vmem:[%s184 + $0x85c] sm:$0xf]
        %v1084 = vld [vmem:[%s184 + $0x860] sm:$0xf]
        %v1085 = vld [vmem:[%s184 + $0x864] sm:$0xf]
        %v1086 = vld [vmem:[%s184 + $0x868] sm:$0xf]
        %v1087 = vld [vmem:[%s184 + $0x86c] sm:$0xf]
        %v1088 = vld [vmem:[%s184 + $0x870] sm:$0xf]
        %v1089 = vld [vmem:[%s184 + $0x874] sm:$0xf]
        %v1090 = vld [vmem:[%s184 + $0x878] sm:$0xf]
        %v1091 = vld [vmem:[%s184 + $0x87c] sm:$0xf]
        %v1092 = vld [vmem:[%s184 + $0x880] sm:$0xf]
        %v1093 = vld [vmem:[%s184 + $0x884] sm:$0xf]
        %v1094 = vld [vmem:[%s184 + $0x888] sm:$0xf]
        %v1095 = vld [vmem:[%s184 + $0x88c] sm:$0xf]
        %v1096 = vld [vmem:[%s184 + $0x890] sm:$0xf]
        %v1097 = vld [vmem:[%s184 + $0x894] sm:$0xf]
        %v1098 = vld [vmem:[%s184 + $0x898] sm:$0xf]
        %v1099 = vld [vmem:[%s184 + $0x89c] sm:$0xf]
        %v1100 = vld [vmem:[%s184 + $0x8a0] sm:$0xf]
        %v1101 = vld [vmem:[%s184 + $0x8a4] sm:$0xf]
        %v1102 = vld [vmem:[%s184 + $0x8a8] sm:$0xf]
        %v1103 = vld [vmem:[%s184 + $0x8ac] sm:$0xf]
        %v1104 = vld [vmem:[%s184 + $0x8b0] sm:$0xf]
        %v1105 = vld [vmem:[%s184 + $0x8b4] sm:$0xf]
        %v1106 = vld [vmem:[%s184 + $0x8b8] sm:$0xf]
        %v1107 = vld [vmem:[%s184 + $0x8bc] sm:$0xf]
        %v1108 = vld [vmem:[%s184 + $0x8c0] sm:$0xf]
        %v1109 = vld [vmem:[%s184 + $0x8c4] sm:$0xf]
        %v1110 = vld [vmem:[%s184 + $0x8c8] sm:$0xf]
        %v1111 = vld [vmem:[%s184 + $0x8cc] sm:$0xf]
        %v1112 = vld [vmem:[%s184 + $0x8d0] sm:$0xf]
        %v1113 = vld [vmem:[%s184 + $0x8d4] sm:$0xf]
        %v1114 = vld [vmem:[%s184 + $0x8d8] sm:$0xf]
        %v1115 = vld [vmem:[%s184 + $0x8dc] sm:$0xf]
        %v1116 = vld [vmem:[%s184 + $0x8e0] sm:$0xf]
        %v1117 = vld [vmem:[%s184 + $0x8e4] sm:$0xf]
        %v1118 = vld [vmem:[%s184 + $0x8e8] sm:$0xf]
        %v1119 = vld [vmem:[%s184 + $0x8ec] sm:$0xf]
        %v1120 = vld [vmem:[%s184 + $0x8f0] sm:$0xf]
        %v1121 = vld [vmem:[%s184 + $0x8f4] sm:$0xf]
        %v1122 = vld [vmem:[%s184 + $0x8f8] sm:$0xf]
        %v1123 = vld [vmem:[%s184 + $0x8fc] sm:$0xf]
        %v1124 = vld [vmem:[%s184 + $0x900] sm:$0xf]
        %v1125 = vld [vmem:[%s184 + $0x904] sm:$0xf]
        %v1126 = vld [vmem:[%s184 + $0x908] sm:$0xf]
        %v1127 = vld [vmem:[%s184 + $0x90c] sm:$0xf]
        %v1128 = vld [vmem:[%s184 + $0x910] sm:$0xf]
        %v1129 = vld [vmem:[%s184 + $0x914] sm:$0xf]
        %v1130 = vld [vmem:[%s184 + $0x918] sm:$0xf]
        %v1131 = vld [vmem:[%s184 + $0x91c] sm:$0xf]
        %v1132 = vld [vmem:[%s184 + $0x920] sm:$0xf]
        %v1133 = vld [vmem:[%s184 + $0x924] sm:$0xf]
        %v1134 = vld [vmem:[%s184 + $0x928] sm:$0xf]
        %v1135 = vld [vmem:[%s184 + $0x92c] sm:$0xf]
        %v1136 = vld [vmem:[%s184 + $0x930] sm:$0xf]
        %v1137 = vld [vmem:[%s184 + $0x934] sm:$0xf]
        %v1138 = vld [vmem:[%s184 + $0x938] sm:$0xf]
        %v1139 = vld [vmem:[%s184 + $0x93c] sm:$0xf]
        %v1140 = vld [vmem:[%s184 + $0x940] sm:$0xf]
        %v1141 = vld [vmem:[%s184 + $0x944] sm:$0xf]
        %v1142 = vld [vmem:[%s184 + $0x948] sm:$0xf]
        %v1143 = vld [vmem:[%s184 + $0x94c] sm:$0xf]
        %v1144 = vld [vmem:[%s184 + $0x950] sm:$0xf]
        %v1145 = vld [vmem:[%s184 + $0x954] sm:$0xf]
        %v1146 = vld [vmem:[%s184 + $0x958] sm:$0xf]
        %v1147 = vld [vmem:[%s184 + $0x95c] sm:$0xf]
        %v1148 = vld [vmem:[%s184 + $0x960] sm:$0xf]
        %v1149 = vld [vmem:[%s184 + $0x964] sm:$0xf]
        %v1150 = vld [vmem:[%s184 + $0x968] sm:$0xf]
        %v1151 = vld [vmem:[%s184 + $0x96c] sm:$0xf]
        %v1152 = vld [vmem:[%s184 + $0x970] sm:$0xf]
        %v1153 = vld [vmem:[%s184 + $0x974] sm:$0xf]
        %v1154 = vld [vmem:[%s184 + $0x978] sm:$0xf]
        %v1155 = vld [vmem:[%s184 + $0x97c] sm:$0xf]
        %v1156 = vld [vmem:[%s184 + $0x980] sm:$0xf]
        %v1157 = vld [vmem:[%s184 + $0x984] sm:$0xf]
        %v1158 = vld [vmem:[%s184 + $0x988] sm:$0xf]
        %v1159 = vld [vmem:[%s184 + $0x98c] sm:$0xf]
        %v1160 = vld [vmem:[%s184 + $0x990] sm:$0xf]
        %v1161 = vld [vmem:[%s184 + $0x994] sm:$0xf]
        %v1162 = vld [vmem:[%s184 + $0x998] sm:$0xf]
        %v1163 = vld [vmem:[%s184 + $0x99c] sm:$0xf]
        %v1164 = vld [vmem:[%s184 + $0x9a0] sm:$0xf]
        %v1165 = vld [vmem:[%s184 + $0x9a4] sm:$0xf]
        %v1166 = vld [vmem:[%s184 + $0x9a8] sm:$0xf]
        %v1167 = vld [vmem:[%s184 + $0x9ac] sm:$0xf]
        %v1168 = vld [vmem:[%s184 + $0x9b0] sm:$0xf]
        %v1169 = vld [vmem:[%s184 + $0x9b4] sm:$0xf]
        %v1170 = vld [vmem:[%s184 + $0x9b8] sm:$0xf]
        %v1171 = vld [vmem:[%s184 + $0x9bc] sm:$0xf]
        %v1172 = vld [vmem:[%s184 + $0x9c0] sm:$0xf]
        %v1173 = vld [vmem:[%s184 + $0x9c4] sm:$0xf]
        %v1174 = vld [vmem:[%s184 + $0x9c8] sm:$0xf]
        %v1175 = vld [vmem:[%s184 + $0x9cc] sm:$0xf]
        %v1176 = vld [vmem:[%s184 + $0x9d0] sm:$0xf]
        %v1177 = vld [vmem:[%s184 + $0x9d4] sm:$0xf]
        %v1178 = vld [vmem:[%s184 + $0x9d8] sm:$0xf]
        %v1179 = vld [vmem:[%s184 + $0x9dc] sm:$0xf]
        %v1180 = vld [vmem:[%s184 + $0x9e0] sm:$0xf]
        %v1181 = vld [vmem:[%s184 + $0x9e4] sm:$0xf]
        %v1182 = vld [vmem:[%s184 + $0x9e8] sm:$0xf]
        %v1183 = vld [vmem:[%s184 + $0x9ec] sm:$0xf]
        %v1184 = vld [vmem:[%s184 + $0x9f0] sm:$0xf]
        %v1185 = vld [vmem:[%s184 + $0x9f4] sm:$0xf]
        %v1186 = vld [vmem:[%s184 + $0x9f8] sm:$0xf]
        %v1187 = vld [vmem:[%s184 + $0x9fc] sm:$0xf]
        %v1188 = vld [vmem:[%s184 + $0xa00] sm:$0xf]
        %v1189 = vld [vmem:[%s184 + $0xa04] sm:$0xf]
        %v1190 = vld [vmem:[%s184 + $0xa08] sm:$0xf]
        %v1191 = vld [vmem:[%s184 + $0xa0c] sm:$0xf]
        %v1192 = vld [vmem:[%s184 + $0xa10] sm:$0xf]
        %v1193 = vld [vmem:[%s184 + $0xa14] sm:$0xf]
        %v1194 = vld [vmem:[%s184 + $0xa18] sm:$0xf]
        %v1195 = vld [vmem:[%s184 + $0xa1c] sm:$0xf]
        %v1196 = vld [vmem:[%s184 + $0xa20] sm:$0xf]
        %v1197 = vld [vmem:[%s184 + $0xa24] sm:$0xf]
        %v1198 = vld [vmem:[%s184 + $0xa28] sm:$0xf]
        %v1199 = vld [vmem:[%s184 + $0xa2c] sm:$0xf]
        %v1200 = vld [vmem:[%s184 + $0xa30] sm:$0xf]
        %v1201 = vld [vmem:[%s184 + $0xa34] sm:$0xf]
        %v1202 = vld [vmem:[%s184 + $0xa38] sm:$0xf]
        %v1203 = vld [vmem:[%s184 + $0xa3c] sm:$0xf]
        %v1204 = vld [vmem:[%s184 + $0xa40] sm:$0xf]
        %v1205 = vld [vmem:[%s184 + $0xa44] sm:$0xf]
        %v1206 = vld [vmem:[%s184 + $0xa48] sm:$0xf]
        %v1207 = vld [vmem:[%s184 + $0xa4c] sm:$0xf]
        %v1208 = vld [vmem:[%s184 + $0xa50] sm:$0xf]
        %v1209 = vld [vmem:[%s184 + $0xa54] sm:$0xf]
        %v1210 = vld [vmem:[%s184 + $0xa58] sm:$0xf]
        %v1211 = vld [vmem:[%s184 + $0xa5c] sm:$0xf]
        %v1212 = vld [vmem:[%s184 + $0xa60] sm:$0xf]
        %v1213 = vld [vmem:[%s184 + $0xa64] sm:$0xf]
        %v1214 = vld [vmem:[%s184 + $0xa68] sm:$0xf]
        %v1215 = vld [vmem:[%s184 + $0xa6c] sm:$0xf]
        %v1216 = vld [vmem:[%s184 + $0xa70] sm:$0xf]
        %v1217 = vld [vmem:[%s184 + $0xa74] sm:$0xf]
        %v1218 = vld [vmem:[%s184 + $0xa78] sm:$0xf]
        %v1219 = vld [vmem:[%s184 + $0xa7c] sm:$0xf]
        %v1220 = vld [vmem:[%s184 + $0xa80] sm:$0xf]
        %v1221 = vld [vmem:[%s184 + $0xa84] sm:$0xf]
        %v1222 = vld [vmem:[%s184 + $0xa88] sm:$0xf]
        %v1223 = vld [vmem:[%s184 + $0xa8c] sm:$0xf]
        %v1224 = vld [vmem:[%s184 + $0xa90] sm:$0xf]
        %v1225 = vld [vmem:[%s184 + $0xa94] sm:$0xf]
        %v1226 = vld [vmem:[%s184 + $0xa98] sm:$0xf]
        %v1227 = vld [vmem:[%s184 + $0xa9c] sm:$0xf]
        %v1228 = vld [vmem:[%s184 + $0xaa0] sm:$0xf]
        %v1229 = vld [vmem:[%s184 + $0xaa4] sm:$0xf]
        %v1230 = vld [vmem:[%s184 + $0xaa8] sm:$0xf]
        %v1231 = vld [vmem:[%s184 + $0xaac] sm:$0xf]
        %v1232 = vld [vmem:[%s184 + $0xab0] sm:$0xf]
        %v1233 = vld [vmem:[%s184 + $0xab4] sm:$0xf]
        %v1234 = vld [vmem:[%s184 + $0xab8] sm:$0xf]
        %v1235 = vld [vmem:[%s184 + $0xabc] sm:$0xf]
        %v1236 = vld [vmem:[%s184 + $0xac0] sm:$0xf]
        %v1237 = vld [vmem:[%s184 + $0xac4] sm:$0xf]
        %v1238 = vld [vmem:[%s184 + $0xac8] sm:$0xf]
        %v1239 = vld [vmem:[%s184 + $0xacc] sm:$0xf]
        %v1240 = vld [vmem:[%s184 + $0xad0] sm:$0xf]
        %v1241 = vld [vmem:[%s184 + $0xad4] sm:$0xf]
        %v1242 = vld [vmem:[%s184 + $0xad8] sm:$0xf]
        %v1243 = vld [vmem:[%s184 + $0xadc] sm:$0xf]
        %v1244 = vld [vmem:[%s184 + $0xae0] sm:$0xf]
        %v1245 = vld [vmem:[%s184 + $0xae4] sm:$0xf]
        %v1246 = vld [vmem:[%s184 + $0xae8] sm:$0xf]
        %v1247 = vld [vmem:[%s184 + $0xaec] sm:$0xf]
        %v1248 = vld [vmem:[%s184 + $0xaf0] sm:$0xf]
        %v1249 = vld [vmem:[%s184 + $0xaf4] sm:$0xf]
        %v1250 = vld [vmem:[%s184 + $0xaf8] sm:$0xf]
        %v1251 = vld [vmem:[%s184 + $0xafc] sm:$0xf]
        %v1252 = vld [vmem:[%s184 + $0xb00] sm:$0xf]
        %v1253 = vld [vmem:[%s184 + $0xb04] sm:$0xf]
        %v1254 = vld [vmem:[%s184 + $0xb08] sm:$0xf]
        %v1255 = vld [vmem:[%s184 + $0xb0c] sm:$0xf]
        %v1256 = vld [vmem:[%s184 + $0xb10] sm:$0xf]
        %v1257 = vld [vmem:[%s184 + $0xb14] sm:$0xf]
        %v1258 = vld [vmem:[%s184 + $0xb18] sm:$0xf]
        %v1259 = vld [vmem:[%s184 + $0xb1c] sm:$0xf]
        %v1260 = vld [vmem:[%s184 + $0xb20] sm:$0xf]
        %v1261 = vld [vmem:[%s184 + $0xb24] sm:$0xf]
        %v1262 = vld [vmem:[%s184 + $0xb28] sm:$0xf]
        %v1263 = vld [vmem:[%s184 + $0xb2c] sm:$0xf]
        %v1264 = vld [vmem:[%s184 + $0xb30] sm:$0xf]
        %v1265 = vld [vmem:[%s184 + $0xb34] sm:$0xf]
        %v1266 = vld [vmem:[%s184 + $0xb38] sm:$0xf]
        %v1267 = vld [vmem:[%s184 + $0xb3c] sm:$0xf]
        %v1268 = vld [vmem:[%s184 + $0xb40] sm:$0xf]
        %v1269 = vld [vmem:[%s184 + $0xb44] sm:$0xf]
        %v1270 = vld [vmem:[%s184 + $0xb48] sm:$0xf]
        %v1271 = vld [vmem:[%s184 + $0xb4c] sm:$0xf]
        %v1272 = vld [vmem:[%s184 + $0xb50] sm:$0xf]
        %v1273 = vld [vmem:[%s184 + $0xb54] sm:$0xf]
        %v1274 = vld [vmem:[%s184 + $0xb58] sm:$0xf]
        %v1275 = vld [vmem:[%s184 + $0xb5c] sm:$0xf]
        %v1276 = vld [vmem:[%s184 + $0xb60] sm:$0xf]
        %v1277 = vld [vmem:[%s184 + $0xb64] sm:$0xf]
        %v1278 = vld [vmem:[%s184 + $0xb68] sm:$0xf]
        %v1279 = vld [vmem:[%s184 + $0xb6c] sm:$0xf]
        %v1280 = vld [vmem:[%s184 + $0xb70] sm:$0xf]
        %v1281 = vld [vmem:[%s184 + $0xb74] sm:$0xf]
        %v1282 = vld [vmem:[%s184 + $0xb78] sm:$0xf]
        %v1283 = vld [vmem:[%s184 + $0xb7c] sm:$0xf]
        %v1284 = vld [vmem:[%s184 + $0xb80] sm:$0xf]
        %v1285 = vld [vmem:[%s184 + $0xb84] sm:$0xf]
        %v1286 = vld [vmem:[%s184 + $0xb88] sm:$0xf]
        %v1287 = vld [vmem:[%s184 + $0xb8c] sm:$0xf]
        %v1288 = vld [vmem:[%s184 + $0xb90] sm:$0xf]
        %v1289 = vld [vmem:[%s184 + $0xb94] sm:$0xf]
        %v1290 = vld [vmem:[%s184 + $0xb98] sm:$0xf]
        %v1291 = vld [vmem:[%s184 + $0xb9c] sm:$0xf]
        %v1292 = vld [vmem:[%s184 + $0xba0] sm:$0xf]
        %v1293 = vld [vmem:[%s184 + $0xba4] sm:$0xf]
        %v1294 = vld [vmem:[%s184 + $0xba8] sm:$0xf]
        %v1295 = vld [vmem:[%s184 + $0xbac] sm:$0xf]
        %v1296 = vld [vmem:[%s184 + $0xbb0] sm:$0xf]
        %v1297 = vld [vmem:[%s184 + $0xbb4] sm:$0xf]
        %v1298 = vld [vmem:[%s184 + $0xbb8] sm:$0xf]
        %v1299 = vld [vmem:[%s184 + $0xbbc] sm:$0xf]
        %v1300 = vld [vmem:[%s184 + $0xbc0] sm:$0xf]
        %v1301 = vld [vmem:[%s184 + $0xbc4] sm:$0xf]
        %v1302 = vld [vmem:[%s184 + $0xbc8] sm:$0xf]
        %v1303 = vld [vmem:[%s184 + $0xbcc] sm:$0xf]
        %v1304 = vld [vmem:[%s184 + $0xbd0] sm:$0xf]
        %v1305 = vld [vmem:[%s184 + $0xbd4] sm:$0xf]
        %v1306 = vld [vmem:[%s184 + $0xbd8] sm:$0xf]
        %v1307 = vld [vmem:[%s184 + $0xbdc] sm:$0xf]
        %v1308 = vld [vmem:[%s184 + $0xbe0] sm:$0xf]
        %v1309 = vld [vmem:[%s184 + $0xbe4] sm:$0xf]
        %v1310 = vld [vmem:[%s184 + $0xbe8] sm:$0xf]
        %v1311 = vld [vmem:[%s184 + $0xbec] sm:$0xf]
        %v1312 = vld [vmem:[%s184 + $0xbf0] sm:$0xf]
        %v1313 = vld [vmem:[%s184 + $0xbf4] sm:$0xf]
        %v1314 = vld [vmem:[%s184 + $0xbf8] sm:$0xf]
        %v1315 = vld [vmem:[%s184 + $0xbfc] sm:$0xf]
        %v1316 = vld [vmem:[%s184 + $0xc00] sm:$0xf]
        %v1317 = vld [vmem:[%s184 + $0xc04] sm:$0xf]
        %v1318 = vld [vmem:[%s184 + $0xc08] sm:$0xf]
        %v1319 = vld [vmem:[%s184 + $0xc0c] sm:$0xf]
        %v1320 = vld [vmem:[%s184 + $0xc10] sm:$0xf]
        %v1321 = vld [vmem:[%s184 + $0xc14] sm:$0xf]
        %v1322 = vld [vmem:[%s184 + $0xc18] sm:$0xf]
        %v1323 = vld [vmem:[%s184 + $0xc1c] sm:$0xf]
        %v1324 = vld [vmem:[%s184 + $0xc20] sm:$0xf]
        %v1325 = vld [vmem:[%s184 + $0xc24] sm:$0xf]
        %v1326 = vld [vmem:[%s184 + $0xc28] sm:$0xf]
        %v1327 = vld [vmem:[%s184 + $0xc2c] sm:$0xf]
        %v1328 = vld [vmem:[%s184 + $0xc30] sm:$0xf]
        %v1329 = vld [vmem:[%s184 + $0xc34] sm:$0xf]
        %v1330 = vld [vmem:[%s184 + $0xc38] sm:$0xf]
        %v1331 = vld [vmem:[%s184 + $0xc3c] sm:$0xf]
        %v1332 = vld [vmem:[%s184 + $0xc40] sm:$0xf]
        %v1333 = vld [vmem:[%s184 + $0xc44] sm:$0xf]
        %v1334 = vld [vmem:[%s184 + $0xc48] sm:$0xf]
        %v1335 = vld [vmem:[%s184 + $0xc4c] sm:$0xf]
        %v1336 = vld [vmem:[%s184 + $0xc50] sm:$0xf]
        %v1337 = vld [vmem:[%s184 + $0xc54] sm:$0xf]
        %v1338 = vld [vmem:[%s184 + $0xc58] sm:$0xf]
        %v1339 = vld [vmem:[%s184 + $0xc5c] sm:$0xf]
        %v1340 = vld [vmem:[%s184 + $0xc60] sm:$0xf]
        %v1341 = vld [vmem:[%s184 + $0xc64] sm:$0xf]
        %v1342 = vld [vmem:[%s184 + $0xc68] sm:$0xf]
        %v1343 = vld [vmem:[%s184 + $0xc6c] sm:$0xf]
        %v1344 = vld [vmem:[%s184 + $0xc70] sm:$0xf]
        %v1345 = vld [vmem:[%s184 + $0xc74] sm:$0xf]
        %v1346 = vld [vmem:[%s184 + $0xc78] sm:$0xf]
        %v1347 = vld [vmem:[%s184 + $0xc7c] sm:$0xf]
        %v1348 = vld [vmem:[%s184 + $0xc80] sm:$0xf]
        %v1349 = vld [vmem:[%s184 + $0xc84] sm:$0xf]
        %v1350 = vld [vmem:[%s184 + $0xc88] sm:$0xf]
        %v1351 = vld [vmem:[%s184 + $0xc8c] sm:$0xf]
        %v1352 = vld [vmem:[%s184 + $0xc90] sm:$0xf]
        %v1353 = vld [vmem:[%s184 + $0xc94] sm:$0xf]
        %v1354 = vld [vmem:[%s184 + $0xc98] sm:$0xf]
        %v1355 = vld [vmem:[%s184 + $0xc9c] sm:$0xf]
        %v1356 = vld [vmem:[%s184 + $0xca0] sm:$0xf]
        %v1357 = vld [vmem:[%s184 + $0xca4] sm:$0xf]
        %v1358 = vld [vmem:[%s184 + $0xca8] sm:$0xf]
        %v1359 = vld [vmem:[%s184 + $0xcac] sm:$0xf]
        %v1360 = vld [vmem:[%s184 + $0xcb0] sm:$0xf]
        %v1361 = vld [vmem:[%s184 + $0xcb4] sm:$0xf]
        %v1362 = vld [vmem:[%s184 + $0xcb8] sm:$0xf]
        %v1363 = vld [vmem:[%s184 + $0xcbc] sm:$0xf]
        %v1364 = vld [vmem:[%s184 + $0xcc0] sm:$0xf]
        %v1365 = vld [vmem:[%s184 + $0xcc4] sm:$0xf]
        %v1366 = vld [vmem:[%s184 + $0xcc8] sm:$0xf]
        %v1367 = vld [vmem:[%s184 + $0xccc] sm:$0xf]
        %v1368 = vld [vmem:[%s184 + $0xcd0] sm:$0xf]
        %v1369 = vld [vmem:[%s184 + $0xcd4] sm:$0xf]
        %v1370 = vld [vmem:[%s184 + $0xcd8] sm:$0xf]
        %v1371 = vld [vmem:[%s184 + $0xcdc] sm:$0xf]
        %v1372 = vld [vmem:[%s184 + $0xce0] sm:$0xf]
        %v1373 = vld [vmem:[%s184 + $0xce4] sm:$0xf]
        %v1374 = vld [vmem:[%s184 + $0xce8] sm:$0xf]
        %v1375 = vld [vmem:[%s184 + $0xcec] sm:$0xf]
        %v1376 = vld [vmem:[%s184 + $0xcf0] sm:$0xf]
        %v1377 = vld [vmem:[%s184 + $0xcf4] sm:$0xf]
        %v1378 = vld [vmem:[%s184 + $0xcf8] sm:$0xf]
        %v1379 = vld [vmem:[%s184 + $0xcfc] sm:$0xf]
        %v1380 = vld [vmem:[%s184 + $0xd00] sm:$0xf]
        %v1381 = vld [vmem:[%s184 + $0xd04] sm:$0xf]
        %v1382 = vld [vmem:[%s184 + $0xd08] sm:$0xf]
        %v1383 = vld [vmem:[%s184 + $0xd0c] sm:$0xf]
        %v1384 = vld [vmem:[%s184 + $0xd10] sm:$0xf]
        %v1385 = vld [vmem:[%s184 + $0xd14] sm:$0xf]
        %v1386 = vld [vmem:[%s184 + $0xd18] sm:$0xf]
        %v1387 = vld [vmem:[%s184 + $0xd1c] sm:$0xf]
        %v1388 = vld [vmem:[%s184 + $0xd20] sm:$0xf]
        %v1389 = vld [vmem:[%s184 + $0xd24] sm:$0xf]
        %v1390 = vld [vmem:[%s184 + $0xd28] sm:$0xf]
        %v1391 = vld [vmem:[%s184 + $0xd2c] sm:$0xf]
        %v1392 = vld [vmem:[%s184 + $0xd30] sm:$0xf]
        %v1393 = vld [vmem:[%s184 + $0xd34] sm:$0xf]
        %v1394 = vld [vmem:[%s184 + $0xd38] sm:$0xf]
        %v1395 = vld [vmem:[%s184 + $0xd3c] sm:$0xf]
        %v1396 = vld [vmem:[%s184 + $0xd40] sm:$0xf]
        %v1397 = vld [vmem:[%s184 + $0xd44] sm:$0xf]
        %v1398 = vld [vmem:[%s184 + $0xd48] sm:$0xf]
        %v1399 = vld [vmem:[%s184 + $0xd4c] sm:$0xf]
        %v1400 = vld [vmem:[%s184 + $0xd50] sm:$0xf]
        %v1401 = vld [vmem:[%s184 + $0xd54] sm:$0xf]
        %v1402 = vld [vmem:[%s184 + $0xd58] sm:$0xf]
        %v1403 = vld [vmem:[%s184 + $0xd5c] sm:$0xf]
        %v1404 = vld [vmem:[%s184 + $0xd60] sm:$0xf]
        %v1405 = vld [vmem:[%s184 + $0xd64] sm:$0xf]
        %v1406 = vld [vmem:[%s184 + $0xd68] sm:$0xf]
        %v1407 = vld [vmem:[%s184 + $0xd6c] sm:$0xf]
        %v1408 = vld [vmem:[%s184 + $0xd70] sm:$0xf]
        %v1409 = vld [vmem:[%s184 + $0xd74] sm:$0xf]
        %v1410 = vld [vmem:[%s184 + $0xd78] sm:$0xf]
        %v1411 = vld [vmem:[%s184 + $0xd7c] sm:$0xf]
        %v1412 = vld [vmem:[%s184 + $0xd80] sm:$0xf]
        %v1413 = vld [vmem:[%s184 + $0xd84] sm:$0xf]
        %v1414 = vld [vmem:[%s184 + $0xd88] sm:$0xf]
        %v1415 = vld [vmem:[%s184 + $0xd8c] sm:$0xf]
        %v1416 = vld [vmem:[%s184 + $0xd90] sm:$0xf]
        %v1417 = vld [vmem:[%s184 + $0xd94] sm:$0xf]
        %v1418 = vld [vmem:[%s184 + $0xd98] sm:$0xf]
        %v1419 = vld [vmem:[%s184 + $0xd9c] sm:$0xf]
        %v1420 = vld [vmem:[%s184 + $0xda0] sm:$0xf]
        %v1421 = vld [vmem:[%s184 + $0xda4] sm:$0xf]
        %v1422 = vld [vmem:[%s184 + $0xda8] sm:$0xf]
        %v1423 = vld [vmem:[%s184 + $0xdac] sm:$0xf]
        %v1424 = vld [vmem:[%s184 + $0xdb0] sm:$0xf]
        %v1425 = vld [vmem:[%s184 + $0xdb4] sm:$0xf]
        %v1426 = vld [vmem:[%s184 + $0xdb8] sm:$0xf]
        %v1427 = vld [vmem:[%s184 + $0xdbc] sm:$0xf]
        %v1428 = vld [vmem:[%s184 + $0xdc0] sm:$0xf]
        %v1429 = vld [vmem:[%s184 + $0xdc4] sm:$0xf]
        %v1430 = vld [vmem:[%s184 + $0xdc8] sm:$0xf]
        %v1431 = vld [vmem:[%s184 + $0xdcc] sm:$0xf]
        %v1432 = vld [vmem:[%s184 + $0xdd0] sm:$0xf]
        %v1433 = vld [vmem:[%s184 + $0xdd4] sm:$0xf]
        %v1434 = vld [vmem:[%s184 + $0xdd8] sm:$0xf]
        %v1435 = vld [vmem:[%s184 + $0xddc] sm:$0xf]
        %v1436 = vld [vmem:[%s184 + $0xde0] sm:$0xf]
        %v1437 = vld [vmem:[%s184 + $0xde4] sm:$0xf]
        %v1438 = vld [vmem:[%s184 + $0xde8] sm:$0xf]
        %v1439 = vld [vmem:[%s184 + $0xdec] sm:$0xf]
        %v1440 = vld [vmem:[%s184 + $0xdf0] sm:$0xf]
        %v1441 = vld [vmem:[%s184 + $0xdf4] sm:$0xf]
        %v1442 = vld [vmem:[%s184 + $0xdf8] sm:$0xf]
        %v1443 = vld [vmem:[%s184 + $0xdfc] sm:$0xf]
        %v1444 = vld [vmem:[%s184 + $0xe00] sm:$0xf]
        %v1445 = vld [vmem:[%s184 + $0xe04] sm:$0xf]
        %v1446 = vld [vmem:[%s184 + $0xe08] sm:$0xf]
        %v1447 = vld [vmem:[%s184 + $0xe0c] sm:$0xf]
        %v1448 = vld [vmem:[%s184 + $0xe10] sm:$0xf]
        %v1449 = vld [vmem:[%s184 + $0xe14] sm:$0xf]
        %v1450 = vld [vmem:[%s184 + $0xe18] sm:$0xf]
        %v1451 = vld [vmem:[%s184 + $0xe1c] sm:$0xf]
        %v1452 = vld [vmem:[%s184 + $0xe20] sm:$0xf]
        %v1453 = vld [vmem:[%s184 + $0xe24] sm:$0xf]
        %v1454 = vld [vmem:[%s184 + $0xe28] sm:$0xf]
        %v1455 = vld [vmem:[%s184 + $0xe2c] sm:$0xf]
        %v1456 = vld [vmem:[%s184 + $0xe30] sm:$0xf]
        %v1457 = vld [vmem:[%s184 + $0xe34] sm:$0xf]
        %v1458 = vld [vmem:[%s184 + $0xe38] sm:$0xf]
        %v1459 = vld [vmem:[%s184 + $0xe3c] sm:$0xf]
        %v1460 = vld [vmem:[%s184 + $0xe40] sm:$0xf]
        %v1461 = vld [vmem:[%s184 + $0xe44] sm:$0xf]
        %v1462 = vld [vmem:[%s184 + $0xe48] sm:$0xf]
        %v1463 = vld [vmem:[%s184 + $0xe4c] sm:$0xf]
        %v1464 = vld [vmem:[%s184 + $0xe50] sm:$0xf]
        %v1465 = vld [vmem:[%s184 + $0xe54] sm:$0xf]
        %v1466 = vld [vmem:[%s184 + $0xe58] sm:$0xf]
        %v1467 = vld [vmem:[%s184 + $0xe5c] sm:$0xf]
        %v1468 = vld [vmem:[%s184 + $0xe60] sm:$0xf]
        %v1469 = vld [vmem:[%s184 + $0xe64] sm:$0xf]
        %v1470 = vld [vmem:[%s184 + $0xe68] sm:$0xf]
        %v1471 = vld [vmem:[%s184 + $0xe6c] sm:$0xf]
        %v1472 = vld [vmem:[%s184 + $0xe70] sm:$0xf]
        %v1473 = vld [vmem:[%s184 + $0xe74] sm:$0xf]
        %v1474 = vld [vmem:[%s184 + $0xe78] sm:$0xf]
        %v1475 = vld [vmem:[%s184 + $0xe7c] sm:$0xf]
        %v1476 = vld [vmem:[%s184 + $0xe80] sm:$0xf]
        %v1477 = vld [vmem:[%s184 + $0xe84] sm:$0xf]
        %v1478 = vld [vmem:[%s184 + $0xe88] sm:$0xf]
        %v1479 = vld [vmem:[%s184 + $0xe8c] sm:$0xf]
        %v1480 = vld [vmem:[%s184 + $0xe90] sm:$0xf]
        %v1481 = vld [vmem:[%s184 + $0xe94] sm:$0xf]
        %v1482 = vld [vmem:[%s184 + $0xe98] sm:$0xf]
        %v1483 = vld [vmem:[%s184 + $0xe9c] sm:$0xf]
        %v1484 = vld [vmem:[%s184 + $0xea0] sm:$0xf]
        %v1485 = vld [vmem:[%s184 + $0xea4] sm:$0xf]
        %v1486 = vld [vmem:[%s184 + $0xea8] sm:$0xf]
        %v1487 = vld [vmem:[%s184 + $0xeac] sm:$0xf]
        %v1488 = vld [vmem:[%s184 + $0xeb0] sm:$0xf]
        %v1489 = vld [vmem:[%s184 + $0xeb4] sm:$0xf]
        %v1490 = vld [vmem:[%s184 + $0xeb8] sm:$0xf]
        %v1491 = vld [vmem:[%s184 + $0xebc] sm:$0xf]
        %v1492 = vld [vmem:[%s184 + $0xec0] sm:$0xf]
        %v1493 = vld [vmem:[%s184 + $0xec4] sm:$0xf]
        %v1494 = vld [vmem:[%s184 + $0xec8] sm:$0xf]
        %v1495 = vld [vmem:[%s184 + $0xecc] sm:$0xf]
        %v1496 = vld [vmem:[%s184 + $0xed0] sm:$0xf]
        %v1497 = vld [vmem:[%s184 + $0xed4] sm:$0xf]
        %v1498 = vld [vmem:[%s184 + $0xed8] sm:$0xf]
        %v1499 = vld [vmem:[%s184 + $0xedc] sm:$0xf]
        %v1500 = vld [vmem:[%s184 + $0xee0] sm:$0xf]
        %v1501 = vld [vmem:[%s184 + $0xee4] sm:$0xf]
        %v1502 = vld [vmem:[%s184 + $0xee8] sm:$0xf]
        %v1503 = vld [vmem:[%s184 + $0xeec] sm:$0xf]
        %v1504 = vld [vmem:[%s184 + $0xef0] sm:$0xf]
        %v1505 = vld [vmem:[%s184 + $0xef4] sm:$0xf]
        %v1506 = vld [vmem:[%s184 + $0xef8] sm:$0xf]
        %v1507 = vld [vmem:[%s184 + $0xefc] sm:$0xf]
        %v1508 = vld [vmem:[%s184 + $0xf00] sm:$0xf]
        %v1509 = vld [vmem:[%s184 + $0xf04] sm:$0xf]
        %v1510 = vld [vmem:[%s184 + $0xf08] sm:$0xf]
        %v1511 = vld [vmem:[%s184 + $0xf0c] sm:$0xf]
        %v1512 = vld [vmem:[%s184 + $0xf10] sm:$0xf]
        %v1513 = vld [vmem:[%s184 + $0xf14] sm:$0xf]
        %v1514 = vld [vmem:[%s184 + $0xf18] sm:$0xf]
        %v1515 = vld [vmem:[%s184 + $0xf1c] sm:$0xf]
        %v1516 = vld [vmem:[%s184 + $0xf20] sm:$0xf]
        %v1517 = vld [vmem:[%s184 + $0xf24] sm:$0xf]
        %v1518 = vld [vmem:[%s184 + $0xf28] sm:$0xf]
        %v1519 = vld [vmem:[%s184 + $0xf2c] sm:$0xf]
        %v1520 = vld [vmem:[%s184 + $0xf30] sm:$0xf]
        %v1521 = vld [vmem:[%s184 + $0xf34] sm:$0xf]
        %v1522 = vld [vmem:[%s184 + $0xf38] sm:$0xf]
        %v1523 = vld [vmem:[%s184 + $0xf3c] sm:$0xf]
        %v1524 = vld [vmem:[%s184 + $0xf40] sm:$0xf]
        %v1525 = vld [vmem:[%s184 + $0xf44] sm:$0xf]
        %v1526 = vld [vmem:[%s184 + $0xf48] sm:$0xf]
        %v1527 = vld [vmem:[%s184 + $0xf4c] sm:$0xf]
        %v1528 = vld [vmem:[%s184 + $0xf50] sm:$0xf]
        %v1529 = vld [vmem:[%s184 + $0xf54] sm:$0xf]
        %v1530 = vld [vmem:[%s184 + $0xf58] sm:$0xf]
        %v1531 = vld [vmem:[%s184 + $0xf5c] sm:$0xf]
        %v1532 = vld [vmem:[%s184 + $0xf60] sm:$0xf]
        %v1533 = vld [vmem:[%s184 + $0xf64] sm:$0xf]
        %v1534 = vld [vmem:[%s184 + $0xf68] sm:$0xf]
        %v1535 = vld [vmem:[%s184 + $0xf6c] sm:$0xf]
        %v1536 = vld [vmem:[%s184 + $0xf70] sm:$0xf]
        %v1537 = vld [vmem:[%s184 + $0xf74] sm:$0xf]
        %v1538 = vld [vmem:[%s184 + $0xf78] sm:$0xf]
        %v1539 = vld [vmem:[%s184 + $0xf7c] sm:$0xf]
        %v1540 = vld [vmem:[%s184 + $0xf80] sm:$0xf]
        %v1541 = vld [vmem:[%s184 + $0xf84] sm:$0xf]
        %v1542 = vld [vmem:[%s184 + $0xf88] sm:$0xf]
        %v1543 = vld [vmem:[%s184 + $0xf8c] sm:$0xf]
        %v1544 = vld [vmem:[%s184 + $0xf90] sm:$0xf]
        %v1545 = vld [vmem:[%s184 + $0xf94] sm:$0xf]
        %v1546 = vld [vmem:[%s184 + $0xf98] sm:$0xf]
        %v1547 = vld [vmem:[%s184 + $0xf9c] sm:$0xf]
        %v1548 = vld [vmem:[%s184 + $0xfa0] sm:$0xf]
        %v1549 = vld [vmem:[%s184 + $0xfa4] sm:$0xf]
        %v1550 = vld [vmem:[%s184 + $0xfa8] sm:$0xf]
        %v1551 = vld [vmem:[%s184 + $0xfac] sm:$0xf]
        %v1552 = vld [vmem:[%s184 + $0xfb0] sm:$0xf]
        %v1553 = vld [vmem:[%s184 + $0xfb4] sm:$0xf]
        %v1554 = vld [vmem:[%s184 + $0xfb8] sm:$0xf]
        %v1555 = vld [vmem:[%s184 + $0xfbc] sm:$0xf]
        %v1556 = vld [vmem:[%s184 + $0xfc0] sm:$0xf]
        %v1557 = vld [vmem:[%s184 + $0xfc4] sm:$0xf]
        %v1558 = vld [vmem:[%s184 + $0xfc8] sm:$0xf]
        %v1559 = vld [vmem:[%s184 + $0xfcc] sm:$0xf]
        %v1560 = vld [vmem:[%s184 + $0xfd0] sm:$0xf]
        %v1561 = vld [vmem:[%s184 + $0xfd4] sm:$0xf]
        %v1562 = vld [vmem:[%s184 + $0xfd8] sm:$0xf]
        %v1563 = vld [vmem:[%s184 + $0xfdc] sm:$0xf]
        %v1564 = vld [vmem:[%s184 + $0xfe0] sm:$0xf]
        %v1565 = vld [vmem:[%s184 + $0xfe4] sm:$0xf]
        %v1566 = vld [vmem:[%s184 + $0xfe8] sm:$0xf]
        %v1567 = vld [vmem:[%s184 + $0xfec] sm:$0xf]
        %v1568 = vld [vmem:[%s184 + $0xff0] sm:$0xf]
        %v1569 = vld [vmem:[%s184 + $0xff4] sm:$0xf]
        %v1570 = vld [vmem:[%s184 + $0xff8] sm:$0xf]
        %v1571 = vld [vmem:[%s184 + $0xffc] sm:$0xf]
        %v1572 = vld [vmem:[%s184 + $0x1000] sm:$0xf]
        %v1573 = vld [vmem:[%s184 + $0x1004] sm:$0xf]
        %v1574 = vld [vmem:[%s184 + $0x1008] sm:$0xf]
        %v1575 = vld [vmem:[%s184 + $0x100c] sm:$0xf]
        %v1576 = vld [vmem:[%s184 + $0x1010] sm:$0xf]
        %v1577 = vld [vmem:[%s184 + $0x1014] sm:$0xf]
        %v1578 = vld [vmem:[%s184 + $0x1018] sm:$0xf]
        %v1579 = vld [vmem:[%s184 + $0x101c] sm:$0xf]
        %v1580 = vld [vmem:[%s184 + $0x1020] sm:$0xf]
        %v1581 = vld [vmem:[%s184 + $0x1024] sm:$0xf]
        %v1582 = vld [vmem:[%s184 + $0x1028] sm:$0xf]
        %v1583 = vld [vmem:[%s184 + $0x102c] sm:$0xf]
        %v1584 = vld [vmem:[%s184 + $0x1030] sm:$0xf]
        %v1585 = vld [vmem:[%s184 + $0x1034] sm:$0xf]
        %v1586 = vld [vmem:[%s184 + $0x1038] sm:$0xf]
        %v1587 = vld [vmem:[%s184 + $0x103c] sm:$0xf]
        %v1588 = vld [vmem:[%s184 + $0x1040] sm:$0xf]
        %v1589 = vld [vmem:[%s184 + $0x1044] sm:$0xf]
        %v1590 = vld [vmem:[%s184 + $0x1048] sm:$0xf]
        %v1591 = vld [vmem:[%s184 + $0x104c] sm:$0xf]
        %v1592 = vld [vmem:[%s184 + $0x1050] sm:$0xf]
        %v1593 = vld [vmem:[%s184 + $0x1054] sm:$0xf]
        %v1594 = vld [vmem:[%s184 + $0x1058] sm:$0xf]
        %v1595 = vld [vmem:[%s184 + $0x105c] sm:$0xf]
        %v1596 = vld [vmem:[%s184 + $0x1060] sm:$0xf]
        %v1597 = vld [vmem:[%s184 + $0x1064] sm:$0xf]
        %v1598 = vld [vmem:[%s184 + $0x1068] sm:$0xf]
        %v1599 = vld [vmem:[%s184 + $0x106c] sm:$0xf]
        %v1600 = vld [vmem:[%s184 + $0x1070] sm:$0xf]
        %v1601 = vld [vmem:[%s184 + $0x1074] sm:$0xf]
        %v1602 = vld [vmem:[%s184 + $0x1078] sm:$0xf]
        %v1603 = vld [vmem:[%s184 + $0x107c] sm:$0xf]
        %v1604 = vld [vmem:[%s184 + $0x1080] sm:$0xf]
        %v1605 = vld [vmem:[%s184 + $0x1084] sm:$0xf]
        %v1606 = vld [vmem:[%s184 + $0x1088] sm:$0xf]
        %v1607 = vld [vmem:[%s184 + $0x108c] sm:$0xf]
        %v1608 = vld [vmem:[%s184 + $0x1090] sm:$0xf]
        %v1609 = vld [vmem:[%s184 + $0x1094] sm:$0xf]
        %v1610 = vld [vmem:[%s184 + $0x1098] sm:$0xf]
        %v1611 = vld [vmem:[%s184 + $0x109c] sm:$0xf]
        %v1612 = vld [vmem:[%s184 + $0x10a0] sm:$0xf]
        %v1613 = vld [vmem:[%s184 + $0x10a4] sm:$0xf]
        %v1614 = vld [vmem:[%s184 + $0x10a8] sm:$0xf]
        %v1615 = vld [vmem:[%s184 + $0x10ac] sm:$0xf]
        %v1616 = vld [vmem:[%s184 + $0x10b0] sm:$0xf]
        %v1617 = vld [vmem:[%s184 + $0x10b4] sm:$0xf]
        %v1618 = vld [vmem:[%s184 + $0x10b8] sm:$0xf]
        %v1619 = vld [vmem:[%s184 + $0x10bc] sm:$0xf]
        %v1620 = vld [vmem:[%s184 + $0x10c0] sm:$0xf]
        %v1621 = vld [vmem:[%s184 + $0x10c4] sm:$0xf]
        %v1622 = vld [vmem:[%s184 + $0x10c8] sm:$0xf]
        %v1623 = vld [vmem:[%s184 + $0x10cc] sm:$0xf]
        %v1624 = vld [vmem:[%s184 + $0x10d0] sm:$0xf]
        %v1625 = vld [vmem:[%s184 + $0x10d4] sm:$0xf]
        %v1626 = vld [vmem:[%s184 + $0x10d8] sm:$0xf]
        %v1627 = vld [vmem:[%s184 + $0x10dc] sm:$0xf]
        %v1628 = vld [vmem:[%s184 + $0x10e0] sm:$0xf]
        %v1629 = vld [vmem:[%s184 + $0x10e4] sm:$0xf]
        %v1630 = vld [vmem:[%s184 + $0x10e8] sm:$0xf]
        %v1631 = vld [vmem:[%s184 + $0x10ec] sm:$0xf]
        %v1632 = vld [vmem:[%s184 + $0x10f0] sm:$0xf]
        %v1633 = vld [vmem:[%s184 + $0x10f4] sm:$0xf]
        %v1634 = vld [vmem:[%s184 + $0x10f8] sm:$0xf]
        %v1635 = vld [vmem:[%s184 + $0x10fc] sm:$0xf]
        %v1636 = vld [vmem:[%s184 + $0x1100] sm:$0xf]
        %v1637 = vld [vmem:[%s184 + $0x1104] sm:$0xf]
        %v1638 = vld [vmem:[%s184 + $0x1108] sm:$0xf]
        %v1639 = vld [vmem:[%s184 + $0x110c] sm:$0xf]
        %v1640 = vld [vmem:[%s184 + $0x1110] sm:$0xf]
        %v1641 = vld [vmem:[%s184 + $0x1114] sm:$0xf]
        %v1642 = vld [vmem:[%s184 + $0x1118] sm:$0xf]
        %v1643 = vld [vmem:[%s184 + $0x111c] sm:$0xf]
        %v1644 = vld [vmem:[%s184 + $0x1120] sm:$0xf]
        %v1645 = vld [vmem:[%s184 + $0x1124] sm:$0xf]
        %v1646 = vld [vmem:[%s184 + $0x1128] sm:$0xf]
        %v1647 = vld [vmem:[%s184 + $0x112c] sm:$0xf]
        %v1648 = vld [vmem:[%s184 + $0x1130] sm:$0xf]
        %v1649 = vld [vmem:[%s184 + $0x1134] sm:$0xf]
        %v1650 = vld [vmem:[%s184 + $0x1138] sm:$0xf]
        %v1651 = vld [vmem:[%s184 + $0x113c] sm:$0xf]
        %v1652 = vld [vmem:[%s184 + $0x1140] sm:$0xf]
        %v1653 = vld [vmem:[%s184 + $0x1144] sm:$0xf]
        %v1654 = vld [vmem:[%s184 + $0x1148] sm:$0xf]
        %v1655 = vld [vmem:[%s184 + $0x114c] sm:$0xf]
        %v1656 = vld [vmem:[%s184 + $0x1150] sm:$0xf]
        %v1657 = vld [vmem:[%s184 + $0x1154] sm:$0xf]
        %v1658 = vld [vmem:[%s184 + $0x1158] sm:$0xf]
        %v1659 = vld [vmem:[%s184 + $0x115c] sm:$0xf]
        %v1660 = vld [vmem:[%s184 + $0x1160] sm:$0xf]
        %v1661 = vld [vmem:[%s184 + $0x1164] sm:$0xf]
        %v1662 = vld [vmem:[%s184 + $0x1168] sm:$0xf]
        %v1663 = vld [vmem:[%s184 + $0x116c] sm:$0xf]
        %v1664 = vld [vmem:[%s184 + $0x1170] sm:$0xf]
        %v1665 = vld [vmem:[%s184 + $0x1174] sm:$0xf]
        %v1666 = vld [vmem:[%s184 + $0x1178] sm:$0xf]
        %v1667 = vld [vmem:[%s184 + $0x117c] sm:$0xf]
        %v1668 = vld [vmem:[%s184 + $0x1180] sm:$0xf]
        %v1669 = vld [vmem:[%s184 + $0x1184] sm:$0xf]
        %v1670 = vld [vmem:[%s184 + $0x1188] sm:$0xf]
        %v1671 = vld [vmem:[%s184 + $0x118c] sm:$0xf]
        %v1672 = vld [vmem:[%s184 + $0x1190] sm:$0xf]
        %v1673 = vld [vmem:[%s184 + $0x1194] sm:$0xf]
        %v1674 = vld [vmem:[%s184 + $0x1198] sm:$0xf]
        %v1675 = vld [vmem:[%s184 + $0x119c] sm:$0xf]
        %v1676 = vld [vmem:[%s184 + $0x11a0] sm:$0xf]
        %v1677 = vld [vmem:[%s184 + $0x11a4] sm:$0xf]
        %v1678 = vld [vmem:[%s184 + $0x11a8] sm:$0xf]
        %v1679 = vld [vmem:[%s184 + $0x11ac] sm:$0xf]
        %v1680 = vld [vmem:[%s184 + $0x11b0] sm:$0xf]
        %v1681 = vld [vmem:[%s184 + $0x11b4] sm:$0xf]
        %v1682 = vld [vmem:[%s184 + $0x11b8] sm:$0xf]
        %v1683 = vld [vmem:[%s184 + $0x11bc] sm:$0xf]
        %v1684 = vld [vmem:[%s184 + $0x11c0] sm:$0xf]
        %v1685 = vld [vmem:[%s184 + $0x11c4] sm:$0xf]
        %v1686 = vld [vmem:[%s184 + $0x11c8] sm:$0xf]
        %v1687 = vld [vmem:[%s184 + $0x11cc] sm:$0xf]
        %v1688 = vld [vmem:[%s184 + $0x11d0] sm:$0xf]
        %v1689 = vld [vmem:[%s184 + $0x11d4] sm:$0xf]
        %v1690 = vld [vmem:[%s184 + $0x11d8] sm:$0xf]
        %v1691 = vld [vmem:[%s184 + $0x11dc] sm:$0xf]
        %v1692 = vld [vmem:[%s184 + $0x11e0] sm:$0xf]
        %v1693 = vld [vmem:[%s184 + $0x11e4] sm:$0xf]
        %v1694 = vld [vmem:[%s184 + $0x11e8] sm:$0xf]
        %v1695 = vld [vmem:[%s184 + $0x11ec] sm:$0xf]
        %v1696 = vld [vmem:[%s184 + $0x11f0] sm:$0xf]
        %v1697 = vld [vmem:[%s184 + $0x11f4] sm:$0xf]
        %v1698 = vld [vmem:[%s184 + $0x11f8] sm:$0xf]
        %v1699 = vld [vmem:[%s184 + $0x11fc] sm:$0xf]
        %v1700 = vld [vmem:[%s184 + $0x1200] sm:$0xf]
        %v1701 = vld [vmem:[%s184 + $0x1204] sm:$0xf]
        %v1702 = vld [vmem:[%s184 + $0x1208] sm:$0xf]
        %v1703 = vld [vmem:[%s184 + $0x120c] sm:$0xf]
        %v1704 = vld [vmem:[%s184 + $0x1210] sm:$0xf]
        %v1705 = vld [vmem:[%s184 + $0x1214] sm:$0xf]
        %v1706 = vld [vmem:[%s184 + $0x1218] sm:$0xf]
        %v1707 = vld [vmem:[%s184 + $0x121c] sm:$0xf]
        %v1708 = vld [vmem:[%s184 + $0x1220] sm:$0xf]
        %v1709 = vld [vmem:[%s184 + $0x1224] sm:$0xf]
        %v1710 = vld [vmem:[%s184 + $0x1228] sm:$0xf]
        %v1711 = vld [vmem:[%s184 + $0x122c] sm:$0xf]
        %v1712 = vld [vmem:[%s184 + $0x1230] sm:$0xf]
        %v1713 = vld [vmem:[%s184 + $0x1234] sm:$0xf]
        %v1714 = vld [vmem:[%s184 + $0x1238] sm:$0xf]
        %v1715 = vld [vmem:[%s184 + $0x123c] sm:$0xf]
        %v1716 = vld [vmem:[%s184 + $0x1240] sm:$0xf]
        %v1717 = vld [vmem:[%s184 + $0x1244] sm:$0xf]
        %v1718 = vld [vmem:[%s184 + $0x1248] sm:$0xf]
        %v1719 = vld [vmem:[%s184 + $0x124c] sm:$0xf]
        %v1720 = vld [vmem:[%s184 + $0x1250] sm:$0xf]
        %v1721 = vld [vmem:[%s184 + $0x1254] sm:$0xf]
        %v1722 = vld [vmem:[%s184 + $0x1258] sm:$0xf]
        %v1723 = vld [vmem:[%s184 + $0x125c] sm:$0xf]
        %v1724 = vld [vmem:[%s184 + $0x1260] sm:$0xf]
        %v1725 = vld [vmem:[%s184 + $0x1264] sm:$0xf]
        %v1726 = vld [vmem:[%s184 + $0x1268] sm:$0xf]
        %v1727 = vld [vmem:[%s184 + $0x126c] sm:$0xf]
        %v1728 = vld [vmem:[%s184 + $0x1270] sm:$0xf]
        %v1729 = vld [vmem:[%s184 + $0x1274] sm:$0xf]
        %v1730 = vld [vmem:[%s184 + $0x1278] sm:$0xf]
        %v1731 = vld [vmem:[%s184 + $0x127c] sm:$0xf]
        %v1732 = vld [vmem:[%s184 + $0x1280] sm:$0xf]
        %v1733 = vld [vmem:[%s184 + $0x1284] sm:$0xf]
        %v1734 = vld [vmem:[%s184 + $0x1288] sm:$0xf]
        %v1735 = vld [vmem:[%s184 + $0x128c] sm:$0xf]
        %v1736 = vld [vmem:[%s184 + $0x1290] sm:$0xf]
        %v1737 = vld [vmem:[%s184 + $0x1294] sm:$0xf]
        %v1738 = vld [vmem:[%s184 + $0x1298] sm:$0xf]
        %v1739 = vld [vmem:[%s184 + $0x129c] sm:$0xf]
        %v1740 = vld [vmem:[%s184 + $0x12a0] sm:$0xf]
        %v1741 = vld [vmem:[%s184 + $0x12a4] sm:$0xf]
        %v1742 = vld [vmem:[%s184 + $0x12a8] sm:$0xf]
        %v1743 = vld [vmem:[%s184 + $0x12ac] sm:$0xf]
        %v1744 = vld [vmem:[%s184 + $0x12b0] sm:$0xf]
        %v1745 = vld [vmem:[%s184 + $0x12b4] sm:$0xf]
        %v1746 = vld [vmem:[%s184 + $0x12b8] sm:$0xf]
        %v1747 = vld [vmem:[%s184 + $0x12bc] sm:$0xf]
        %v1748 = vld [vmem:[%s184 + $0x12c0] sm:$0xf]
        %v1749 = vld [vmem:[%s184 + $0x12c4] sm:$0xf]
        %v1750 = vld [vmem:[%s184 + $0x12c8] sm:$0xf]
        %v1751 = vld [vmem:[%s184 + $0x12cc] sm:$0xf]
        %v1752 = vld [vmem:[%s184 + $0x12d0] sm:$0xf]
        %v1753 = vld [vmem:[%s184 + $0x12d4] sm:$0xf]
        %v1754 = vld [vmem:[%s184 + $0x12d8] sm:$0xf]
        %v1755 = vld [vmem:[%s184 + $0x12dc] sm:$0xf]
        %v1756 = vld [vmem:[%s184 + $0x12e0] sm:$0xf]
        %v1757 = vld [vmem:[%s184 + $0x12e4] sm:$0xf]
        %v1758 = vld [vmem:[%s184 + $0x12e8] sm:$0xf]
        %v1759 = vld [vmem:[%s184 + $0x12ec] sm:$0xf]
        %v1760 = vld [vmem:[%s184 + $0x12f0] sm:$0xf]
        %v1761 = vld [vmem:[%s184 + $0x12f4] sm:$0xf]
        %v1762 = vld [vmem:[%s184 + $0x12f8] sm:$0xf]
        %v1763 = vld [vmem:[%s184 + $0x12fc] sm:$0xf]
        %v1764 = vld [vmem:[%s184 + $0x1300] sm:$0xf]
        %v1765 = vld [vmem:[%s184 + $0x1304] sm:$0xf]
        %v1766 = vld [vmem:[%s184 + $0x1308] sm:$0xf]
        %v1767 = vld [vmem:[%s184 + $0x130c] sm:$0xf]
        %v1768 = vld [vmem:[%s184 + $0x1310] sm:$0xf]
        %v1769 = vld [vmem:[%s184 + $0x1314] sm:$0xf]
        %v1770 = vld [vmem:[%s184 + $0x1318] sm:$0xf]
        %v1771 = vld [vmem:[%s184 + $0x131c] sm:$0xf]
        %v1772 = vld [vmem:[%s184 + $0x1320] sm:$0xf]
        %v1773 = vld [vmem:[%s184 + $0x1324] sm:$0xf]
        %v1774 = vld [vmem:[%s184 + $0x1328] sm:$0xf]
        %v1775 = vld [vmem:[%s184 + $0x132c] sm:$0xf]
        %v1776 = vld [vmem:[%s184 + $0x1330] sm:$0xf]
        %v1777 = vld [vmem:[%s184 + $0x1334] sm:$0xf]
        %v1778 = vld [vmem:[%s184 + $0x1338] sm:$0xf]
        %v1779 = vld [vmem:[%s184 + $0x133c] sm:$0xf]
        %v1780 = vld [vmem:[%s184 + $0x1340] sm:$0xf]
        %v1781 = vld [vmem:[%s184 + $0x1344] sm:$0xf]
        %v1782 = vld [vmem:[%s184 + $0x1348] sm:$0xf]
        %v1783 = vld [vmem:[%s184 + $0x134c] sm:$0xf]
        %v1784 = vld [vmem:[%s184 + $0x1350] sm:$0xf]
        %v1785 = vld [vmem:[%s184 + $0x1354] sm:$0xf]
        %v1786 = vld [vmem:[%s184 + $0x1358] sm:$0xf]
        %v1787 = vld [vmem:[%s184 + $0x135c] sm:$0xf]
        %v1788 = vld [vmem:[%s184 + $0x1360] sm:$0xf]
        %v1789 = vld [vmem:[%s184 + $0x1364] sm:$0xf]
        %v1790 = vld [vmem:[%s184 + $0x1368] sm:$0xf]
        %v1791 = vld [vmem:[%s184 + $0x136c] sm:$0xf]
        %v1792 = vld [vmem:[%s184 + $0x1370] sm:$0xf]
        %v1793 = vld [vmem:[%s184 + $0x1374] sm:$0xf]
        %v1794 = vld [vmem:[%s184 + $0x1378] sm:$0xf]
        %v1795 = vld [vmem:[%s184 + $0x137c] sm:$0xf]
        %v1796 = vld [vmem:[%s184 + $0x1380] sm:$0xf]
        %v1797 = vld [vmem:[%s184 + $0x1384] sm:$0xf]
        %v1798 = vld [vmem:[%s184 + $0x1388] sm:$0xf]
        %v1799 = vld [vmem:[%s184 + $0x138c] sm:$0xf]
        %v1800 = vld [vmem:[%s184 + $0x1390] sm:$0xf]
        %v1801 = vld [vmem:[%s184 + $0x1394] sm:$0xf]
        %v1802 = vld [vmem:[%s184 + $0x1398] sm:$0xf]
        %v1803 = vld [vmem:[%s184 + $0x139c] sm:$0xf]
        %v1804 = vld [vmem:[%s184 + $0x13a0] sm:$0xf]
        %v1805 = vld [vmem:[%s184 + $0x13a4] sm:$0xf]
        %v1806 = vld [vmem:[%s184 + $0x13a8] sm:$0xf]
        %v1807 = vld [vmem:[%s184 + $0x13ac] sm:$0xf]
        %v1808 = vld [vmem:[%s184 + $0x13b0] sm:$0xf]
        %v1809 = vld [vmem:[%s184 + $0x13b4] sm:$0xf]
        %v1810 = vld [vmem:[%s184 + $0x13b8] sm:$0xf]
        %v1811 = vld [vmem:[%s184 + $0x13bc] sm:$0xf]
        %v1812 = vld [vmem:[%s184 + $0x13c0] sm:$0xf]
        %v1813 = vld [vmem:[%s184 + $0x13c4] sm:$0xf]
        %v1814 = vld [vmem:[%s184 + $0x13c8] sm:$0xf]
        %v1815 = vld [vmem:[%s184 + $0x13cc] sm:$0xf]
        %v1816 = vld [vmem:[%s184 + $0x13d0] sm:$0xf]
        %v1817 = vld [vmem:[%s184 + $0x13d4] sm:$0xf]
        %v1818 = vld [vmem:[%s184 + $0x13d8] sm:$0xf]
        %v1819 = vld [vmem:[%s184 + $0x13dc] sm:$0xf]
        %v1820 = vld [vmem:[%s184 + $0x13e0] sm:$0xf]
        %v1821 = vld [vmem:[%s184 + $0x13e4] sm:$0xf]
        %v1822 = vld [vmem:[%s184 + $0x13e8] sm:$0xf]
        %v1823 = vld [vmem:[%s184 + $0x13ec] sm:$0xf]
        %v1824 = vld [vmem:[%s184 + $0x13f0] sm:$0xf]
        %v1825 = vld [vmem:[%s184 + $0x13f4] sm:$0xf]
        %v1826 = vld [vmem:[%s184 + $0x13f8] sm:$0xf]
        %v1827 = vld [vmem:[%s184 + $0x13fc] sm:$0xf]
        %v1828 = vld [vmem:[%s184 + $0x1400] sm:$0xf]
        %v1829 = vld [vmem:[%s184 + $0x1404] sm:$0xf]
        %v1830 = vld [vmem:[%s184 + $0x1408] sm:$0xf]
        %v1831 = vld [vmem:[%s184 + $0x140c] sm:$0xf]
        %v1832 = vld [vmem:[%s184 + $0x1410] sm:$0xf]
        %v1833 = vld [vmem:[%s184 + $0x1414] sm:$0xf]
        %v1834 = vld [vmem:[%s184 + $0x1418] sm:$0xf]
        %v1835 = vld [vmem:[%s184 + $0x141c] sm:$0xf]
        %v1836 = vld [vmem:[%s184 + $0x1420] sm:$0xf]
        %v1837 = vld [vmem:[%s184 + $0x1424] sm:$0xf]
        %v1838 = vld [vmem:[%s184 + $0x1428] sm:$0xf]
        %v1839 = vld [vmem:[%s184 + $0x142c] sm:$0xf]
        %v1840 = vld [vmem:[%s184 + $0x1430] sm:$0xf]
        %v1841 = vld [vmem:[%s184 + $0x1434] sm:$0xf]
        %v1842 = vld [vmem:[%s184 + $0x1438] sm:$0xf]
        %v1843 = vld [vmem:[%s184 + $0x143c] sm:$0xf]
        %v1844 = vld [vmem:[%s184 + $0x1440] sm:$0xf]
        %v1845 = vld [vmem:[%s184 + $0x1444] sm:$0xf]
        %v1846 = vld [vmem:[%s184 + $0x1448] sm:$0xf]
        %v1847 = vld [vmem:[%s184 + $0x144c] sm:$0xf]
        %v1848 = vld [vmem:[%s184 + $0x1450] sm:$0xf]
        %v1849 = vld [vmem:[%s184 + $0x1454] sm:$0xf]
        %v1850 = vld [vmem:[%s184 + $0x1458] sm:$0xf]
        %v1851 = vld [vmem:[%s184 + $0x145c] sm:$0xf]
        %v1852 = vld [vmem:[%s184 + $0x1460] sm:$0xf]
        %v1853 = vld [vmem:[%s184 + $0x1464] sm:$0xf]
        %v1854 = vld [vmem:[%s184 + $0x1468] sm:$0xf]
        %v1855 = vld [vmem:[%s184 + $0x146c] sm:$0xf]
        %v1856 = vld [vmem:[%s184 + $0x1470] sm:$0xf]
        %v1857 = vld [vmem:[%s184 + $0x1474] sm:$0xf]
        %v1858 = vld [vmem:[%s184 + $0x1478] sm:$0xf]
        %v1859 = vld [vmem:[%s184 + $0x147c] sm:$0xf]
        %v1860 = vld [vmem:[%s184 + $0x1480] sm:$0xf]
        %v1861 = vld [vmem:[%s184 + $0x1484] sm:$0xf]
        %v1862 = vld [vmem:[%s184 + $0x1488] sm:$0xf]
        %v1863 = vld [vmem:[%s184 + $0x148c] sm:$0xf]
        %v1864 = vld [vmem:[%s184 + $0x1490] sm:$0xf]
        %v1865 = vld [vmem:[%s184 + $0x1494] sm:$0xf]
        %v1866 = vld [vmem:[%s184 + $0x1498] sm:$0xf]
        %v1867 = vld [vmem:[%s184 + $0x149c] sm:$0xf]
        %v1868 = vld [vmem:[%s184 + $0x14a0] sm:$0xf]
        %v1869 = vld [vmem:[%s184 + $0x14a4] sm:$0xf]
        %v1870 = vld [vmem:[%s184 + $0x14a8] sm:$0xf]
        %v1871 = vld [vmem:[%s184 + $0x14ac] sm:$0xf]
        %v1872 = vld [vmem:[%s184 + $0x14b0] sm:$0xf]
        %v1873 = vld [vmem:[%s184 + $0x14b4] sm:$0xf]
        %v1874 = vld [vmem:[%s184 + $0x14b8] sm:$0xf]
        %v1875 = vld [vmem:[%s184 + $0x14bc] sm:$0xf]
        %v1876 = vld [vmem:[%s184 + $0x14c0] sm:$0xf]
        %v1877 = vld [vmem:[%s184 + $0x14c4] sm:$0xf]
        %v1878 = vld [vmem:[%s184 + $0x14c8] sm:$0xf]
        %v1879 = vld [vmem:[%s184 + $0x14cc] sm:$0xf]
        %v1880 = vld [vmem:[%s184 + $0x14d0] sm:$0xf]
        %v1881 = vld [vmem:[%s184 + $0x14d4] sm:$0xf]
        %v1882 = vld [vmem:[%s184 + $0x14d8] sm:$0xf]
        %v1883 = vld [vmem:[%s184 + $0x14dc] sm:$0xf]
        %v1884 = vld [vmem:[%s184 + $0x14e0] sm:$0xf]
        %v1885 = vld [vmem:[%s184 + $0x14e4] sm:$0xf]
        %v1886 = vld [vmem:[%s184 + $0x14e8] sm:$0xf]
        %v1887 = vld [vmem:[%s184 + $0x14ec] sm:$0xf]
        %v1888 = vld [vmem:[%s184 + $0x14f0] sm:$0xf]
        %v1889 = vld [vmem:[%s184 + $0x14f4] sm:$0xf]
        %v1890 = vld [vmem:[%s184 + $0x14f8] sm:$0xf]
        %v1891 = vld [vmem:[%s184 + $0x14fc] sm:$0xf]
        %v1892 = vld [vmem:[%s184 + $0x1500] sm:$0xf]
        %v1893 = vld [vmem:[%s184 + $0x1504] sm:$0xf]
        %v1894 = vld [vmem:[%s184 + $0x1508] sm:$0xf]
        %v1895 = vld [vmem:[%s184 + $0x150c] sm:$0xf]
        %v1896 = vld [vmem:[%s184 + $0x1510] sm:$0xf]
        %v1897 = vld [vmem:[%s184 + $0x1514] sm:$0xf]
        %v1898 = vld [vmem:[%s184 + $0x1518] sm:$0xf]
        %v1899 = vld [vmem:[%s184 + $0x151c] sm:$0xf]
        %v1900 = vld [vmem:[%s184 + $0x1520] sm:$0xf]
        %v1901 = vld [vmem:[%s184 + $0x1524] sm:$0xf]
        %v1902 = vld [vmem:[%s184 + $0x1528] sm:$0xf]
        %v1903 = vld [vmem:[%s184 + $0x152c] sm:$0xf]
        %v1904 = vld [vmem:[%s184 + $0x1530] sm:$0xf]
        %v1905 = vld [vmem:[%s184 + $0x1534] sm:$0xf]
        %v1906 = vld [vmem:[%s184 + $0x1538] sm:$0xf]
        %v1907 = vld [vmem:[%s184 + $0x153c] sm:$0xf]
        %v1908 = vld [vmem:[%s184 + $0x1540] sm:$0xf]
        %v1909 = vld [vmem:[%s184 + $0x1544] sm:$0xf]
        %v1910 = vld [vmem:[%s184 + $0x1548] sm:$0xf]
        %v1911 = vld [vmem:[%s184 + $0x154c] sm:$0xf]
        %v1912 = vld [vmem:[%s184 + $0x1550] sm:$0xf]
        %v1913 = vld [vmem:[%s184 + $0x1554] sm:$0xf]
        %v1914 = vld [vmem:[%s184 + $0x1558] sm:$0xf]
        %v1915 = vld [vmem:[%s184 + $0x155c] sm:$0xf]
        %v1916 = vld [vmem:[%s184 + $0x1560] sm:$0xf]
        %v1917 = vld [vmem:[%s184 + $0x1564] sm:$0xf]
        %v1918 = vld [vmem:[%s184 + $0x1568] sm:$0xf]
        %v1919 = vld [vmem:[%s184 + $0x156c] sm:$0xf]
        %v1920 = vld [vmem:[%s184 + $0x1570] sm:$0xf]
        %v1921 = vld [vmem:[%s184 + $0x1574] sm:$0xf]
        %v1922 = vld [vmem:[%s184 + $0x1578] sm:$0xf]
        %v1923 = vld [vmem:[%s184 + $0x157c] sm:$0xf]
        %v1924 = vld [vmem:[%s184 + $0x1580] sm:$0xf]
        %v1925 = vld [vmem:[%s184 + $0x1584] sm:$0xf]
        %v1926 = vld [vmem:[%s184 + $0x1588] sm:$0xf]
        %v1927 = vld [vmem:[%s184 + $0x158c] sm:$0xf]
        %v1928 = vld [vmem:[%s184 + $0x1590] sm:$0xf]
        %v1929 = vld [vmem:[%s184 + $0x1594] sm:$0xf]
        %v1930 = vld [vmem:[%s184 + $0x1598] sm:$0xf]
        %v1931 = vld [vmem:[%s184 + $0x159c] sm:$0xf]
        %v1932 = vld [vmem:[%s184 + $0x15a0] sm:$0xf]
        %v1933 = vld [vmem:[%s184 + $0x15a4] sm:$0xf]
        %v1934 = vld [vmem:[%s184 + $0x15a8] sm:$0xf]
        %v1935 = vld [vmem:[%s184 + $0x15ac] sm:$0xf]
        %v1936 = vld [vmem:[%s184 + $0x15b0] sm:$0xf]
        %v1937 = vld [vmem:[%s184 + $0x15b4] sm:$0xf]
        %v1938 = vld [vmem:[%s184 + $0x15b8] sm:$0xf]
        %v1939 = vld [vmem:[%s184 + $0x15bc] sm:$0xf]
        %v3332 = vunpack.c.l.b16 %v548
        %v3333 = vunpack.c.l.b16 %v549
        %v3334 = vunpack.c.l.b16 %v550
        %v3335 = vunpack.c.l.b16 %v551
        %v3336 = vunpack.c.l.b16 %v552
        %v3337 = vunpack.c.l.b16 %v553
        %v3338 = vunpack.c.l.b16 %v554
        %v3339 = vunpack.c.l.b16 %v555
        %v3340 = vunpack.c.l.b16 %v556
        %v3341 = vunpack.c.l.b16 %v557
        %v3342 = vunpack.c.l.b16 %v558
        %v3343 = vunpack.c.l.b16 %v559
        %v3344 = vunpack.c.l.b16 %v560
        %v3345 = vunpack.c.l.b16 %v561
        %v3346 = vunpack.c.l.b16 %v562
        %v3347 = vunpack.c.l.b16 %v563
        %v3348 = vunpack.c.l.b16 %v564
        %v3349 = vunpack.c.l.b16 %v565
        %v3350 = vunpack.c.l.b16 %v566
        %v3351 = vunpack.c.l.b16 %v567
        %v3352 = vunpack.c.l.b16 %v568
        %v3353 = vunpack.c.l.b16 %v569
        %v3354 = vunpack.c.l.b16 %v570
        %v3355 = vunpack.c.l.b16 %v571
        %v3356 = vunpack.c.l.b16 %v572
        %v3357 = vunpack.c.l.b16 %v573
        %v3358 = vunpack.c.l.b16 %v574
        %v3359 = vunpack.c.l.b16 %v575
        %v3360 = vunpack.c.l.b16 %v576
        %v3361 = vunpack.c.l.b16 %v577
        %v3362 = vunpack.c.l.b16 %v578
        %v3363 = vunpack.c.l.b16 %v579
        %v3364 = vunpack.c.l.b16 %v580
        %v3365 = vunpack.c.l.b16 %v581
        %v3366 = vunpack.c.l.b16 %v582
        %v3367 = vunpack.c.l.b16 %v583
        %v3368 = vunpack.c.l.b16 %v584
        %v3369 = vunpack.c.l.b16 %v585
        %v3370 = vunpack.c.l.b16 %v586
        %v3371 = vunpack.c.l.b16 %v587
        %v3372 = vunpack.c.l.b16 %v588
        %v3373 = vunpack.c.l.b16 %v589
        %v3374 = vunpack.c.l.b16 %v590
        %v3375 = vunpack.c.l.b16 %v591
        %v3376 = vunpack.c.l.b16 %v592
        %v3377 = vunpack.c.l.b16 %v593
        %v3378 = vunpack.c.l.b16 %v594
        %v3379 = vunpack.c.l.b16 %v595
        %v3380 = vunpack.c.l.b16 %v596
        %v3381 = vunpack.c.l.b16 %v597
        %v3382 = vunpack.c.l.b16 %v598
        %v3383 = vunpack.c.l.b16 %v599
        %v3384 = vunpack.c.l.b16 %v600
        %v3385 = vunpack.c.l.b16 %v601
        %v3386 = vunpack.c.l.b16 %v602
        %v3387 = vunpack.c.l.b16 %v603
        %v3388 = vunpack.c.l.b16 %v604
        %v3389 = vunpack.c.l.b16 %v605
        %v3390 = vunpack.c.l.b16 %v606
        %v3391 = vunpack.c.l.b16 %v607
        %v3392 = vunpack.c.l.b16 %v608
        %v3393 = vunpack.c.l.b16 %v609
        %v3394 = vunpack.c.l.b16 %v610
        %v3395 = vunpack.c.l.b16 %v611
        %v3396 = vunpack.c.l.b16 %v612
        %v3397 = vunpack.c.l.b16 %v613
        %v3398 = vunpack.c.l.b16 %v614
        %v3399 = vunpack.c.l.b16 %v615
        %v3400 = vunpack.c.l.b16 %v616
        %v3401 = vunpack.c.l.b16 %v617
        %v3402 = vunpack.c.l.b16 %v618
        %v3403 = vunpack.c.l.b16 %v619
        %v3404 = vunpack.c.l.b16 %v620
        %v3405 = vunpack.c.l.b16 %v621
        %v3406 = vunpack.c.l.b16 %v622
        %v3407 = vunpack.c.l.b16 %v623
        %v3408 = vunpack.c.l.b16 %v624
        %v3409 = vunpack.c.l.b16 %v625
        %v3410 = vunpack.c.l.b16 %v626
        %v3411 = vunpack.c.l.b16 %v627
        %v3412 = vunpack.c.l.b16 %v628
        %v3413 = vunpack.c.l.b16 %v629
        %v3414 = vunpack.c.l.b16 %v630
        %v3415 = vunpack.c.l.b16 %v631
        %v3416 = vunpack.c.l.b16 %v632
        %v3417 = vunpack.c.l.b16 %v633
        %v3418 = vunpack.c.l.b16 %v634
        %v3419 = vunpack.c.l.b16 %v635
        %v3420 = vunpack.c.l.b16 %v636
        %v3421 = vunpack.c.l.b16 %v637
        %v3422 = vunpack.c.l.b16 %v638
        %v3423 = vunpack.c.l.b16 %v639
        %v3424 = vunpack.c.l.b16 %v640
        %v3425 = vunpack.c.l.b16 %v641
        %v3426 = vunpack.c.l.b16 %v642
        %v3427 = vunpack.c.l.b16 %v643
        %v3428 = vunpack.c.l.b16 %v644
        %v3429 = vunpack.c.l.b16 %v645
        %v3430 = vunpack.c.l.b16 %v646
        %v3431 = vunpack.c.l.b16 %v647
        %v3432 = vunpack.c.l.b16 %v648
        %v3433 = vunpack.c.l.b16 %v649
        %v3434 = vunpack.c.l.b16 %v650
        %v3435 = vunpack.c.l.b16 %v651
        %v3436 = vunpack.c.l.b16 %v652
        %v3437 = vunpack.c.l.b16 %v653
        %v3438 = vunpack.c.l.b16 %v654
        %v3439 = vunpack.c.l.b16 %v655
        %v3440 = vunpack.c.l.b16 %v656
        %v3441 = vunpack.c.l.b16 %v657
        %v3442 = vunpack.c.l.b16 %v658
        %v3443 = vunpack.c.l.b16 %v659
        %v3444 = vunpack.c.l.b16 %v660
        %v3445 = vunpack.c.l.b16 %v661
        %v3446 = vunpack.c.l.b16 %v662
        %v3447 = vunpack.c.l.b16 %v663
        %v3448 = vunpack.c.l.b16 %v664
        %v3449 = vunpack.c.l.b16 %v665
        %v3450 = vunpack.c.l.b16 %v666
        %v3451 = vunpack.c.l.b16 %v667
        %v3452 = vunpack.c.l.b16 %v668
        %v3453 = vunpack.c.l.b16 %v669
        %v3454 = vunpack.c.l.b16 %v670
        %v3455 = vunpack.c.l.b16 %v671
        %v3456 = vunpack.c.l.b16 %v672
        %v3457 = vunpack.c.l.b16 %v673
        %v3458 = vunpack.c.l.b16 %v674
        %v3459 = vunpack.c.l.b16 %v675
        %v3460 = vunpack.c.l.b16 %v676
        %v3461 = vunpack.c.l.b16 %v677
        %v3462 = vunpack.c.l.b16 %v678
        %v3463 = vunpack.c.l.b16 %v679
        %v3464 = vunpack.c.l.b16 %v680
        %v3465 = vunpack.c.l.b16 %v681
        %v3466 = vunpack.c.l.b16 %v682
        %v3467 = vunpack.c.l.b16 %v683
        %v3468 = vunpack.c.l.b16 %v684
        %v3469 = vunpack.c.l.b16 %v685
        %v3470 = vunpack.c.l.b16 %v686
        %v3471 = vunpack.c.l.b16 %v687
        %v3472 = vunpack.c.l.b16 %v688
        %v3473 = vunpack.c.l.b16 %v689
        %v3474 = vunpack.c.l.b16 %v690
        %v3475 = vunpack.c.l.b16 %v691
        %v3476 = vunpack.c.l.b16 %v692
        %v3477 = vunpack.c.l.b16 %v693
        %v3478 = vunpack.c.l.b16 %v694
        %v3479 = vunpack.c.l.b16 %v695
        %v3480 = vunpack.c.l.b16 %v696
        %v3481 = vunpack.c.l.b16 %v697
        %v3482 = vunpack.c.l.b16 %v698
        %v3483 = vunpack.c.l.b16 %v699
        %v3484 = vunpack.c.l.b16 %v700
        %v3485 = vunpack.c.l.b16 %v701
        %v3486 = vunpack.c.l.b16 %v702
        %v3487 = vunpack.c.l.b16 %v703
        %v3488 = vunpack.c.l.b16 %v704
        %v3489 = vunpack.c.l.b16 %v705
        %v3490 = vunpack.c.l.b16 %v706
        %v3491 = vunpack.c.l.b16 %v707
        %v3492 = vunpack.c.l.b16 %v708
        %v3493 = vunpack.c.l.b16 %v709
        %v3494 = vunpack.c.l.b16 %v710
        %v3495 = vunpack.c.l.b16 %v711
        %v3496 = vunpack.c.l.b16 %v712
        %v3497 = vunpack.c.l.b16 %v713
        %v3498 = vunpack.c.l.b16 %v714
        %v3499 = vunpack.c.l.b16 %v715
        %v3500 = vunpack.c.l.b16 %v716
        %v3501 = vunpack.c.l.b16 %v717
        %v3502 = vunpack.c.l.b16 %v718
        %v3503 = vunpack.c.l.b16 %v719
        %v3504 = vunpack.c.l.b16 %v720
        %v3505 = vunpack.c.l.b16 %v721
        %v3506 = vunpack.c.l.b16 %v722
        %v3507 = vunpack.c.l.b16 %v723
        %v3508 = vunpack.c.l.b16 %v724
        %v3509 = vunpack.c.l.b16 %v725
        %v3510 = vunpack.c.l.b16 %v726
        %v3511 = vunpack.c.l.b16 %v727
        %v3512 = vunpack.c.l.b16 %v728
        %v3513 = vunpack.c.l.b16 %v729
        %v3514 = vunpack.c.l.b16 %v730
        %v3515 = vunpack.c.l.b16 %v731
        %v3516 = vunpack.c.l.b16 %v732
        %v3517 = vunpack.c.l.b16 %v733
        %v3518 = vunpack.c.l.b16 %v734
        %v3519 = vunpack.c.l.b16 %v735
        %v3520 = vunpack.c.l.b16 %v736
        %v3521 = vunpack.c.l.b16 %v737
        %v3522 = vunpack.c.l.b16 %v738
        %v3523 = vunpack.c.l.b16 %v739
        %v3524 = vunpack.c.l.b16 %v740
        %v3525 = vunpack.c.l.b16 %v741
        %v3526 = vunpack.c.l.b16 %v742
        %v3527 = vunpack.c.l.b16 %v743
        %v3528 = vunpack.c.l.b16 %v744
        %v3529 = vunpack.c.l.b16 %v745
        %v3530 = vunpack.c.l.b16 %v746
        %v3531 = vunpack.c.l.b16 %v747
        %v3532 = vunpack.c.l.b16 %v748
        %v3533 = vunpack.c.l.b16 %v749
        %v3534 = vunpack.c.l.b16 %v750
        %v3535 = vunpack.c.l.b16 %v751
        %v3536 = vunpack.c.l.b16 %v752
        %v3537 = vunpack.c.l.b16 %v753
        %v3538 = vunpack.c.l.b16 %v754
        %v3539 = vunpack.c.l.b16 %v755
        %v3540 = vunpack.c.l.b16 %v756
        %v3541 = vunpack.c.l.b16 %v757
        %v3542 = vunpack.c.l.b16 %v758
        %v3543 = vunpack.c.l.b16 %v759
        %v3544 = vunpack.c.l.b16 %v760
        %v3545 = vunpack.c.l.b16 %v761
        %v3546 = vunpack.c.l.b16 %v762
        %v3547 = vunpack.c.l.b16 %v763
        %v3548 = vunpack.c.l.b16 %v764
        %v3549 = vunpack.c.l.b16 %v765
        %v3550 = vunpack.c.l.b16 %v766
        %v3551 = vunpack.c.l.b16 %v767
        %v3552 = vunpack.c.l.b16 %v768
        %v3553 = vunpack.c.l.b16 %v769
        %v3554 = vunpack.c.l.b16 %v770
        %v3555 = vunpack.c.l.b16 %v771
        %v3556 = vunpack.c.l.b16 %v772
        %v3557 = vunpack.c.l.b16 %v773
        %v3558 = vunpack.c.l.b16 %v774
        %v3559 = vunpack.c.l.b16 %v775
        %v3560 = vunpack.c.l.b16 %v776
        %v3561 = vunpack.c.l.b16 %v777
        %v3562 = vunpack.c.l.b16 %v778
        %v3563 = vunpack.c.l.b16 %v779
        %v3564 = vunpack.c.l.b16 %v780
        %v3565 = vunpack.c.l.b16 %v781
        %v3566 = vunpack.c.l.b16 %v782
        %v3567 = vunpack.c.l.b16 %v783
        %v3568 = vunpack.c.l.b16 %v784
        %v3569 = vunpack.c.l.b16 %v785
        %v3570 = vunpack.c.l.b16 %v786
        %v3571 = vunpack.c.l.b16 %v787
        %v3572 = vunpack.c.l.b16 %v788
        %v3573 = vunpack.c.l.b16 %v789
        %v3574 = vunpack.c.l.b16 %v790
        %v3575 = vunpack.c.l.b16 %v791
        %v3576 = vunpack.c.l.b16 %v792
        %v3577 = vunpack.c.l.b16 %v793
        %v3578 = vunpack.c.l.b16 %v794
        %v3579 = vunpack.c.l.b16 %v795
        %v3580 = vunpack.c.l.b16 %v796
        %v3581 = vunpack.c.l.b16 %v797
        %v3582 = vunpack.c.l.b16 %v798
        %v3583 = vunpack.c.l.b16 %v799
        %v3584 = vunpack.c.l.b16 %v800
        %v3585 = vunpack.c.l.b16 %v801
        %v3586 = vunpack.c.l.b16 %v802
        %v3587 = vunpack.c.l.b16 %v803
        %v3588 = vunpack.c.l.b16 %v804
        %v3589 = vunpack.c.l.b16 %v805
        %v3590 = vunpack.c.l.b16 %v806
        %v3591 = vunpack.c.l.b16 %v807
        %v3592 = vunpack.c.l.b16 %v808
        %v3593 = vunpack.c.l.b16 %v809
        %v3594 = vunpack.c.l.b16 %v810
        %v3595 = vunpack.c.l.b16 %v811
        %v3596 = vunpack.c.l.b16 %v812
        %v3597 = vunpack.c.l.b16 %v813
        %v3598 = vunpack.c.l.b16 %v814
        %v3599 = vunpack.c.l.b16 %v815
        %v3600 = vunpack.c.l.b16 %v816
        %v3601 = vunpack.c.l.b16 %v817
        %v3602 = vunpack.c.l.b16 %v818
        %v3603 = vunpack.c.l.b16 %v819
        %v3604 = vunpack.c.l.b16 %v820
        %v3605 = vunpack.c.l.b16 %v821
        %v3606 = vunpack.c.l.b16 %v822
        %v3607 = vunpack.c.l.b16 %v823
        %v3608 = vunpack.c.l.b16 %v824
        %v3609 = vunpack.c.l.b16 %v825
        %v3610 = vunpack.c.l.b16 %v826
        %v3611 = vunpack.c.l.b16 %v827
        %v3612 = vunpack.c.l.b16 %v828
        %v3613 = vunpack.c.l.b16 %v829
        %v3614 = vunpack.c.l.b16 %v830
        %v3615 = vunpack.c.l.b16 %v831
        %v3616 = vunpack.c.l.b16 %v832
        %v3617 = vunpack.c.l.b16 %v833
        %v3618 = vunpack.c.l.b16 %v834
        %v3619 = vunpack.c.l.b16 %v835
        %v3620 = vunpack.c.l.b16 %v836
        %v3621 = vunpack.c.l.b16 %v837
        %v3622 = vunpack.c.l.b16 %v838
        %v3623 = vunpack.c.l.b16 %v839
        %v3624 = vunpack.c.l.b16 %v840
        %v3625 = vunpack.c.l.b16 %v841
        %v3626 = vunpack.c.l.b16 %v842
        %v3627 = vunpack.c.l.b16 %v843
        %v3628 = vunpack.c.l.b16 %v844
        %v3629 = vunpack.c.l.b16 %v845
        %v3630 = vunpack.c.l.b16 %v846
        %v3631 = vunpack.c.l.b16 %v847
        %v3632 = vunpack.c.l.b16 %v848
        %v3633 = vunpack.c.l.b16 %v849
        %v3634 = vunpack.c.l.b16 %v850
        %v3635 = vunpack.c.l.b16 %v851
        %v3636 = vunpack.c.l.b16 %v852
        %v3637 = vunpack.c.l.b16 %v853
        %v3638 = vunpack.c.l.b16 %v854
        %v3639 = vunpack.c.l.b16 %v855
        %v3640 = vunpack.c.l.b16 %v856
        %v3641 = vunpack.c.l.b16 %v857
        %v3642 = vunpack.c.l.b16 %v858
        %v3643 = vunpack.c.l.b16 %v859
        %v3644 = vunpack.c.l.b16 %v860
        %v3645 = vunpack.c.l.b16 %v861
        %v3646 = vunpack.c.l.b16 %v862
        %v3647 = vunpack.c.l.b16 %v863
        %v3648 = vunpack.c.l.b16 %v864
        %v3649 = vunpack.c.l.b16 %v865
        %v3650 = vunpack.c.l.b16 %v866
        %v3651 = vunpack.c.l.b16 %v867
        %v3652 = vunpack.c.l.b16 %v868
        %v3653 = vunpack.c.l.b16 %v869
        %v3654 = vunpack.c.l.b16 %v870
        %v3655 = vunpack.c.l.b16 %v871
        %v3656 = vunpack.c.l.b16 %v872
        %v3657 = vunpack.c.l.b16 %v873
        %v3658 = vunpack.c.l.b16 %v874
        %v3659 = vunpack.c.l.b16 %v875
        %v3660 = vunpack.c.l.b16 %v876
        %v3661 = vunpack.c.l.b16 %v877
        %v3662 = vunpack.c.l.b16 %v878
        %v3663 = vunpack.c.l.b16 %v879
        %v3664 = vunpack.c.l.b16 %v880
        %v3665 = vunpack.c.l.b16 %v881
        %v3666 = vunpack.c.l.b16 %v882
        %v3667 = vunpack.c.l.b16 %v883
        %v3668 = vunpack.c.l.b16 %v884
        %v3669 = vunpack.c.l.b16 %v885
        %v3670 = vunpack.c.l.b16 %v886
        %v3671 = vunpack.c.l.b16 %v887
        %v3672 = vunpack.c.l.b16 %v888
        %v3673 = vunpack.c.l.b16 %v889
        %v3674 = vunpack.c.l.b16 %v890
        %v3675 = vunpack.c.l.b16 %v891
        %v3676 = vunpack.c.l.b16 %v892
        %v3677 = vunpack.c.l.b16 %v893
        %v3678 = vunpack.c.l.b16 %v894
        %v3679 = vunpack.c.l.b16 %v895
        %v3680 = vunpack.c.l.b16 %v896
        %v3681 = vunpack.c.l.b16 %v897
        %v3682 = vunpack.c.l.b16 %v898
        %v3683 = vunpack.c.l.b16 %v899
        %v3684 = vunpack.c.l.b16 %v900
        %v3685 = vunpack.c.l.b16 %v901
        %v3686 = vunpack.c.l.b16 %v902
        %v3687 = vunpack.c.l.b16 %v903
        %v3688 = vunpack.c.l.b16 %v904
        %v3689 = vunpack.c.l.b16 %v905
        %v3690 = vunpack.c.l.b16 %v906
        %v3691 = vunpack.c.l.b16 %v907
        %v3692 = vunpack.c.l.b16 %v908
        %v3693 = vunpack.c.l.b16 %v909
        %v3694 = vunpack.c.l.b16 %v910
        %v3695 = vunpack.c.l.b16 %v911
        %v3696 = vunpack.c.l.b16 %v912
        %v3697 = vunpack.c.l.b16 %v913
        %v3698 = vunpack.c.l.b16 %v914
        %v3699 = vunpack.c.l.b16 %v915
        %v3700 = vunpack.c.l.b16 %v916
        %v3701 = vunpack.c.l.b16 %v917
        %v3702 = vunpack.c.l.b16 %v918
        %v3703 = vunpack.c.l.b16 %v919
        %v3704 = vunpack.c.l.b16 %v920
        %v3705 = vunpack.c.l.b16 %v921
        %v3706 = vunpack.c.l.b16 %v922
        %v3707 = vunpack.c.l.b16 %v923
        %v3708 = vunpack.c.l.b16 %v924
        %v3709 = vunpack.c.l.b16 %v925
        %v3710 = vunpack.c.l.b16 %v926
        %v3711 = vunpack.c.l.b16 %v927
        %v3712 = vunpack.c.l.b16 %v928
        %v3713 = vunpack.c.l.b16 %v929
        %v3714 = vunpack.c.l.b16 %v930
        %v3715 = vunpack.c.l.b16 %v931
        %v3716 = vunpack.c.l.b16 %v932
        %v3717 = vunpack.c.l.b16 %v933
        %v3718 = vunpack.c.l.b16 %v934
        %v3719 = vunpack.c.l.b16 %v935
        %v3720 = vunpack.c.l.b16 %v936
        %v3721 = vunpack.c.l.b16 %v937
        %v3722 = vunpack.c.l.b16 %v938
        %v3723 = vunpack.c.l.b16 %v939
        %v3724 = vunpack.c.l.b16 %v940
        %v3725 = vunpack.c.l.b16 %v941
        %v3726 = vunpack.c.l.b16 %v942
        %v3727 = vunpack.c.l.b16 %v943
        %v3728 = vunpack.c.l.b16 %v944
        %v3729 = vunpack.c.l.b16 %v945
        %v3730 = vunpack.c.l.b16 %v946
        %v3731 = vunpack.c.l.b16 %v947
        %v3732 = vunpack.c.l.b16 %v948
        %v3733 = vunpack.c.l.b16 %v949
        %v3734 = vunpack.c.l.b16 %v950
        %v3735 = vunpack.c.l.b16 %v951
        %v3736 = vunpack.c.l.b16 %v952
        %v3737 = vunpack.c.l.b16 %v953
        %v3738 = vunpack.c.l.b16 %v954
        %v3739 = vunpack.c.l.b16 %v955
        %v3740 = vunpack.c.l.b16 %v956
        %v3741 = vunpack.c.l.b16 %v957
        %v3742 = vunpack.c.l.b16 %v958
        %v3743 = vunpack.c.l.b16 %v959
        %v3744 = vunpack.c.l.b16 %v960
        %v3745 = vunpack.c.l.b16 %v961
        %v3746 = vunpack.c.l.b16 %v962
        %v3747 = vunpack.c.l.b16 %v963
        %v3748 = vunpack.c.l.b16 %v964
        %v3749 = vunpack.c.l.b16 %v965
        %v3750 = vunpack.c.l.b16 %v966
        %v3751 = vunpack.c.l.b16 %v967
        %v3752 = vunpack.c.l.b16 %v968
        %v3753 = vunpack.c.l.b16 %v969
        %v3754 = vunpack.c.l.b16 %v970
        %v3755 = vunpack.c.l.b16 %v971
        %v3756 = vunpack.c.l.b16 %v972
        %v3757 = vunpack.c.l.b16 %v973
        %v3758 = vunpack.c.l.b16 %v974
        %v3759 = vunpack.c.l.b16 %v975
        %v3760 = vunpack.c.l.b16 %v976
        %v3761 = vunpack.c.l.b16 %v977
        %v3762 = vunpack.c.l.b16 %v978
        %v3763 = vunpack.c.l.b16 %v979
        %v3764 = vunpack.c.l.b16 %v980
        %v3765 = vunpack.c.l.b16 %v981
        %v3766 = vunpack.c.l.b16 %v982
        %v3767 = vunpack.c.l.b16 %v983
        %v3768 = vunpack.c.l.b16 %v984
        %v3769 = vunpack.c.l.b16 %v985
        %v3770 = vunpack.c.l.b16 %v986
        %v3771 = vunpack.c.l.b16 %v987
        %v3772 = vunpack.c.l.b16 %v988
        %v3773 = vunpack.c.l.b16 %v989
        %v3774 = vunpack.c.l.b16 %v990
        %v3775 = vunpack.c.l.b16 %v991
        %v3776 = vunpack.c.l.b16 %v992
        %v3777 = vunpack.c.l.b16 %v993
        %v3778 = vunpack.c.l.b16 %v994
        %v3779 = vunpack.c.l.b16 %v995
        %v3780 = vunpack.c.l.b16 %v996
        %v3781 = vunpack.c.l.b16 %v997
        %v3782 = vunpack.c.l.b16 %v998
        %v3783 = vunpack.c.l.b16 %v999
        %v3784 = vunpack.c.l.b16 %v1000
        %v3785 = vunpack.c.l.b16 %v1001
        %v3786 = vunpack.c.l.b16 %v1002
        %v3787 = vunpack.c.l.b16 %v1003
        %v3788 = vunpack.c.l.b16 %v1004
        %v3789 = vunpack.c.l.b16 %v1005
        %v3790 = vunpack.c.l.b16 %v1006
        %v3791 = vunpack.c.l.b16 %v1007
        %v3792 = vunpack.c.l.b16 %v1008
        %v3793 = vunpack.c.l.b16 %v1009
        %v3794 = vunpack.c.l.b16 %v1010
        %v3795 = vunpack.c.l.b16 %v1011
        %v3796 = vunpack.c.l.b16 %v1012
        %v3797 = vunpack.c.l.b16 %v1013
        %v3798 = vunpack.c.l.b16 %v1014
        %v3799 = vunpack.c.l.b16 %v1015
        %v3800 = vunpack.c.l.b16 %v1016
        %v3801 = vunpack.c.l.b16 %v1017
        %v3802 = vunpack.c.l.b16 %v1018
        %v3803 = vunpack.c.l.b16 %v1019
        %v3804 = vunpack.c.l.b16 %v1020
        %v3805 = vunpack.c.l.b16 %v1021
        %v3806 = vunpack.c.l.b16 %v1022
        %v3807 = vunpack.c.l.b16 %v1023
        %v3808 = vunpack.c.l.b16 %v1024
        %v3809 = vunpack.c.l.b16 %v1025
        %v3810 = vunpack.c.l.b16 %v1026
        %v3811 = vunpack.c.l.b16 %v1027
        %v3812 = vunpack.c.l.b16 %v1028
        %v3813 = vunpack.c.l.b16 %v1029
        %v3814 = vunpack.c.l.b16 %v1030
        %v3815 = vunpack.c.l.b16 %v1031
        %v3816 = vunpack.c.l.b16 %v1032
        %v3817 = vunpack.c.l.b16 %v1033
        %v3818 = vunpack.c.l.b16 %v1034
        %v3819 = vunpack.c.l.b16 %v1035
        %v3820 = vunpack.c.l.b16 %v1036
        %v3821 = vunpack.c.l.b16 %v1037
        %v3822 = vunpack.c.l.b16 %v1038
        %v3823 = vunpack.c.l.b16 %v1039
        %v3824 = vunpack.c.l.b16 %v1040
        %v3825 = vunpack.c.l.b16 %v1041
        %v3826 = vunpack.c.l.b16 %v1042
        %v3827 = vunpack.c.l.b16 %v1043
        %v3828 = vunpack.c.l.b16 %v1044
        %v3829 = vunpack.c.l.b16 %v1045
        %v3830 = vunpack.c.l.b16 %v1046
        %v3831 = vunpack.c.l.b16 %v1047
        %v3832 = vunpack.c.l.b16 %v1048
        %v3833 = vunpack.c.l.b16 %v1049
        %v3834 = vunpack.c.l.b16 %v1050
        %v3835 = vunpack.c.l.b16 %v1051
        %v3836 = vunpack.c.l.b16 %v1052
        %v3837 = vunpack.c.l.b16 %v1053
        %v3838 = vunpack.c.l.b16 %v1054
        %v3839 = vunpack.c.l.b16 %v1055
        %v3840 = vunpack.c.l.b16 %v1056
        %v3841 = vunpack.c.l.b16 %v1057
        %v3842 = vunpack.c.l.b16 %v1058
        %v3843 = vunpack.c.l.b16 %v1059
        %v3844 = vunpack.c.l.b16 %v1060
        %v3845 = vunpack.c.l.b16 %v1061
        %v3846 = vunpack.c.l.b16 %v1062
        %v3847 = vunpack.c.l.b16 %v1063
        %v3848 = vunpack.c.l.b16 %v1064
        %v3849 = vunpack.c.l.b16 %v1065
        %v3850 = vunpack.c.l.b16 %v1066
        %v3851 = vunpack.c.l.b16 %v1067
        %v3852 = vunpack.c.l.b16 %v1068
        %v3853 = vunpack.c.l.b16 %v1069
        %v3854 = vunpack.c.l.b16 %v1070
        %v3855 = vunpack.c.l.b16 %v1071
        %v3856 = vunpack.c.l.b16 %v1072
        %v3857 = vunpack.c.l.b16 %v1073
        %v3858 = vunpack.c.l.b16 %v1074
        %v3859 = vunpack.c.l.b16 %v1075
        %v3860 = vunpack.c.l.b16 %v1076
        %v3861 = vunpack.c.l.b16 %v1077
        %v3862 = vunpack.c.l.b16 %v1078
        %v3863 = vunpack.c.l.b16 %v1079
        %v3864 = vunpack.c.l.b16 %v1080
        %v3865 = vunpack.c.l.b16 %v1081
        %v3866 = vunpack.c.l.b16 %v1082
        %v3867 = vunpack.c.l.b16 %v1083
        %v3868 = vunpack.c.l.b16 %v1084
        %v3869 = vunpack.c.l.b16 %v1085
        %v3870 = vunpack.c.l.b16 %v1086
        %v3871 = vunpack.c.l.b16 %v1087
        %v3872 = vunpack.c.l.b16 %v1088
        %v3873 = vunpack.c.l.b16 %v1089
        %v3874 = vunpack.c.l.b16 %v1090
        %v3875 = vunpack.c.l.b16 %v1091
        %v3876 = vunpack.c.l.b16 %v1092
        %v3877 = vunpack.c.l.b16 %v1093
        %v3878 = vunpack.c.l.b16 %v1094
        %v3879 = vunpack.c.l.b16 %v1095
        %v3880 = vunpack.c.l.b16 %v1096
        %v3881 = vunpack.c.l.b16 %v1097
        %v3882 = vunpack.c.l.b16 %v1098
        %v3883 = vunpack.c.l.b16 %v1099
        %v3884 = vunpack.c.l.b16 %v1100
        %v3885 = vunpack.c.l.b16 %v1101
        %v3886 = vunpack.c.l.b16 %v1102
        %v3887 = vunpack.c.l.b16 %v1103
        %v3888 = vunpack.c.l.b16 %v1104
        %v3889 = vunpack.c.l.b16 %v1105
        %v3890 = vunpack.c.l.b16 %v1106
        %v3891 = vunpack.c.l.b16 %v1107
        %v3892 = vunpack.c.l.b16 %v1108
        %v3893 = vunpack.c.l.b16 %v1109
        %v3894 = vunpack.c.l.b16 %v1110
        %v3895 = vunpack.c.l.b16 %v1111
        %v3896 = vunpack.c.l.b16 %v1112
        %v3897 = vunpack.c.l.b16 %v1113
        %v3898 = vunpack.c.l.b16 %v1114
        %v3899 = vunpack.c.l.b16 %v1115
        %v3900 = vunpack.c.l.b16 %v1116
        %v3901 = vunpack.c.l.b16 %v1117
        %v3902 = vunpack.c.l.b16 %v1118
        %v3903 = vunpack.c.l.b16 %v1119
        %v3904 = vunpack.c.l.b16 %v1120
        %v3905 = vunpack.c.l.b16 %v1121
        %v3906 = vunpack.c.l.b16 %v1122
        %v3907 = vunpack.c.l.b16 %v1123
        %v3908 = vunpack.c.l.b16 %v1124
        %v3909 = vunpack.c.l.b16 %v1125
        %v3910 = vunpack.c.l.b16 %v1126
        %v3911 = vunpack.c.l.b16 %v1127
        %v3912 = vunpack.c.l.b16 %v1128
        %v3913 = vunpack.c.l.b16 %v1129
        %v3914 = vunpack.c.l.b16 %v1130
        %v3915 = vunpack.c.l.b16 %v1131
        %v3916 = vunpack.c.l.b16 %v1132
        %v3917 = vunpack.c.l.b16 %v1133
        %v3918 = vunpack.c.l.b16 %v1134
        %v3919 = vunpack.c.l.b16 %v1135
        %v3920 = vunpack.c.l.b16 %v1136
        %v3921 = vunpack.c.l.b16 %v1137
        %v3922 = vunpack.c.l.b16 %v1138
        %v3923 = vunpack.c.l.b16 %v1139
        %v3924 = vunpack.c.l.b16 %v1140
        %v3925 = vunpack.c.l.b16 %v1141
        %v3926 = vunpack.c.l.b16 %v1142
        %v3927 = vunpack.c.l.b16 %v1143
        %v3928 = vunpack.c.l.b16 %v1144
        %v3929 = vunpack.c.l.b16 %v1145
        %v3930 = vunpack.c.l.b16 %v1146
        %v3931 = vunpack.c.l.b16 %v1147
        %v3932 = vunpack.c.l.b16 %v1148
        %v3933 = vunpack.c.l.b16 %v1149
        %v3934 = vunpack.c.l.b16 %v1150
        %v3935 = vunpack.c.l.b16 %v1151
        %v3936 = vunpack.c.l.b16 %v1152
        %v3937 = vunpack.c.l.b16 %v1153
        %v3938 = vunpack.c.l.b16 %v1154
        %v3939 = vunpack.c.l.b16 %v1155
        %v3940 = vunpack.c.l.b16 %v1156
        %v3941 = vunpack.c.l.b16 %v1157
        %v3942 = vunpack.c.l.b16 %v1158
        %v3943 = vunpack.c.l.b16 %v1159
        %v3944 = vunpack.c.l.b16 %v1160
        %v3945 = vunpack.c.l.b16 %v1161
        %v3946 = vunpack.c.l.b16 %v1162
        %v3947 = vunpack.c.l.b16 %v1163
        %v3948 = vunpack.c.l.b16 %v1164
        %v3949 = vunpack.c.l.b16 %v1165
        %v3950 = vunpack.c.l.b16 %v1166
        %v3951 = vunpack.c.l.b16 %v1167
        %v3952 = vunpack.c.l.b16 %v1168
        %v3953 = vunpack.c.l.b16 %v1169
        %v3954 = vunpack.c.l.b16 %v1170
        %v3955 = vunpack.c.l.b16 %v1171
        %v3956 = vunpack.c.l.b16 %v1172
        %v3957 = vunpack.c.l.b16 %v1173
        %v3958 = vunpack.c.l.b16 %v1174
        %v3959 = vunpack.c.l.b16 %v1175
        %v3960 = vunpack.c.l.b16 %v1176
        %v3961 = vunpack.c.l.b16 %v1177
        %v3962 = vunpack.c.l.b16 %v1178
        %v3963 = vunpack.c.l.b16 %v1179
        %v3964 = vunpack.c.l.b16 %v1180
        %v3965 = vunpack.c.l.b16 %v1181
        %v3966 = vunpack.c.l.b16 %v1182
        %v3967 = vunpack.c.l.b16 %v1183
        %v3968 = vunpack.c.l.b16 %v1184
        %v3969 = vunpack.c.l.b16 %v1185
        %v3970 = vunpack.c.l.b16 %v1186
        %v3971 = vunpack.c.l.b16 %v1187
        %v3972 = vunpack.c.l.b16 %v1188
        %v3973 = vunpack.c.l.b16 %v1189
        %v3974 = vunpack.c.l.b16 %v1190
        %v3975 = vunpack.c.l.b16 %v1191
        %v3976 = vunpack.c.l.b16 %v1192
        %v3977 = vunpack.c.l.b16 %v1193
        %v3978 = vunpack.c.l.b16 %v1194
        %v3979 = vunpack.c.l.b16 %v1195
        %v3980 = vunpack.c.l.b16 %v1196
        %v3981 = vunpack.c.l.b16 %v1197
        %v3982 = vunpack.c.l.b16 %v1198
        %v3983 = vunpack.c.l.b16 %v1199
        %v3984 = vunpack.c.l.b16 %v1200
        %v3985 = vunpack.c.l.b16 %v1201
        %v3986 = vunpack.c.l.b16 %v1202
        %v3987 = vunpack.c.l.b16 %v1203
        %v3988 = vunpack.c.l.b16 %v1204
        %v3989 = vunpack.c.l.b16 %v1205
        %v3990 = vunpack.c.l.b16 %v1206
        %v3991 = vunpack.c.l.b16 %v1207
        %v3992 = vunpack.c.l.b16 %v1208
        %v3993 = vunpack.c.l.b16 %v1209
        %v3994 = vunpack.c.l.b16 %v1210
        %v3995 = vunpack.c.l.b16 %v1211
        %v3996 = vunpack.c.l.b16 %v1212
        %v3997 = vunpack.c.l.b16 %v1213
        %v3998 = vunpack.c.l.b16 %v1214
        %v3999 = vunpack.c.l.b16 %v1215
        %v4000 = vunpack.c.l.b16 %v1216
        %v4001 = vunpack.c.l.b16 %v1217
        %v4002 = vunpack.c.l.b16 %v1218
        %v4003 = vunpack.c.l.b16 %v1219
        %v4004 = vunpack.c.l.b16 %v1220
        %v4005 = vunpack.c.l.b16 %v1221
        %v4006 = vunpack.c.l.b16 %v1222
        %v4007 = vunpack.c.l.b16 %v1223
        %v4008 = vunpack.c.l.b16 %v1224
        %v4009 = vunpack.c.l.b16 %v1225
        %v4010 = vunpack.c.l.b16 %v1226
        %v4011 = vunpack.c.l.b16 %v1227
        %v4012 = vunpack.c.l.b16 %v1228
        %v4013 = vunpack.c.l.b16 %v1229
        %v4014 = vunpack.c.l.b16 %v1230
        %v4015 = vunpack.c.l.b16 %v1231
        %v4016 = vunpack.c.l.b16 %v1232
        %v4017 = vunpack.c.l.b16 %v1233
        %v4018 = vunpack.c.l.b16 %v1234
        %v4019 = vunpack.c.l.b16 %v1235
        %v4020 = vunpack.c.l.b16 %v1236
        %v4021 = vunpack.c.l.b16 %v1237
        %v4022 = vunpack.c.l.b16 %v1238
        %v4023 = vunpack.c.l.b16 %v1239
        %v4024 = vunpack.c.l.b16 %v1240
        %v4025 = vunpack.c.l.b16 %v1241
        %v4026 = vunpack.c.l.b16 %v1242
        %v4027 = vunpack.c.l.b16 %v1243
        %v4028 = vunpack.c.l.b16 %v1244
        %v4029 = vunpack.c.l.b16 %v1245
        %v4030 = vunpack.c.l.b16 %v1246
        %v4031 = vunpack.c.l.b16 %v1247
        %v4032 = vunpack.c.l.b16 %v1248
        %v4033 = vunpack.c.l.b16 %v1249
        %v4034 = vunpack.c.l.b16 %v1250
        %v4035 = vunpack.c.l.b16 %v1251
        %v4036 = vunpack.c.l.b16 %v1252
        %v4037 = vunpack.c.l.b16 %v1253
        %v4038 = vunpack.c.l.b16 %v1254
        %v4039 = vunpack.c.l.b16 %v1255
        %v4040 = vunpack.c.l.b16 %v1256
        %v4041 = vunpack.c.l.b16 %v1257
        %v4042 = vunpack.c.l.b16 %v1258
        %v4043 = vunpack.c.l.b16 %v1259
        %v4044 = vunpack.c.l.b16 %v1260
        %v4045 = vunpack.c.l.b16 %v1261
        %v4046 = vunpack.c.l.b16 %v1262
        %v4047 = vunpack.c.l.b16 %v1263
        %v4048 = vunpack.c.l.b16 %v1264
        %v4049 = vunpack.c.l.b16 %v1265
        %v4050 = vunpack.c.l.b16 %v1266
        %v4051 = vunpack.c.l.b16 %v1267
        %v4052 = vunpack.c.l.b16 %v1268
        %v4053 = vunpack.c.l.b16 %v1269
        %v4054 = vunpack.c.l.b16 %v1270
        %v4055 = vunpack.c.l.b16 %v1271
        %v4056 = vunpack.c.l.b16 %v1272
        %v4057 = vunpack.c.l.b16 %v1273
        %v4058 = vunpack.c.l.b16 %v1274
        %v4059 = vunpack.c.l.b16 %v1275
        %v4060 = vunpack.c.l.b16 %v1276
        %v4061 = vunpack.c.l.b16 %v1277
        %v4062 = vunpack.c.l.b16 %v1278
        %v4063 = vunpack.c.l.b16 %v1279
        %v4064 = vunpack.c.l.b16 %v1280
        %v4065 = vunpack.c.l.b16 %v1281
        %v4066 = vunpack.c.l.b16 %v1282
        %v4067 = vunpack.c.l.b16 %v1283
        %v4068 = vunpack.c.l.b16 %v1284
        %v4069 = vunpack.c.l.b16 %v1285
        %v4070 = vunpack.c.l.b16 %v1286
        %v4071 = vunpack.c.l.b16 %v1287
        %v4072 = vunpack.c.l.b16 %v1288
        %v4073 = vunpack.c.l.b16 %v1289
        %v4074 = vunpack.c.l.b16 %v1290
        %v4075 = vunpack.c.l.b16 %v1291
        %v4076 = vunpack.c.l.b16 %v1292
        %v4077 = vunpack.c.l.b16 %v1293
        %v4078 = vunpack.c.l.b16 %v1294
        %v4079 = vunpack.c.l.b16 %v1295
        %v4080 = vunpack.c.l.b16 %v1296
        %v4081 = vunpack.c.l.b16 %v1297
        %v4082 = vunpack.c.l.b16 %v1298
        %v4083 = vunpack.c.l.b16 %v1299
        %v4084 = vunpack.c.l.b16 %v1300
        %v4085 = vunpack.c.l.b16 %v1301
        %v4086 = vunpack.c.l.b16 %v1302
        %v4087 = vunpack.c.l.b16 %v1303
        %v4088 = vunpack.c.l.b16 %v1304
        %v4089 = vunpack.c.l.b16 %v1305
        %v4090 = vunpack.c.l.b16 %v1306
        %v4091 = vunpack.c.l.b16 %v1307
        %v4092 = vunpack.c.l.b16 %v1308
        %v4093 = vunpack.c.l.b16 %v1309
        %v4094 = vunpack.c.l.b16 %v1310
        %v4095 = vunpack.c.l.b16 %v1311
        %v4096 = vunpack.c.l.b16 %v1312
        %v4097 = vunpack.c.l.b16 %v1313
        %v4098 = vunpack.c.l.b16 %v1314
        %v4099 = vunpack.c.l.b16 %v1315
        %v4100 = vunpack.c.l.b16 %v1316
        %v4101 = vunpack.c.l.b16 %v1317
        %v4102 = vunpack.c.l.b16 %v1318
        %v4103 = vunpack.c.l.b16 %v1319
        %v4104 = vunpack.c.l.b16 %v1320
        %v4105 = vunpack.c.l.b16 %v1321
        %v4106 = vunpack.c.l.b16 %v1322
        %v4107 = vunpack.c.l.b16 %v1323
        %v4108 = vunpack.c.l.b16 %v1324
        %v4109 = vunpack.c.l.b16 %v1325
        %v4110 = vunpack.c.l.b16 %v1326
        %v4111 = vunpack.c.l.b16 %v1327
        %v4112 = vunpack.c.l.b16 %v1328
        %v4113 = vunpack.c.l.b16 %v1329
        %v4114 = vunpack.c.l.b16 %v1330
        %v4115 = vunpack.c.l.b16 %v1331
        %v4116 = vunpack.c.l.b16 %v1332
        %v4117 = vunpack.c.l.b16 %v1333
        %v4118 = vunpack.c.l.b16 %v1334
        %v4119 = vunpack.c.l.b16 %v1335
        %v4120 = vunpack.c.l.b16 %v1336
        %v4121 = vunpack.c.l.b16 %v1337
        %v4122 = vunpack.c.l.b16 %v1338
        %v4123 = vunpack.c.l.b16 %v1339
        %v4124 = vunpack.c.l.b16 %v1340
        %v4125 = vunpack.c.l.b16 %v1341
        %v4126 = vunpack.c.l.b16 %v1342
        %v4127 = vunpack.c.l.b16 %v1343
        %v4128 = vunpack.c.l.b16 %v1344
        %v4129 = vunpack.c.l.b16 %v1345
        %v4130 = vunpack.c.l.b16 %v1346
        %v4131 = vunpack.c.l.b16 %v1347
        %v4132 = vunpack.c.l.b16 %v1348
        %v4133 = vunpack.c.l.b16 %v1349
        %v4134 = vunpack.c.l.b16 %v1350
        %v4135 = vunpack.c.l.b16 %v1351
        %v4136 = vunpack.c.l.b16 %v1352
        %v4137 = vunpack.c.l.b16 %v1353
        %v4138 = vunpack.c.l.b16 %v1354
        %v4139 = vunpack.c.l.b16 %v1355
        %v4140 = vunpack.c.l.b16 %v1356
        %v4141 = vunpack.c.l.b16 %v1357
        %v4142 = vunpack.c.l.b16 %v1358
        %v4143 = vunpack.c.l.b16 %v1359
        %v4144 = vunpack.c.l.b16 %v1360
        %v4145 = vunpack.c.l.b16 %v1361
        %v4146 = vunpack.c.l.b16 %v1362
        %v4147 = vunpack.c.l.b16 %v1363
        %v4148 = vunpack.c.l.b16 %v1364
        %v4149 = vunpack.c.l.b16 %v1365
        %v4150 = vunpack.c.l.b16 %v1366
        %v4151 = vunpack.c.l.b16 %v1367
        %v4152 = vunpack.c.l.b16 %v1368
        %v4153 = vunpack.c.l.b16 %v1369
        %v4154 = vunpack.c.l.b16 %v1370
        %v4155 = vunpack.c.l.b16 %v1371
        %v4156 = vunpack.c.l.b16 %v1372
        %v4157 = vunpack.c.l.b16 %v1373
        %v4158 = vunpack.c.l.b16 %v1374
        %v4159 = vunpack.c.l.b16 %v1375
        %v4160 = vunpack.c.l.b16 %v1376
        %v4161 = vunpack.c.l.b16 %v1377
        %v4162 = vunpack.c.l.b16 %v1378
        %v4163 = vunpack.c.l.b16 %v1379
        %v4164 = vunpack.c.l.b16 %v1380
        %v4165 = vunpack.c.l.b16 %v1381
        %v4166 = vunpack.c.l.b16 %v1382
        %v4167 = vunpack.c.l.b16 %v1383
        %v4168 = vunpack.c.l.b16 %v1384
        %v4169 = vunpack.c.l.b16 %v1385
        %v4170 = vunpack.c.l.b16 %v1386
        %v4171 = vunpack.c.l.b16 %v1387
        %v4172 = vunpack.c.l.b16 %v1388
        %v4173 = vunpack.c.l.b16 %v1389
        %v4174 = vunpack.c.l.b16 %v1390
        %v4175 = vunpack.c.l.b16 %v1391
        %v4176 = vunpack.c.l.b16 %v1392
        %v4177 = vunpack.c.l.b16 %v1393
        %v4178 = vunpack.c.l.b16 %v1394
        %v4179 = vunpack.c.l.b16 %v1395
        %v4180 = vunpack.c.l.b16 %v1396
        %v4181 = vunpack.c.l.b16 %v1397
        %v4182 = vunpack.c.l.b16 %v1398
        %v4183 = vunpack.c.l.b16 %v1399
        %v4184 = vunpack.c.l.b16 %v1400
        %v4185 = vunpack.c.l.b16 %v1401
        %v4186 = vunpack.c.l.b16 %v1402
        %v4187 = vunpack.c.l.b16 %v1403
        %v4188 = vunpack.c.l.b16 %v1404
        %v4189 = vunpack.c.l.b16 %v1405
        %v4190 = vunpack.c.l.b16 %v1406
        %v4191 = vunpack.c.l.b16 %v1407
        %v4192 = vunpack.c.l.b16 %v1408
        %v4193 = vunpack.c.l.b16 %v1409
        %v4194 = vunpack.c.l.b16 %v1410
        %v4195 = vunpack.c.l.b16 %v1411
        %v4196 = vunpack.c.l.b16 %v1412
        %v4197 = vunpack.c.l.b16 %v1413
        %v4198 = vunpack.c.l.b16 %v1414
        %v4199 = vunpack.c.l.b16 %v1415
        %v4200 = vunpack.c.l.b16 %v1416
        %v4201 = vunpack.c.l.b16 %v1417
        %v4202 = vunpack.c.l.b16 %v1418
        %v4203 = vunpack.c.l.b16 %v1419
        %v4204 = vunpack.c.l.b16 %v1420
        %v4205 = vunpack.c.l.b16 %v1421
        %v4206 = vunpack.c.l.b16 %v1422
        %v4207 = vunpack.c.l.b16 %v1423
        %v4208 = vunpack.c.l.b16 %v1424
        %v4209 = vunpack.c.l.b16 %v1425
        %v4210 = vunpack.c.l.b16 %v1426
        %v4211 = vunpack.c.l.b16 %v1427
        %v4212 = vunpack.c.l.b16 %v1428
        %v4213 = vunpack.c.l.b16 %v1429
        %v4214 = vunpack.c.l.b16 %v1430
        %v4215 = vunpack.c.l.b16 %v1431
        %v4216 = vunpack.c.l.b16 %v1432
        %v4217 = vunpack.c.l.b16 %v1433
        %v4218 = vunpack.c.l.b16 %v1434
        %v4219 = vunpack.c.l.b16 %v1435
        %v4220 = vunpack.c.l.b16 %v1436
        %v4221 = vunpack.c.l.b16 %v1437
        %v4222 = vunpack.c.l.b16 %v1438
        %v4223 = vunpack.c.l.b16 %v1439
        %v4224 = vunpack.c.l.b16 %v1440
        %v4225 = vunpack.c.l.b16 %v1441
        %v4226 = vunpack.c.l.b16 %v1442
        %v4227 = vunpack.c.l.b16 %v1443
        %v4228 = vunpack.c.l.b16 %v1444
        %v4229 = vunpack.c.l.b16 %v1445
        %v4230 = vunpack.c.l.b16 %v1446
        %v4231 = vunpack.c.l.b16 %v1447
        %v4232 = vunpack.c.l.b16 %v1448
        %v4233 = vunpack.c.l.b16 %v1449
        %v4234 = vunpack.c.l.b16 %v1450
        %v4235 = vunpack.c.l.b16 %v1451
        %v4236 = vunpack.c.l.b16 %v1452
        %v4237 = vunpack.c.l.b16 %v1453
        %v4238 = vunpack.c.l.b16 %v1454
        %v4239 = vunpack.c.l.b16 %v1455
        %v4240 = vunpack.c.l.b16 %v1456
        %v4241 = vunpack.c.l.b16 %v1457
        %v4242 = vunpack.c.l.b16 %v1458
        %v4243 = vunpack.c.l.b16 %v1459
        %v4244 = vunpack.c.l.b16 %v1460
        %v4245 = vunpack.c.l.b16 %v1461
        %v4246 = vunpack.c.l.b16 %v1462
        %v4247 = vunpack.c.l.b16 %v1463
        %v4248 = vunpack.c.l.b16 %v1464
        %v4249 = vunpack.c.l.b16 %v1465
        %v4250 = vunpack.c.l.b16 %v1466
        %v4251 = vunpack.c.l.b16 %v1467
        %v4252 = vunpack.c.l.b16 %v1468
        %v4253 = vunpack.c.l.b16 %v1469
        %v4254 = vunpack.c.l.b16 %v1470
        %v4255 = vunpack.c.l.b16 %v1471
        %v4256 = vunpack.c.l.b16 %v1472
        %v4257 = vunpack.c.l.b16 %v1473
        %v4258 = vunpack.c.l.b16 %v1474
        %v4259 = vunpack.c.l.b16 %v1475
        %v4260 = vunpack.c.l.b16 %v1476
        %v4261 = vunpack.c.l.b16 %v1477
        %v4262 = vunpack.c.l.b16 %v1478
        %v4263 = vunpack.c.l.b16 %v1479
        %v4264 = vunpack.c.l.b16 %v1480
        %v4265 = vunpack.c.l.b16 %v1481
        %v4266 = vunpack.c.l.b16 %v1482
        %v4267 = vunpack.c.l.b16 %v1483
        %v4268 = vunpack.c.l.b16 %v1484
        %v4269 = vunpack.c.l.b16 %v1485
        %v4270 = vunpack.c.l.b16 %v1486
        %v4271 = vunpack.c.l.b16 %v1487
        %v4272 = vunpack.c.l.b16 %v1488
        %v4273 = vunpack.c.l.b16 %v1489
        %v4274 = vunpack.c.l.b16 %v1490
        %v4275 = vunpack.c.l.b16 %v1491
        %v4276 = vunpack.c.l.b16 %v1492
        %v4277 = vunpack.c.l.b16 %v1493
        %v4278 = vunpack.c.l.b16 %v1494
        %v4279 = vunpack.c.l.b16 %v1495
        %v4280 = vunpack.c.l.b16 %v1496
        %v4281 = vunpack.c.l.b16 %v1497
        %v4282 = vunpack.c.l.b16 %v1498
        %v4283 = vunpack.c.l.b16 %v1499
        %v4284 = vunpack.c.l.b16 %v1500
        %v4285 = vunpack.c.l.b16 %v1501
        %v4286 = vunpack.c.l.b16 %v1502
        %v4287 = vunpack.c.l.b16 %v1503
        %v4288 = vunpack.c.l.b16 %v1504
        %v4289 = vunpack.c.l.b16 %v1505
        %v4290 = vunpack.c.l.b16 %v1506
        %v4291 = vunpack.c.l.b16 %v1507
        %v4292 = vunpack.c.l.b16 %v1508
        %v4293 = vunpack.c.l.b16 %v1509
        %v4294 = vunpack.c.l.b16 %v1510
        %v4295 = vunpack.c.l.b16 %v1511
        %v4296 = vunpack.c.l.b16 %v1512
        %v4297 = vunpack.c.l.b16 %v1513
        %v4298 = vunpack.c.l.b16 %v1514
        %v4299 = vunpack.c.l.b16 %v1515
        %v4300 = vunpack.c.l.b16 %v1516
        %v4301 = vunpack.c.l.b16 %v1517
        %v4302 = vunpack.c.l.b16 %v1518
        %v4303 = vunpack.c.l.b16 %v1519
        %v4304 = vunpack.c.l.b16 %v1520
        %v4305 = vunpack.c.l.b16 %v1521
        %v4306 = vunpack.c.l.b16 %v1522
        %v4307 = vunpack.c.l.b16 %v1523
        %v4308 = vunpack.c.l.b16 %v1524
        %v4309 = vunpack.c.l.b16 %v1525
        %v4310 = vunpack.c.l.b16 %v1526
        %v4311 = vunpack.c.l.b16 %v1527
        %v4312 = vunpack.c.l.b16 %v1528
        %v4313 = vunpack.c.l.b16 %v1529
        %v4314 = vunpack.c.l.b16 %v1530
        %v4315 = vunpack.c.l.b16 %v1531
        %v4316 = vunpack.c.l.b16 %v1532
        %v4317 = vunpack.c.l.b16 %v1533
        %v4318 = vunpack.c.l.b16 %v1534
        %v4319 = vunpack.c.l.b16 %v1535
        %v4320 = vunpack.c.l.b16 %v1536
        %v4321 = vunpack.c.l.b16 %v1537
        %v4322 = vunpack.c.l.b16 %v1538
        %v4323 = vunpack.c.l.b16 %v1539
        %v4324 = vunpack.c.l.b16 %v1540
        %v4325 = vunpack.c.l.b16 %v1541
        %v4326 = vunpack.c.l.b16 %v1542
        %v4327 = vunpack.c.l.b16 %v1543
        %v4328 = vunpack.c.l.b16 %v1544
        %v4329 = vunpack.c.l.b16 %v1545
        %v4330 = vunpack.c.l.b16 %v1546
        %v4331 = vunpack.c.l.b16 %v1547
        %v4332 = vunpack.c.l.b16 %v1548
        %v4333 = vunpack.c.l.b16 %v1549
        %v4334 = vunpack.c.l.b16 %v1550
        %v4335 = vunpack.c.l.b16 %v1551
        %v4336 = vunpack.c.l.b16 %v1552
        %v4337 = vunpack.c.l.b16 %v1553
        %v4338 = vunpack.c.l.b16 %v1554
        %v4339 = vunpack.c.l.b16 %v1555
        %v4340 = vunpack.c.l.b16 %v1556
        %v4341 = vunpack.c.l.b16 %v1557
        %v4342 = vunpack.c.l.b16 %v1558
        %v4343 = vunpack.c.l.b16 %v1559
        %v4344 = vunpack.c.l.b16 %v1560
        %v4345 = vunpack.c.l.b16 %v1561
        %v4346 = vunpack.c.l.b16 %v1562
        %v4347 = vunpack.c.l.b16 %v1563
        %v4348 = vunpack.c.l.b16 %v1564
        %v4349 = vunpack.c.l.b16 %v1565
        %v4350 = vunpack.c.l.b16 %v1566
        %v4351 = vunpack.c.l.b16 %v1567
        %v4352 = vunpack.c.l.b16 %v1568
        %v4353 = vunpack.c.l.b16 %v1569
        %v4354 = vunpack.c.l.b16 %v1570
        %v4355 = vunpack.c.l.b16 %v1571
        %v4356 = vunpack.c.l.b16 %v1572
        %v4357 = vunpack.c.l.b16 %v1573
        %v4358 = vunpack.c.l.b16 %v1574
        %v4359 = vunpack.c.l.b16 %v1575
        %v4360 = vunpack.c.l.b16 %v1576
        %v4361 = vunpack.c.l.b16 %v1577
        %v4362 = vunpack.c.l.b16 %v1578
        %v4363 = vunpack.c.l.b16 %v1579
        %v4364 = vunpack.c.l.b16 %v1580
        %v4365 = vunpack.c.l.b16 %v1581
        %v4366 = vunpack.c.l.b16 %v1582
        %v4367 = vunpack.c.l.b16 %v1583
        %v4368 = vunpack.c.l.b16 %v1584
        %v4369 = vunpack.c.l.b16 %v1585
        %v4370 = vunpack.c.l.b16 %v1586
        %v4371 = vunpack.c.l.b16 %v1587
        %v4372 = vunpack.c.l.b16 %v1588
        %v4373 = vunpack.c.l.b16 %v1589
        %v4374 = vunpack.c.l.b16 %v1590
        %v4375 = vunpack.c.l.b16 %v1591
        %v4376 = vunpack.c.l.b16 %v1592
        %v4377 = vunpack.c.l.b16 %v1593
        %v4378 = vunpack.c.l.b16 %v1594
        %v4379 = vunpack.c.l.b16 %v1595
        %v4380 = vunpack.c.l.b16 %v1596
        %v4381 = vunpack.c.l.b16 %v1597
        %v4382 = vunpack.c.l.b16 %v1598
        %v4383 = vunpack.c.l.b16 %v1599
        %v4384 = vunpack.c.l.b16 %v1600
        %v4385 = vunpack.c.l.b16 %v1601
        %v4386 = vunpack.c.l.b16 %v1602
        %v4387 = vunpack.c.l.b16 %v1603
        %v4388 = vunpack.c.l.b16 %v1604
        %v4389 = vunpack.c.l.b16 %v1605
        %v4390 = vunpack.c.l.b16 %v1606
        %v4391 = vunpack.c.l.b16 %v1607
        %v4392 = vunpack.c.l.b16 %v1608
        %v4393 = vunpack.c.l.b16 %v1609
        %v4394 = vunpack.c.l.b16 %v1610
        %v4395 = vunpack.c.l.b16 %v1611
        %v4396 = vunpack.c.l.b16 %v1612
        %v4397 = vunpack.c.l.b16 %v1613
        %v4398 = vunpack.c.l.b16 %v1614
        %v4399 = vunpack.c.l.b16 %v1615
        %v4400 = vunpack.c.l.b16 %v1616
        %v4401 = vunpack.c.l.b16 %v1617
        %v4402 = vunpack.c.l.b16 %v1618
        %v4403 = vunpack.c.l.b16 %v1619
        %v4404 = vunpack.c.l.b16 %v1620
        %v4405 = vunpack.c.l.b16 %v1621
        %v4406 = vunpack.c.l.b16 %v1622
        %v4407 = vunpack.c.l.b16 %v1623
        %v4408 = vunpack.c.l.b16 %v1624
        %v4409 = vunpack.c.l.b16 %v1625
        %v4410 = vunpack.c.l.b16 %v1626
        %v4411 = vunpack.c.l.b16 %v1627
        %v4412 = vunpack.c.l.b16 %v1628
        %v4413 = vunpack.c.l.b16 %v1629
        %v4414 = vunpack.c.l.b16 %v1630
        %v4415 = vunpack.c.l.b16 %v1631
        %v4416 = vunpack.c.l.b16 %v1632
        %v4417 = vunpack.c.l.b16 %v1633
        %v4418 = vunpack.c.l.b16 %v1634
        %v4419 = vunpack.c.l.b16 %v1635
        %v4420 = vunpack.c.l.b16 %v1636
        %v4421 = vunpack.c.l.b16 %v1637
        %v4422 = vunpack.c.l.b16 %v1638
        %v4423 = vunpack.c.l.b16 %v1639
        %v4424 = vunpack.c.l.b16 %v1640
        %v4425 = vunpack.c.l.b16 %v1641
        %v4426 = vunpack.c.l.b16 %v1642
        %v4427 = vunpack.c.l.b16 %v1643
        %v4428 = vunpack.c.l.b16 %v1644
        %v4429 = vunpack.c.l.b16 %v1645
        %v4430 = vunpack.c.l.b16 %v1646
        %v4431 = vunpack.c.l.b16 %v1647
        %v4432 = vunpack.c.l.b16 %v1648
        %v4433 = vunpack.c.l.b16 %v1649
        %v4434 = vunpack.c.l.b16 %v1650
        %v4435 = vunpack.c.l.b16 %v1651
        %v4436 = vunpack.c.l.b16 %v1652
        %v4437 = vunpack.c.l.b16 %v1653
        %v4438 = vunpack.c.l.b16 %v1654
        %v4439 = vunpack.c.l.b16 %v1655
        %v4440 = vunpack.c.l.b16 %v1656
        %v4441 = vunpack.c.l.b16 %v1657
        %v4442 = vunpack.c.l.b16 %v1658
        %v4443 = vunpack.c.l.b16 %v1659
        %v4444 = vunpack.c.l.b16 %v1660
        %v4445 = vunpack.c.l.b16 %v1661
        %v4446 = vunpack.c.l.b16 %v1662
        %v4447 = vunpack.c.l.b16 %v1663
        %v4448 = vunpack.c.l.b16 %v1664
        %v4449 = vunpack.c.l.b16 %v1665
        %v4450 = vunpack.c.l.b16 %v1666
        %v4451 = vunpack.c.l.b16 %v1667
        %v4452 = vunpack.c.l.b16 %v1668
        %v4453 = vunpack.c.l.b16 %v1669
        %v4454 = vunpack.c.l.b16 %v1670
        %v4455 = vunpack.c.l.b16 %v1671
        %v4456 = vunpack.c.l.b16 %v1672
        %v4457 = vunpack.c.l.b16 %v1673
        %v4458 = vunpack.c.l.b16 %v1674
        %v4459 = vunpack.c.l.b16 %v1675
        %v4460 = vunpack.c.l.b16 %v1676
        %v4461 = vunpack.c.l.b16 %v1677
        %v4462 = vunpack.c.l.b16 %v1678
        %v4463 = vunpack.c.l.b16 %v1679
        %v4464 = vunpack.c.l.b16 %v1680
        %v4465 = vunpack.c.l.b16 %v1681
        %v4466 = vunpack.c.l.b16 %v1682
        %v4467 = vunpack.c.l.b16 %v1683
        %v4468 = vunpack.c.l.b16 %v1684
        %v4469 = vunpack.c.l.b16 %v1685
        %v4470 = vunpack.c.l.b16 %v1686
        %v4471 = vunpack.c.l.b16 %v1687
        %v4472 = vunpack.c.l.b16 %v1688
        %v4473 = vunpack.c.l.b16 %v1689
        %v4474 = vunpack.c.l.b16 %v1690
        %v4475 = vunpack.c.l.b16 %v1691
        %v4476 = vunpack.c.l.b16 %v1692
        %v4477 = vunpack.c.l.b16 %v1693
        %v4478 = vunpack.c.l.b16 %v1694
        %v4479 = vunpack.c.l.b16 %v1695
        %v4480 = vunpack.c.l.b16 %v1696
        %v4481 = vunpack.c.l.b16 %v1697
        %v4482 = vunpack.c.l.b16 %v1698
        %v4483 = vunpack.c.l.b16 %v1699
        %v4484 = vunpack.c.l.b16 %v1700
        %v4485 = vunpack.c.l.b16 %v1701
        %v4486 = vunpack.c.l.b16 %v1702
        %v4487 = vunpack.c.l.b16 %v1703
        %v4488 = vunpack.c.l.b16 %v1704
        %v4489 = vunpack.c.l.b16 %v1705
        %v4490 = vunpack.c.l.b16 %v1706
        %v4491 = vunpack.c.l.b16 %v1707
        %v4492 = vunpack.c.l.b16 %v1708
        %v4493 = vunpack.c.l.b16 %v1709
        %v4494 = vunpack.c.l.b16 %v1710
        %v4495 = vunpack.c.l.b16 %v1711
        %v4496 = vunpack.c.l.b16 %v1712
        %v4497 = vunpack.c.l.b16 %v1713
        %v4498 = vunpack.c.l.b16 %v1714
        %v4499 = vunpack.c.l.b16 %v1715
        %v4500 = vunpack.c.l.b16 %v1716
        %v4501 = vunpack.c.l.b16 %v1717
        %v4502 = vunpack.c.l.b16 %v1718
        %v4503 = vunpack.c.l.b16 %v1719
        %v4504 = vunpack.c.l.b16 %v1720
        %v4505 = vunpack.c.l.b16 %v1721
        %v4506 = vunpack.c.l.b16 %v1722
        %v4507 = vunpack.c.l.b16 %v1723
        %v4508 = vunpack.c.l.b16 %v1724
        %v4509 = vunpack.c.l.b16 %v1725
        %v4510 = vunpack.c.l.b16 %v1726
        %v4511 = vunpack.c.l.b16 %v1727
        %v4512 = vunpack.c.l.b16 %v1728
        %v4513 = vunpack.c.l.b16 %v1729
        %v4514 = vunpack.c.l.b16 %v1730
        %v4515 = vunpack.c.l.b16 %v1731
        %v4516 = vunpack.c.l.b16 %v1732
        %v4517 = vunpack.c.l.b16 %v1733
        %v4518 = vunpack.c.l.b16 %v1734
        %v4519 = vunpack.c.l.b16 %v1735
        %v4520 = vunpack.c.l.b16 %v1736
        %v4521 = vunpack.c.l.b16 %v1737
        %v4522 = vunpack.c.l.b16 %v1738
        %v4523 = vunpack.c.l.b16 %v1739
        %v4524 = vunpack.c.l.b16 %v1740
        %v4525 = vunpack.c.l.b16 %v1741
        %v4526 = vunpack.c.l.b16 %v1742
        %v4527 = vunpack.c.l.b16 %v1743
        %v4528 = vunpack.c.l.b16 %v1744
        %v4529 = vunpack.c.l.b16 %v1745
        %v4530 = vunpack.c.l.b16 %v1746
        %v4531 = vunpack.c.l.b16 %v1747
        %v4532 = vunpack.c.l.b16 %v1748
        %v4533 = vunpack.c.l.b16 %v1749
        %v4534 = vunpack.c.l.b16 %v1750
        %v4535 = vunpack.c.l.b16 %v1751
        %v4536 = vunpack.c.l.b16 %v1752
        %v4537 = vunpack.c.l.b16 %v1753
        %v4538 = vunpack.c.l.b16 %v1754
        %v4539 = vunpack.c.l.b16 %v1755
        %v4540 = vunpack.c.l.b16 %v1756
        %v4541 = vunpack.c.l.b16 %v1757
        %v4542 = vunpack.c.l.b16 %v1758
        %v4543 = vunpack.c.l.b16 %v1759
        %v4544 = vunpack.c.l.b16 %v1760
        %v4545 = vunpack.c.l.b16 %v1761
        %v4546 = vunpack.c.l.b16 %v1762
        %v4547 = vunpack.c.l.b16 %v1763
        %v4548 = vunpack.c.l.b16 %v1764
        %v4549 = vunpack.c.l.b16 %v1765
        %v4550 = vunpack.c.l.b16 %v1766
        %v4551 = vunpack.c.l.b16 %v1767
        %v4552 = vunpack.c.l.b16 %v1768
        %v4553 = vunpack.c.l.b16 %v1769
        %v4554 = vunpack.c.l.b16 %v1770
        %v4555 = vunpack.c.l.b16 %v1771
        %v4556 = vunpack.c.l.b16 %v1772
        %v4557 = vunpack.c.l.b16 %v1773
        %v4558 = vunpack.c.l.b16 %v1774
        %v4559 = vunpack.c.l.b16 %v1775
        %v4560 = vunpack.c.l.b16 %v1776
        %v4561 = vunpack.c.l.b16 %v1777
        %v4562 = vunpack.c.l.b16 %v1778
        %v4563 = vunpack.c.l.b16 %v1779
        %v4564 = vunpack.c.l.b16 %v1780
        %v4565 = vunpack.c.l.b16 %v1781
        %v4566 = vunpack.c.l.b16 %v1782
        %v4567 = vunpack.c.l.b16 %v1783
        %v4568 = vunpack.c.l.b16 %v1784
        %v4569 = vunpack.c.l.b16 %v1785
        %v4570 = vunpack.c.l.b16 %v1786
        %v4571 = vunpack.c.l.b16 %v1787
        %v4572 = vunpack.c.l.b16 %v1788
        %v4573 = vunpack.c.l.b16 %v1789
        %v4574 = vunpack.c.l.b16 %v1790
        %v4575 = vunpack.c.l.b16 %v1791
        %v4576 = vunpack.c.l.b16 %v1792
        %v4577 = vunpack.c.l.b16 %v1793
        %v4578 = vunpack.c.l.b16 %v1794
        %v4579 = vunpack.c.l.b16 %v1795
        %v4580 = vunpack.c.l.b16 %v1796
        %v4581 = vunpack.c.l.b16 %v1797
        %v4582 = vunpack.c.l.b16 %v1798
        %v4583 = vunpack.c.l.b16 %v1799
        %v4584 = vunpack.c.l.b16 %v1800
        %v4585 = vunpack.c.l.b16 %v1801
        %v4586 = vunpack.c.l.b16 %v1802
        %v4587 = vunpack.c.l.b16 %v1803
        %v4588 = vunpack.c.l.b16 %v1804
        %v4589 = vunpack.c.l.b16 %v1805
        %v4590 = vunpack.c.l.b16 %v1806
        %v4591 = vunpack.c.l.b16 %v1807
        %v4592 = vunpack.c.l.b16 %v1808
        %v4593 = vunpack.c.l.b16 %v1809
        %v4594 = vunpack.c.l.b16 %v1810
        %v4595 = vunpack.c.l.b16 %v1811
        %v4596 = vunpack.c.l.b16 %v1812
        %v4597 = vunpack.c.l.b16 %v1813
        %v4598 = vunpack.c.l.b16 %v1814
        %v4599 = vunpack.c.l.b16 %v1815
        %v4600 = vunpack.c.l.b16 %v1816
        %v4601 = vunpack.c.l.b16 %v1817
        %v4602 = vunpack.c.l.b16 %v1818
        %v4603 = vunpack.c.l.b16 %v1819
        %v4604 = vunpack.c.l.b16 %v1820
        %v4605 = vunpack.c.l.b16 %v1821
        %v4606 = vunpack.c.l.b16 %v1822
        %v4607 = vunpack.c.l.b16 %v1823
        %v4608 = vunpack.c.l.b16 %v1824
        %v4609 = vunpack.c.l.b16 %v1825
        %v4610 = vunpack.c.l.b16 %v1826
        %v4611 = vunpack.c.l.b16 %v1827
        %v4612 = vunpack.c.l.b16 %v1828
        %v4613 = vunpack.c.l.b16 %v1829
        %v4614 = vunpack.c.l.b16 %v1830
        %v4615 = vunpack.c.l.b16 %v1831
        %v4616 = vunpack.c.l.b16 %v1832
        %v4617 = vunpack.c.l.b16 %v1833
        %v4618 = vunpack.c.l.b16 %v1834
        %v4619 = vunpack.c.l.b16 %v1835
        %v4620 = vunpack.c.l.b16 %v1836
        %v4621 = vunpack.c.l.b16 %v1837
        %v4622 = vunpack.c.l.b16 %v1838
        %v4623 = vunpack.c.l.b16 %v1839
        %v4624 = vunpack.c.l.b16 %v1840
        %v4625 = vunpack.c.l.b16 %v1841
        %v4626 = vunpack.c.l.b16 %v1842
        %v4627 = vunpack.c.l.b16 %v1843
        %v4628 = vunpack.c.l.b16 %v1844
        %v4629 = vunpack.c.l.b16 %v1845
        %v4630 = vunpack.c.l.b16 %v1846
        %v4631 = vunpack.c.l.b16 %v1847
        %v4632 = vunpack.c.l.b16 %v1848
        %v4633 = vunpack.c.l.b16 %v1849
        %v4634 = vunpack.c.l.b16 %v1850
        %v4635 = vunpack.c.l.b16 %v1851
        %v4636 = vunpack.c.l.b16 %v1852
        %v4637 = vunpack.c.l.b16 %v1853
        %v4638 = vunpack.c.l.b16 %v1854
        %v4639 = vunpack.c.l.b16 %v1855
        %v4640 = vunpack.c.l.b16 %v1856
        %v4641 = vunpack.c.l.b16 %v1857
        %v4642 = vunpack.c.l.b16 %v1858
        %v4643 = vunpack.c.l.b16 %v1859
        %v4644 = vunpack.c.l.b16 %v1860
        %v4645 = vunpack.c.l.b16 %v1861
        %v4646 = vunpack.c.l.b16 %v1862
        %v4647 = vunpack.c.l.b16 %v1863
        %v4648 = vunpack.c.l.b16 %v1864
        %v4649 = vunpack.c.l.b16 %v1865
        %v4650 = vunpack.c.l.b16 %v1866
        %v4651 = vunpack.c.l.b16 %v1867
        %v4652 = vunpack.c.l.b16 %v1868
        %v4653 = vunpack.c.l.b16 %v1869
        %v4654 = vunpack.c.l.b16 %v1870
        %v4655 = vunpack.c.l.b16 %v1871
        %v4656 = vunpack.c.l.b16 %v1872
        %v4657 = vunpack.c.l.b16 %v1873
        %v4658 = vunpack.c.l.b16 %v1874
        %v4659 = vunpack.c.l.b16 %v1875
        %v4660 = vunpack.c.l.b16 %v1876
        %v4661 = vunpack.c.l.b16 %v1877
        %v4662 = vunpack.c.l.b16 %v1878
        %v4663 = vunpack.c.l.b16 %v1879
        %v4664 = vunpack.c.l.b16 %v1880
        %v4665 = vunpack.c.l.b16 %v1881
        %v4666 = vunpack.c.l.b16 %v1882
        %v4667 = vunpack.c.l.b16 %v1883
        %v4668 = vunpack.c.l.b16 %v1884
        %v4669 = vunpack.c.l.b16 %v1885
        %v4670 = vunpack.c.l.b16 %v1886
        %v4671 = vunpack.c.l.b16 %v1887
        %v4672 = vunpack.c.l.b16 %v1888
        %v4673 = vunpack.c.l.b16 %v1889
        %v4674 = vunpack.c.l.b16 %v1890
        %v4675 = vunpack.c.l.b16 %v1891
        %v4676 = vunpack.c.l.b16 %v1892
        %v4677 = vunpack.c.l.b16 %v1893
        %v4678 = vunpack.c.l.b16 %v1894
        %v4679 = vunpack.c.l.b16 %v1895
        %v4680 = vunpack.c.l.b16 %v1896
        %v4681 = vunpack.c.l.b16 %v1897
        %v4682 = vunpack.c.l.b16 %v1898
        %v4683 = vunpack.c.l.b16 %v1899
        %v4684 = vunpack.c.l.b16 %v1900
        %v4685 = vunpack.c.l.b16 %v1901
        %v4686 = vunpack.c.l.b16 %v1902
        %v4687 = vunpack.c.l.b16 %v1903
        %v4688 = vunpack.c.l.b16 %v1904
        %v4689 = vunpack.c.l.b16 %v1905
        %v4690 = vunpack.c.l.b16 %v1906
        %v4691 = vunpack.c.l.b16 %v1907
        %v4692 = vunpack.c.l.b16 %v1908
        %v4693 = vunpack.c.l.b16 %v1909
        %v4694 = vunpack.c.l.b16 %v1910
        %v4695 = vunpack.c.l.b16 %v1911
        %v4696 = vunpack.c.l.b16 %v1912
        %v4697 = vunpack.c.l.b16 %v1913
        %v4698 = vunpack.c.l.b16 %v1914
        %v4699 = vunpack.c.l.b16 %v1915
        %v4700 = vunpack.c.l.b16 %v1916
        %v4701 = vunpack.c.l.b16 %v1917
        %v4702 = vunpack.c.l.b16 %v1918
        %v4703 = vunpack.c.l.b16 %v1919
        %v4704 = vunpack.c.l.b16 %v1920
        %v4705 = vunpack.c.l.b16 %v1921
        %v4706 = vunpack.c.l.b16 %v1922
        %v4707 = vunpack.c.l.b16 %v1923
        %v4708 = vunpack.c.l.b16 %v1924
        %v4709 = vunpack.c.l.b16 %v1925
        %v4710 = vunpack.c.l.b16 %v1926
        %v4711 = vunpack.c.l.b16 %v1927
        %v4712 = vunpack.c.l.b16 %v1928
        %v4713 = vunpack.c.l.b16 %v1929
        %v4714 = vunpack.c.l.b16 %v1930
        %v4715 = vunpack.c.l.b16 %v1931
        %v4716 = vunpack.c.l.b16 %v1932
        %v4717 = vunpack.c.l.b16 %v1933
        %v4718 = vunpack.c.l.b16 %v1934
        %v4719 = vunpack.c.l.b16 %v1935
        %v4720 = vunpack.c.l.b16 %v1936
        %v4721 = vunpack.c.l.b16 %v1937
        %v4722 = vunpack.c.l.b16 %v1938
        %v4723 = vunpack.c.l.b16 %v1939
        %v4724 = vpack.c.b16 %v3333, %v3332
        %v4725 = vpack.c.b16 %v3335, %v3334
        %v4726 = vpack.c.b16 %v3337, %v3336
        %v4727 = vpack.c.b16 %v3339, %v3338
        %v4728 = vpack.c.b16 %v3341, %v3340
        %v4729 = vpack.c.b16 %v3343, %v3342
        %v4730 = vpack.c.b16 %v3345, %v3344
        %v4731 = vpack.c.b16 %v3347, %v3346
        %v4732 = vpack.c.b16 %v3349, %v3348
        %v4733 = vpack.c.b16 %v3351, %v3350
        %v4734 = vpack.c.b16 %v3353, %v3352
        %v4735 = vpack.c.b16 %v3355, %v3354
        %v4736 = vpack.c.b16 %v3357, %v3356
        %v4737 = vpack.c.b16 %v3359, %v3358
        %v4738 = vpack.c.b16 %v3361, %v3360
        %v4739 = vpack.c.b16 %v3363, %v3362
        %v4740 = vpack.c.b16 %v3365, %v3364
        %v4741 = vpack.c.b16 %v3367, %v3366
        %v4742 = vpack.c.b16 %v3369, %v3368
        %v4743 = vpack.c.b16 %v3371, %v3370
        %v4744 = vpack.c.b16 %v3373, %v3372
        %v4745 = vpack.c.b16 %v3375, %v3374
        %v4746 = vpack.c.b16 %v3377, %v3376
        %v4747 = vpack.c.b16 %v3379, %v3378
        %v4748 = vpack.c.b16 %v3381, %v3380
        %v4749 = vpack.c.b16 %v3383, %v3382
        %v4750 = vpack.c.b16 %v3385, %v3384
        %v4751 = vpack.c.b16 %v3387, %v3386
        %v4752 = vpack.c.b16 %v3389, %v3388
        %v4753 = vpack.c.b16 %v3391, %v3390
        %v4754 = vpack.c.b16 %v3393, %v3392
        %v4755 = vpack.c.b16 %v3395, %v3394
        %v4756 = vpack.c.b16 %v3397, %v3396
        %v4757 = vpack.c.b16 %v3399, %v3398
        %v4758 = vpack.c.b16 %v3401, %v3400
        %v4759 = vpack.c.b16 %v3403, %v3402
        %v4760 = vpack.c.b16 %v3405, %v3404
        %v4761 = vpack.c.b16 %v3407, %v3406
        %v4762 = vpack.c.b16 %v3409, %v3408
        %v4763 = vpack.c.b16 %v3411, %v3410
        %v4764 = vpack.c.b16 %v3413, %v3412
        %v4765 = vpack.c.b16 %v3415, %v3414
        %v4766 = vpack.c.b16 %v3417, %v3416
        %v4767 = vpack.c.b16 %v3419, %v3418
        %v4768 = vpack.c.b16 %v3421, %v3420
        %v4769 = vpack.c.b16 %v3423, %v3422
        %v4770 = vpack.c.b16 %v3425, %v3424
        %v4771 = vpack.c.b16 %v3427, %v3426
        %v4772 = vpack.c.b16 %v3429, %v3428
        %v4773 = vpack.c.b16 %v3431, %v3430
        %v4774 = vpack.c.b16 %v3433, %v3432
        %v4775 = vpack.c.b16 %v3435, %v3434
        %v4776 = vpack.c.b16 %v3437, %v3436
        %v4777 = vpack.c.b16 %v3439, %v3438
        %v4778 = vpack.c.b16 %v3441, %v3440
        %v4779 = vpack.c.b16 %v3443, %v3442
        %v4780 = vpack.c.b16 %v3445, %v3444
        %v4781 = vpack.c.b16 %v3447, %v3446
        %v4782 = vpack.c.b16 %v3449, %v3448
        %v4783 = vpack.c.b16 %v3451, %v3450
        %v4784 = vpack.c.b16 %v3453, %v3452
        %v4785 = vpack.c.b16 %v3455, %v3454
        %v4786 = vpack.c.b16 %v3457, %v3456
        %v4787 = vpack.c.b16 %v3459, %v3458
        %v4788 = vpack.c.b16 %v3461, %v3460
        %v4789 = vpack.c.b16 %v3463, %v3462
        %v4790 = vpack.c.b16 %v3465, %v3464
        %v4791 = vpack.c.b16 %v3467, %v3466
        %v4792 = vpack.c.b16 %v3469, %v3468
        %v4793 = vpack.c.b16 %v3471, %v3470
        %v4794 = vpack.c.b16 %v3473, %v3472
        %v4795 = vpack.c.b16 %v3475, %v3474
        %v4796 = vpack.c.b16 %v3477, %v3476
        %v4797 = vpack.c.b16 %v3479, %v3478
        %v4798 = vpack.c.b16 %v3481, %v3480
        %v4799 = vpack.c.b16 %v3483, %v3482
        %v4800 = vpack.c.b16 %v3485, %v3484
        %v4801 = vpack.c.b16 %v3487, %v3486
        %v4802 = vpack.c.b16 %v3489, %v3488
        %v4803 = vpack.c.b16 %v3491, %v3490
        %v4804 = vpack.c.b16 %v3493, %v3492
        %v4805 = vpack.c.b16 %v3495, %v3494
        %v4806 = vpack.c.b16 %v3497, %v3496
        %v4807 = vpack.c.b16 %v3499, %v3498
        %v4808 = vpack.c.b16 %v3501, %v3500
        %v4809 = vpack.c.b16 %v3503, %v3502
        %v4810 = vpack.c.b16 %v3505, %v3504
        %v4811 = vpack.c.b16 %v3507, %v3506
        %v4812 = vpack.c.b16 %v3509, %v3508
        %v4813 = vpack.c.b16 %v3511, %v3510
        %v4814 = vpack.c.b16 %v3513, %v3512
        %v4815 = vpack.c.b16 %v3515, %v3514
        %v4816 = vpack.c.b16 %v3517, %v3516
        %v4817 = vpack.c.b16 %v3519, %v3518
        %v4818 = vpack.c.b16 %v3521, %v3520
        %v4819 = vpack.c.b16 %v3523, %v3522
        %v4820 = vpack.c.b16 %v3525, %v3524
        %v4821 = vpack.c.b16 %v3527, %v3526
        %v4822 = vpack.c.b16 %v3529, %v3528
        %v4823 = vpack.c.b16 %v3531, %v3530
        %v4824 = vpack.c.b16 %v3533, %v3532
        %v4825 = vpack.c.b16 %v3535, %v3534
        %v4826 = vpack.c.b16 %v3537, %v3536
        %v4827 = vpack.c.b16 %v3539, %v3538
        %v4828 = vpack.c.b16 %v3541, %v3540
        %v4829 = vpack.c.b16 %v3543, %v3542
        %v4830 = vpack.c.b16 %v3545, %v3544
        %v4831 = vpack.c.b16 %v3547, %v3546
        %v4832 = vpack.c.b16 %v3549, %v3548
        %v4833 = vpack.c.b16 %v3551, %v3550
        %v4834 = vpack.c.b16 %v3553, %v3552
        %v4835 = vpack.c.b16 %v3555, %v3554
        %v4836 = vpack.c.b16 %v3557, %v3556
        %v4837 = vpack.c.b16 %v3559, %v3558
        %v4838 = vpack.c.b16 %v3561, %v3560
        %v4839 = vpack.c.b16 %v3563, %v3562
        %v4840 = vpack.c.b16 %v3565, %v3564
        %v4841 = vpack.c.b16 %v3567, %v3566
        %v4842 = vpack.c.b16 %v3569, %v3568
        %v4843 = vpack.c.b16 %v3571, %v3570
        %v4844 = vpack.c.b16 %v3573, %v3572
        %v4845 = vpack.c.b16 %v3575, %v3574
        %v4846 = vpack.c.b16 %v3577, %v3576
        %v4847 = vpack.c.b16 %v3579, %v3578
        %v4848 = vpack.c.b16 %v3581, %v3580
        %v4849 = vpack.c.b16 %v3583, %v3582
        %v4850 = vpack.c.b16 %v3585, %v3584
        %v4851 = vpack.c.b16 %v3587, %v3586
        %v4852 = vpack.c.b16 %v3589, %v3588
        %v4853 = vpack.c.b16 %v3591, %v3590
        %v4854 = vpack.c.b16 %v3593, %v3592
        %v4855 = vpack.c.b16 %v3595, %v3594
        %v4856 = vpack.c.b16 %v3597, %v3596
        %v4857 = vpack.c.b16 %v3599, %v3598
        %v4858 = vpack.c.b16 %v3601, %v3600
        %v4859 = vpack.c.b16 %v3603, %v3602
        %v4860 = vpack.c.b16 %v3605, %v3604
        %v4861 = vpack.c.b16 %v3607, %v3606
        %v4862 = vpack.c.b16 %v3609, %v3608
        %v4863 = vpack.c.b16 %v3611, %v3610
        %v4864 = vpack.c.b16 %v3613, %v3612
        %v4865 = vpack.c.b16 %v3615, %v3614
        %v4866 = vpack.c.b16 %v3617, %v3616
        %v4867 = vpack.c.b16 %v3619, %v3618
        %v4868 = vpack.c.b16 %v3621, %v3620
        %v4869 = vpack.c.b16 %v3623, %v3622
        %v4870 = vpack.c.b16 %v3625, %v3624
        %v4871 = vpack.c.b16 %v3627, %v3626
        %v4872 = vpack.c.b16 %v3629, %v3628
        %v4873 = vpack.c.b16 %v3631, %v3630
        %v4874 = vpack.c.b16 %v3633, %v3632
        %v4875 = vpack.c.b16 %v3635, %v3634
        %v4876 = vpack.c.b16 %v3637, %v3636
        %v4877 = vpack.c.b16 %v3639, %v3638
        %v4878 = vpack.c.b16 %v3641, %v3640
        %v4879 = vpack.c.b16 %v3643, %v3642
        %v4880 = vpack.c.b16 %v3645, %v3644
        %v4881 = vpack.c.b16 %v3647, %v3646
        %v4882 = vpack.c.b16 %v3649, %v3648
        %v4883 = vpack.c.b16 %v3651, %v3650
        %v4884 = vpack.c.b16 %v3653, %v3652
        %v4885 = vpack.c.b16 %v3655, %v3654
        %v4886 = vpack.c.b16 %v3657, %v3656
        %v4887 = vpack.c.b16 %v3659, %v3658
        %v4888 = vpack.c.b16 %v3661, %v3660
        %v4889 = vpack.c.b16 %v3663, %v3662
        %v4890 = vpack.c.b16 %v3665, %v3664
        %v4891 = vpack.c.b16 %v3667, %v3666
        %v4892 = vpack.c.b16 %v3669, %v3668
        %v4893 = vpack.c.b16 %v3671, %v3670
        %v4894 = vpack.c.b16 %v3673, %v3672
        %v4895 = vpack.c.b16 %v3675, %v3674
        %v4896 = vpack.c.b16 %v3677, %v3676
        %v4897 = vpack.c.b16 %v3679, %v3678
        %v4898 = vpack.c.b16 %v3681, %v3680
        %v4899 = vpack.c.b16 %v3683, %v3682
        %v4900 = vpack.c.b16 %v3685, %v3684
        %v4901 = vpack.c.b16 %v3687, %v3686
        %v4902 = vpack.c.b16 %v3689, %v3688
        %v4903 = vpack.c.b16 %v3691, %v3690
        %v4904 = vpack.c.b16 %v3693, %v3692
        %v4905 = vpack.c.b16 %v3695, %v3694
        %v4906 = vpack.c.b16 %v3697, %v3696
        %v4907 = vpack.c.b16 %v3699, %v3698
        %v4908 = vpack.c.b16 %v3701, %v3700
        %v4909 = vpack.c.b16 %v3703, %v3702
        %v4910 = vpack.c.b16 %v3705, %v3704
        %v4911 = vpack.c.b16 %v3707, %v3706
        %v4912 = vpack.c.b16 %v3709, %v3708
        %v4913 = vpack.c.b16 %v3711, %v3710
        %v4914 = vpack.c.b16 %v3713, %v3712
        %v4915 = vpack.c.b16 %v3715, %v3714
        %v4916 = vpack.c.b16 %v3717, %v3716
        %v4917 = vpack.c.b16 %v3719, %v3718
        %v4918 = vpack.c.b16 %v3721, %v3720
        %v4919 = vpack.c.b16 %v3723, %v3722
        %v4920 = vpack.c.b16 %v3725, %v3724
        %v4921 = vpack.c.b16 %v3727, %v3726
        %v4922 = vpack.c.b16 %v3729, %v3728
        %v4923 = vpack.c.b16 %v3731, %v3730
        %v4924 = vpack.c.b16 %v3733, %v3732
        %v4925 = vpack.c.b16 %v3735, %v3734
        %v4926 = vpack.c.b16 %v3737, %v3736
        %v4927 = vpack.c.b16 %v3739, %v3738
        %v4928 = vpack.c.b16 %v3741, %v3740
        %v4929 = vpack.c.b16 %v3743, %v3742
        %v4930 = vpack.c.b16 %v3745, %v3744
        %v4931 = vpack.c.b16 %v3747, %v3746
        %v4932 = vpack.c.b16 %v3749, %v3748
        %v4933 = vpack.c.b16 %v3751, %v3750
        %v4934 = vpack.c.b16 %v3753, %v3752
        %v4935 = vpack.c.b16 %v3755, %v3754
        %v4936 = vpack.c.b16 %v3757, %v3756
        %v4937 = vpack.c.b16 %v3759, %v3758
        %v4938 = vpack.c.b16 %v3761, %v3760
        %v4939 = vpack.c.b16 %v3763, %v3762
        %v4940 = vpack.c.b16 %v3765, %v3764
        %v4941 = vpack.c.b16 %v3767, %v3766
        %v4942 = vpack.c.b16 %v3769, %v3768
        %v4943 = vpack.c.b16 %v3771, %v3770
        %v4944 = vpack.c.b16 %v3773, %v3772
        %v4945 = vpack.c.b16 %v3775, %v3774
        %v4946 = vpack.c.b16 %v3777, %v3776
        %v4947 = vpack.c.b16 %v3779, %v3778
        %v4948 = vpack.c.b16 %v3781, %v3780
        %v4949 = vpack.c.b16 %v3783, %v3782
        %v4950 = vpack.c.b16 %v3785, %v3784
        %v4951 = vpack.c.b16 %v3787, %v3786
        %v4952 = vpack.c.b16 %v3789, %v3788
        %v4953 = vpack.c.b16 %v3791, %v3790
        %v4954 = vpack.c.b16 %v3793, %v3792
        %v4955 = vpack.c.b16 %v3795, %v3794
        %v4956 = vpack.c.b16 %v3797, %v3796
        %v4957 = vpack.c.b16 %v3799, %v3798
        %v4958 = vpack.c.b16 %v3801, %v3800
        %v4959 = vpack.c.b16 %v3803, %v3802
        %v4960 = vpack.c.b16 %v3805, %v3804
        %v4961 = vpack.c.b16 %v3807, %v3806
        %v4962 = vpack.c.b16 %v3809, %v3808
        %v4963 = vpack.c.b16 %v3811, %v3810
        %v4964 = vpack.c.b16 %v3813, %v3812
        %v4965 = vpack.c.b16 %v3815, %v3814
        %v4966 = vpack.c.b16 %v3817, %v3816
        %v4967 = vpack.c.b16 %v3819, %v3818
        %v4968 = vpack.c.b16 %v3821, %v3820
        %v4969 = vpack.c.b16 %v3823, %v3822
        %v4970 = vpack.c.b16 %v3825, %v3824
        %v4971 = vpack.c.b16 %v3827, %v3826
        %v4972 = vpack.c.b16 %v3829, %v3828
        %v4973 = vpack.c.b16 %v3831, %v3830
        %v4974 = vpack.c.b16 %v3833, %v3832
        %v4975 = vpack.c.b16 %v3835, %v3834
        %v4976 = vpack.c.b16 %v3837, %v3836
        %v4977 = vpack.c.b16 %v3839, %v3838
        %v4978 = vpack.c.b16 %v3841, %v3840
        %v4979 = vpack.c.b16 %v3843, %v3842
        %v4980 = vpack.c.b16 %v3845, %v3844
        %v4981 = vpack.c.b16 %v3847, %v3846
        %v4982 = vpack.c.b16 %v3849, %v3848
        %v4983 = vpack.c.b16 %v3851, %v3850
        %v4984 = vpack.c.b16 %v3853, %v3852
        %v4985 = vpack.c.b16 %v3855, %v3854
        %v4986 = vpack.c.b16 %v3857, %v3856
        %v4987 = vpack.c.b16 %v3859, %v3858
        %v4988 = vpack.c.b16 %v3861, %v3860
        %v4989 = vpack.c.b16 %v3863, %v3862
        %v4990 = vpack.c.b16 %v3865, %v3864
        %v4991 = vpack.c.b16 %v3867, %v3866
        %v4992 = vpack.c.b16 %v3869, %v3868
        %v4993 = vpack.c.b16 %v3871, %v3870
        %v4994 = vpack.c.b16 %v3873, %v3872
        %v4995 = vpack.c.b16 %v3875, %v3874
        %v4996 = vpack.c.b16 %v3877, %v3876
        %v4997 = vpack.c.b16 %v3879, %v3878
        %v4998 = vpack.c.b16 %v3881, %v3880
        %v4999 = vpack.c.b16 %v3883, %v3882
        %v5000 = vpack.c.b16 %v3885, %v3884
        %v5001 = vpack.c.b16 %v3887, %v3886
        %v5002 = vpack.c.b16 %v3889, %v3888
        %v5003 = vpack.c.b16 %v3891, %v3890
        %v5004 = vpack.c.b16 %v3893, %v3892
        %v5005 = vpack.c.b16 %v3895, %v3894
        %v5006 = vpack.c.b16 %v3897, %v3896
        %v5007 = vpack.c.b16 %v3899, %v3898
        %v5008 = vpack.c.b16 %v3901, %v3900
        %v5009 = vpack.c.b16 %v3903, %v3902
        %v5010 = vpack.c.b16 %v3905, %v3904
        %v5011 = vpack.c.b16 %v3907, %v3906
        %v5012 = vpack.c.b16 %v3909, %v3908
        %v5013 = vpack.c.b16 %v3911, %v3910
        %v5014 = vpack.c.b16 %v3913, %v3912
        %v5015 = vpack.c.b16 %v3915, %v3914
        %v5016 = vpack.c.b16 %v3917, %v3916
        %v5017 = vpack.c.b16 %v3919, %v3918
        %v5018 = vpack.c.b16 %v3921, %v3920
        %v5019 = vpack.c.b16 %v3923, %v3922
        %v5020 = vpack.c.b16 %v3925, %v3924
        %v5021 = vpack.c.b16 %v3927, %v3926
        %v5022 = vpack.c.b16 %v3929, %v3928
        %v5023 = vpack.c.b16 %v3931, %v3930
        %v5024 = vpack.c.b16 %v3933, %v3932
        %v5025 = vpack.c.b16 %v3935, %v3934
        %v5026 = vpack.c.b16 %v3937, %v3936
        %v5027 = vpack.c.b16 %v3939, %v3938
        %v5028 = vpack.c.b16 %v3941, %v3940
        %v5029 = vpack.c.b16 %v3943, %v3942
        %v5030 = vpack.c.b16 %v3945, %v3944
        %v5031 = vpack.c.b16 %v3947, %v3946
        %v5032 = vpack.c.b16 %v3949, %v3948
        %v5033 = vpack.c.b16 %v3951, %v3950
        %v5034 = vpack.c.b16 %v3953, %v3952
        %v5035 = vpack.c.b16 %v3955, %v3954
        %v5036 = vpack.c.b16 %v3957, %v3956
        %v5037 = vpack.c.b16 %v3959, %v3958
        %v5038 = vpack.c.b16 %v3961, %v3960
        %v5039 = vpack.c.b16 %v3963, %v3962
        %v5040 = vpack.c.b16 %v3965, %v3964
        %v5041 = vpack.c.b16 %v3967, %v3966
        %v5042 = vpack.c.b16 %v3969, %v3968
        %v5043 = vpack.c.b16 %v3971, %v3970
        %v5044 = vpack.c.b16 %v3973, %v3972
        %v5045 = vpack.c.b16 %v3975, %v3974
        %v5046 = vpack.c.b16 %v3977, %v3976
        %v5047 = vpack.c.b16 %v3979, %v3978
        %v5048 = vpack.c.b16 %v3981, %v3980
        %v5049 = vpack.c.b16 %v3983, %v3982
        %v5050 = vpack.c.b16 %v3985, %v3984
        %v5051 = vpack.c.b16 %v3987, %v3986
        %v5052 = vpack.c.b16 %v3989, %v3988
        %v5053 = vpack.c.b16 %v3991, %v3990
        %v5054 = vpack.c.b16 %v3993, %v3992
        %v5055 = vpack.c.b16 %v3995, %v3994
        %v5056 = vpack.c.b16 %v3997, %v3996
        %v5057 = vpack.c.b16 %v3999, %v3998
        %v5058 = vpack.c.b16 %v4001, %v4000
        %v5059 = vpack.c.b16 %v4003, %v4002
        %v5060 = vpack.c.b16 %v4005, %v4004
        %v5061 = vpack.c.b16 %v4007, %v4006
        %v5062 = vpack.c.b16 %v4009, %v4008
        %v5063 = vpack.c.b16 %v4011, %v4010
        %v5064 = vpack.c.b16 %v4013, %v4012
        %v5065 = vpack.c.b16 %v4015, %v4014
        %v5066 = vpack.c.b16 %v4017, %v4016
        %v5067 = vpack.c.b16 %v4019, %v4018
        %v5068 = vpack.c.b16 %v4021, %v4020
        %v5069 = vpack.c.b16 %v4023, %v4022
        %v5070 = vpack.c.b16 %v4025, %v4024
        %v5071 = vpack.c.b16 %v4027, %v4026
        %v5072 = vpack.c.b16 %v4029, %v4028
        %v5073 = vpack.c.b16 %v4031, %v4030
        %v5074 = vpack.c.b16 %v4033, %v4032
        %v5075 = vpack.c.b16 %v4035, %v4034
        %v5076 = vpack.c.b16 %v4037, %v4036
        %v5077 = vpack.c.b16 %v4039, %v4038
        %v5078 = vpack.c.b16 %v4041, %v4040
        %v5079 = vpack.c.b16 %v4043, %v4042
        %v5080 = vpack.c.b16 %v4045, %v4044
        %v5081 = vpack.c.b16 %v4047, %v4046
        %v5082 = vpack.c.b16 %v4049, %v4048
        %v5083 = vpack.c.b16 %v4051, %v4050
        %v5084 = vpack.c.b16 %v4053, %v4052
        %v5085 = vpack.c.b16 %v4055, %v4054
        %v5086 = vpack.c.b16 %v4057, %v4056
        %v5087 = vpack.c.b16 %v4059, %v4058
        %v5088 = vpack.c.b16 %v4061, %v4060
        %v5089 = vpack.c.b16 %v4063, %v4062
        %v5090 = vpack.c.b16 %v4065, %v4064
        %v5091 = vpack.c.b16 %v4067, %v4066
        %v5092 = vpack.c.b16 %v4069, %v4068
        %v5093 = vpack.c.b16 %v4071, %v4070
        %v5094 = vpack.c.b16 %v4073, %v4072
        %v5095 = vpack.c.b16 %v4075, %v4074
        %v5096 = vpack.c.b16 %v4077, %v4076
        %v5097 = vpack.c.b16 %v4079, %v4078
        %v5098 = vpack.c.b16 %v4081, %v4080
        %v5099 = vpack.c.b16 %v4083, %v4082
        %v5100 = vpack.c.b16 %v4085, %v4084
        %v5101 = vpack.c.b16 %v4087, %v4086
        %v5102 = vpack.c.b16 %v4089, %v4088
        %v5103 = vpack.c.b16 %v4091, %v4090
        %v5104 = vpack.c.b16 %v4093, %v4092
        %v5105 = vpack.c.b16 %v4095, %v4094
        %v5106 = vpack.c.b16 %v4097, %v4096
        %v5107 = vpack.c.b16 %v4099, %v4098
        %v5108 = vpack.c.b16 %v4101, %v4100
        %v5109 = vpack.c.b16 %v4103, %v4102
        %v5110 = vpack.c.b16 %v4105, %v4104
        %v5111 = vpack.c.b16 %v4107, %v4106
        %v5112 = vpack.c.b16 %v4109, %v4108
        %v5113 = vpack.c.b16 %v4111, %v4110
        %v5114 = vpack.c.b16 %v4113, %v4112
        %v5115 = vpack.c.b16 %v4115, %v4114
        %v5116 = vpack.c.b16 %v4117, %v4116
        %v5117 = vpack.c.b16 %v4119, %v4118
        %v5118 = vpack.c.b16 %v4121, %v4120
        %v5119 = vpack.c.b16 %v4123, %v4122
        %v5120 = vpack.c.b16 %v4125, %v4124
        %v5121 = vpack.c.b16 %v4127, %v4126
        %v5122 = vpack.c.b16 %v4129, %v4128
        %v5123 = vpack.c.b16 %v4131, %v4130
        %v5124 = vpack.c.b16 %v4133, %v4132
        %v5125 = vpack.c.b16 %v4135, %v4134
        %v5126 = vpack.c.b16 %v4137, %v4136
        %v5127 = vpack.c.b16 %v4139, %v4138
        %v5128 = vpack.c.b16 %v4141, %v4140
        %v5129 = vpack.c.b16 %v4143, %v4142
        %v5130 = vpack.c.b16 %v4145, %v4144
        %v5131 = vpack.c.b16 %v4147, %v4146
        %v5132 = vpack.c.b16 %v4149, %v4148
        %v5133 = vpack.c.b16 %v4151, %v4150
        %v5134 = vpack.c.b16 %v4153, %v4152
        %v5135 = vpack.c.b16 %v4155, %v4154
        %v5136 = vpack.c.b16 %v4157, %v4156
        %v5137 = vpack.c.b16 %v4159, %v4158
        %v5138 = vpack.c.b16 %v4161, %v4160
        %v5139 = vpack.c.b16 %v4163, %v4162
        %v5140 = vpack.c.b16 %v4165, %v4164
        %v5141 = vpack.c.b16 %v4167, %v4166
        %v5142 = vpack.c.b16 %v4169, %v4168
        %v5143 = vpack.c.b16 %v4171, %v4170
        %v5144 = vpack.c.b16 %v4173, %v4172
        %v5145 = vpack.c.b16 %v4175, %v4174
        %v5146 = vpack.c.b16 %v4177, %v4176
        %v5147 = vpack.c.b16 %v4179, %v4178
        %v5148 = vpack.c.b16 %v4181, %v4180
        %v5149 = vpack.c.b16 %v4183, %v4182
        %v5150 = vpack.c.b16 %v4185, %v4184
        %v5151 = vpack.c.b16 %v4187, %v4186
        %v5152 = vpack.c.b16 %v4189, %v4188
        %v5153 = vpack.c.b16 %v4191, %v4190
        %v5154 = vpack.c.b16 %v4193, %v4192
        %v5155 = vpack.c.b16 %v4195, %v4194
        %v5156 = vpack.c.b16 %v4197, %v4196
        %v5157 = vpack.c.b16 %v4199, %v4198
        %v5158 = vpack.c.b16 %v4201, %v4200
        %v5159 = vpack.c.b16 %v4203, %v4202
        %v5160 = vpack.c.b16 %v4205, %v4204
        %v5161 = vpack.c.b16 %v4207, %v4206
        %v5162 = vpack.c.b16 %v4209, %v4208
        %v5163 = vpack.c.b16 %v4211, %v4210
        %v5164 = vpack.c.b16 %v4213, %v4212
        %v5165 = vpack.c.b16 %v4215, %v4214
        %v5166 = vpack.c.b16 %v4217, %v4216
        %v5167 = vpack.c.b16 %v4219, %v4218
        %v5168 = vpack.c.b16 %v4221, %v4220
        %v5169 = vpack.c.b16 %v4223, %v4222
        %v5170 = vpack.c.b16 %v4225, %v4224
        %v5171 = vpack.c.b16 %v4227, %v4226
        %v5172 = vpack.c.b16 %v4229, %v4228
        %v5173 = vpack.c.b16 %v4231, %v4230
        %v5174 = vpack.c.b16 %v4233, %v4232
        %v5175 = vpack.c.b16 %v4235, %v4234
        %v5176 = vpack.c.b16 %v4237, %v4236
        %v5177 = vpack.c.b16 %v4239, %v4238
        %v5178 = vpack.c.b16 %v4241, %v4240
        %v5179 = vpack.c.b16 %v4243, %v4242
        %v5180 = vpack.c.b16 %v4245, %v4244
        %v5181 = vpack.c.b16 %v4247, %v4246
        %v5182 = vpack.c.b16 %v4249, %v4248
        %v5183 = vpack.c.b16 %v4251, %v4250
        %v5184 = vpack.c.b16 %v4253, %v4252
        %v5185 = vpack.c.b16 %v4255, %v4254
        %v5186 = vpack.c.b16 %v4257, %v4256
        %v5187 = vpack.c.b16 %v4259, %v4258
        %v5188 = vpack.c.b16 %v4261, %v4260
        %v5189 = vpack.c.b16 %v4263, %v4262
        %v5190 = vpack.c.b16 %v4265, %v4264
        %v5191 = vpack.c.b16 %v4267, %v4266
        %v5192 = vpack.c.b16 %v4269, %v4268
        %v5193 = vpack.c.b16 %v4271, %v4270
        %v5194 = vpack.c.b16 %v4273, %v4272
        %v5195 = vpack.c.b16 %v4275, %v4274
        %v5196 = vpack.c.b16 %v4277, %v4276
        %v5197 = vpack.c.b16 %v4279, %v4278
        %v5198 = vpack.c.b16 %v4281, %v4280
        %v5199 = vpack.c.b16 %v4283, %v4282
        %v5200 = vpack.c.b16 %v4285, %v4284
        %v5201 = vpack.c.b16 %v4287, %v4286
        %v5202 = vpack.c.b16 %v4289, %v4288
        %v5203 = vpack.c.b16 %v4291, %v4290
        %v5204 = vpack.c.b16 %v4293, %v4292
        %v5205 = vpack.c.b16 %v4295, %v4294
        %v5206 = vpack.c.b16 %v4297, %v4296
        %v5207 = vpack.c.b16 %v4299, %v4298
        %v5208 = vpack.c.b16 %v4301, %v4300
        %v5209 = vpack.c.b16 %v4303, %v4302
        %v5210 = vpack.c.b16 %v4305, %v4304
        %v5211 = vpack.c.b16 %v4307, %v4306
        %v5212 = vpack.c.b16 %v4309, %v4308
        %v5213 = vpack.c.b16 %v4311, %v4310
        %v5214 = vpack.c.b16 %v4313, %v4312
        %v5215 = vpack.c.b16 %v4315, %v4314
        %v5216 = vpack.c.b16 %v4317, %v4316
        %v5217 = vpack.c.b16 %v4319, %v4318
        %v5218 = vpack.c.b16 %v4321, %v4320
        %v5219 = vpack.c.b16 %v4323, %v4322
        %v5220 = vpack.c.b16 %v4325, %v4324
        %v5221 = vpack.c.b16 %v4327, %v4326
        %v5222 = vpack.c.b16 %v4329, %v4328
        %v5223 = vpack.c.b16 %v4331, %v4330
        %v5224 = vpack.c.b16 %v4333, %v4332
        %v5225 = vpack.c.b16 %v4335, %v4334
        %v5226 = vpack.c.b16 %v4337, %v4336
        %v5227 = vpack.c.b16 %v4339, %v4338
        %v5228 = vpack.c.b16 %v4341, %v4340
        %v5229 = vpack.c.b16 %v4343, %v4342
        %v5230 = vpack.c.b16 %v4345, %v4344
        %v5231 = vpack.c.b16 %v4347, %v4346
        %v5232 = vpack.c.b16 %v4349, %v4348
        %v5233 = vpack.c.b16 %v4351, %v4350
        %v5234 = vpack.c.b16 %v4353, %v4352
        %v5235 = vpack.c.b16 %v4355, %v4354
        %v5236 = vpack.c.b16 %v4357, %v4356
        %v5237 = vpack.c.b16 %v4359, %v4358
        %v5238 = vpack.c.b16 %v4361, %v4360
        %v5239 = vpack.c.b16 %v4363, %v4362
        %v5240 = vpack.c.b16 %v4365, %v4364
        %v5241 = vpack.c.b16 %v4367, %v4366
        %v5242 = vpack.c.b16 %v4369, %v4368
        %v5243 = vpack.c.b16 %v4371, %v4370
        %v5244 = vpack.c.b16 %v4373, %v4372
        %v5245 = vpack.c.b16 %v4375, %v4374
        %v5246 = vpack.c.b16 %v4377, %v4376
        %v5247 = vpack.c.b16 %v4379, %v4378
        %v5248 = vpack.c.b16 %v4381, %v4380
        %v5249 = vpack.c.b16 %v4383, %v4382
        %v5250 = vpack.c.b16 %v4385, %v4384
        %v5251 = vpack.c.b16 %v4387, %v4386
        %v5252 = vpack.c.b16 %v4389, %v4388
        %v5253 = vpack.c.b16 %v4391, %v4390
        %v5254 = vpack.c.b16 %v4393, %v4392
        %v5255 = vpack.c.b16 %v4395, %v4394
        %v5256 = vpack.c.b16 %v4397, %v4396
        %v5257 = vpack.c.b16 %v4399, %v4398
        %v5258 = vpack.c.b16 %v4401, %v4400
        %v5259 = vpack.c.b16 %v4403, %v4402
        %v5260 = vpack.c.b16 %v4405, %v4404
        %v5261 = vpack.c.b16 %v4407, %v4406
        %v5262 = vpack.c.b16 %v4409, %v4408
        %v5263 = vpack.c.b16 %v4411, %v4410
        %v5264 = vpack.c.b16 %v4413, %v4412
        %v5265 = vpack.c.b16 %v4415, %v4414
        %v5266 = vpack.c.b16 %v4417, %v4416
        %v5267 = vpack.c.b16 %v4419, %v4418
        %v5268 = vpack.c.b16 %v4421, %v4420
        %v5269 = vpack.c.b16 %v4423, %v4422
        %v5270 = vpack.c.b16 %v4425, %v4424
        %v5271 = vpack.c.b16 %v4427, %v4426
        %v5272 = vpack.c.b16 %v4429, %v4428
        %v5273 = vpack.c.b16 %v4431, %v4430
        %v5274 = vpack.c.b16 %v4433, %v4432
        %v5275 = vpack.c.b16 %v4435, %v4434
        %v5276 = vpack.c.b16 %v4437, %v4436
        %v5277 = vpack.c.b16 %v4439, %v4438
        %v5278 = vpack.c.b16 %v4441, %v4440
        %v5279 = vpack.c.b16 %v4443, %v4442
        %v5280 = vpack.c.b16 %v4445, %v4444
        %v5281 = vpack.c.b16 %v4447, %v4446
        %v5282 = vpack.c.b16 %v4449, %v4448
        %v5283 = vpack.c.b16 %v4451, %v4450
        %v5284 = vpack.c.b16 %v4453, %v4452
        %v5285 = vpack.c.b16 %v4455, %v4454
        %v5286 = vpack.c.b16 %v4457, %v4456
        %v5287 = vpack.c.b16 %v4459, %v4458
        %v5288 = vpack.c.b16 %v4461, %v4460
        %v5289 = vpack.c.b16 %v4463, %v4462
        %v5290 = vpack.c.b16 %v4465, %v4464
        %v5291 = vpack.c.b16 %v4467, %v4466
        %v5292 = vpack.c.b16 %v4469, %v4468
        %v5293 = vpack.c.b16 %v4471, %v4470
        %v5294 = vpack.c.b16 %v4473, %v4472
        %v5295 = vpack.c.b16 %v4475, %v4474
        %v5296 = vpack.c.b16 %v4477, %v4476
        %v5297 = vpack.c.b16 %v4479, %v4478
        %v5298 = vpack.c.b16 %v4481, %v4480
        %v5299 = vpack.c.b16 %v4483, %v4482
        %v5300 = vpack.c.b16 %v4485, %v4484
        %v5301 = vpack.c.b16 %v4487, %v4486
        %v5302 = vpack.c.b16 %v4489, %v4488
        %v5303 = vpack.c.b16 %v4491, %v4490
        %v5304 = vpack.c.b16 %v4493, %v4492
        %v5305 = vpack.c.b16 %v4495, %v4494
        %v5306 = vpack.c.b16 %v4497, %v4496
        %v5307 = vpack.c.b16 %v4499, %v4498
        %v5308 = vpack.c.b16 %v4501, %v4500
        %v5309 = vpack.c.b16 %v4503, %v4502
        %v5310 = vpack.c.b16 %v4505, %v4504
        %v5311 = vpack.c.b16 %v4507, %v4506
        %v5312 = vpack.c.b16 %v4509, %v4508
        %v5313 = vpack.c.b16 %v4511, %v4510
        %v5314 = vpack.c.b16 %v4513, %v4512
        %v5315 = vpack.c.b16 %v4515, %v4514
        %v5316 = vpack.c.b16 %v4517, %v4516
        %v5317 = vpack.c.b16 %v4519, %v4518
        %v5318 = vpack.c.b16 %v4521, %v4520
        %v5319 = vpack.c.b16 %v4523, %v4522
        %v5320 = vpack.c.b16 %v4525, %v4524
        %v5321 = vpack.c.b16 %v4527, %v4526
        %v5322 = vpack.c.b16 %v4529, %v4528
        %v5323 = vpack.c.b16 %v4531, %v4530
        %v5324 = vpack.c.b16 %v4533, %v4532
        %v5325 = vpack.c.b16 %v4535, %v4534
        %v5326 = vpack.c.b16 %v4537, %v4536
        %v5327 = vpack.c.b16 %v4539, %v4538
        %v5328 = vpack.c.b16 %v4541, %v4540
        %v5329 = vpack.c.b16 %v4543, %v4542
        %v5330 = vpack.c.b16 %v4545, %v4544
        %v5331 = vpack.c.b16 %v4547, %v4546
        %v5332 = vpack.c.b16 %v4549, %v4548
        %v5333 = vpack.c.b16 %v4551, %v4550
        %v5334 = vpack.c.b16 %v4553, %v4552
        %v5335 = vpack.c.b16 %v4555, %v4554
        %v5336 = vpack.c.b16 %v4557, %v4556
        %v5337 = vpack.c.b16 %v4559, %v4558
        %v5338 = vpack.c.b16 %v4561, %v4560
        %v5339 = vpack.c.b16 %v4563, %v4562
        %v5340 = vpack.c.b16 %v4565, %v4564
        %v5341 = vpack.c.b16 %v4567, %v4566
        %v5342 = vpack.c.b16 %v4569, %v4568
        %v5343 = vpack.c.b16 %v4571, %v4570
        %v5344 = vpack.c.b16 %v4573, %v4572
        %v5345 = vpack.c.b16 %v4575, %v4574
        %v5346 = vpack.c.b16 %v4577, %v4576
        %v5347 = vpack.c.b16 %v4579, %v4578
        %v5348 = vpack.c.b16 %v4581, %v4580
        %v5349 = vpack.c.b16 %v4583, %v4582
        %v5350 = vpack.c.b16 %v4585, %v4584
        %v5351 = vpack.c.b16 %v4587, %v4586
        %v5352 = vpack.c.b16 %v4589, %v4588
        %v5353 = vpack.c.b16 %v4591, %v4590
        %v5354 = vpack.c.b16 %v4593, %v4592
        %v5355 = vpack.c.b16 %v4595, %v4594
        %v5356 = vpack.c.b16 %v4597, %v4596
        %v5357 = vpack.c.b16 %v4599, %v4598
        %v5358 = vpack.c.b16 %v4601, %v4600
        %v5359 = vpack.c.b16 %v4603, %v4602
        %v5360 = vpack.c.b16 %v4605, %v4604
        %v5361 = vpack.c.b16 %v4607, %v4606
        %v5362 = vpack.c.b16 %v4609, %v4608
        %v5363 = vpack.c.b16 %v4611, %v4610
        %v5364 = vpack.c.b16 %v4613, %v4612
        %v5365 = vpack.c.b16 %v4615, %v4614
        %v5366 = vpack.c.b16 %v4617, %v4616
        %v5367 = vpack.c.b16 %v4619, %v4618
        %v5368 = vpack.c.b16 %v4621, %v4620
        %v5369 = vpack.c.b16 %v4623, %v4622
        %v5370 = vpack.c.b16 %v4625, %v4624
        %v5371 = vpack.c.b16 %v4627, %v4626
        %v5372 = vpack.c.b16 %v4629, %v4628
        %v5373 = vpack.c.b16 %v4631, %v4630
        %v5374 = vpack.c.b16 %v4633, %v4632
        %v5375 = vpack.c.b16 %v4635, %v4634
        %v5376 = vpack.c.b16 %v4637, %v4636
        %v5377 = vpack.c.b16 %v4639, %v4638
        %v5378 = vpack.c.b16 %v4641, %v4640
        %v5379 = vpack.c.b16 %v4643, %v4642
        %v5380 = vpack.c.b16 %v4645, %v4644
        %v5381 = vpack.c.b16 %v4647, %v4646
        %v5382 = vpack.c.b16 %v4649, %v4648
        %v5383 = vpack.c.b16 %v4651, %v4650
        %v5384 = vpack.c.b16 %v4653, %v4652
        %v5385 = vpack.c.b16 %v4655, %v4654
        %v5386 = vpack.c.b16 %v4657, %v4656
        %v5387 = vpack.c.b16 %v4659, %v4658
        %v5388 = vpack.c.b16 %v4661, %v4660
        %v5389 = vpack.c.b16 %v4663, %v4662
        %v5390 = vpack.c.b16 %v4665, %v4664
        %v5391 = vpack.c.b16 %v4667, %v4666
        %v5392 = vpack.c.b16 %v4669, %v4668
        %v5393 = vpack.c.b16 %v4671, %v4670
        %v5394 = vpack.c.b16 %v4673, %v4672
        %v5395 = vpack.c.b16 %v4675, %v4674
        %v5396 = vpack.c.b16 %v4677, %v4676
        %v5397 = vpack.c.b16 %v4679, %v4678
        %v5398 = vpack.c.b16 %v4681, %v4680
        %v5399 = vpack.c.b16 %v4683, %v4682
        %v5400 = vpack.c.b16 %v4685, %v4684
        %v5401 = vpack.c.b16 %v4687, %v4686
        %v5402 = vpack.c.b16 %v4689, %v4688
        %v5403 = vpack.c.b16 %v4691, %v4690
        %v5404 = vpack.c.b16 %v4693, %v4692
        %v5405 = vpack.c.b16 %v4695, %v4694
        %v5406 = vpack.c.b16 %v4697, %v4696
        %v5407 = vpack.c.b16 %v4699, %v4698
        %v5408 = vpack.c.b16 %v4701, %v4700
        %v5409 = vpack.c.b16 %v4703, %v4702
        %v5410 = vpack.c.b16 %v4705, %v4704
        %v5411 = vpack.c.b16 %v4707, %v4706
        %v5412 = vpack.c.b16 %v4709, %v4708
        %v5413 = vpack.c.b16 %v4711, %v4710
        %v5414 = vpack.c.b16 %v4713, %v4712
        %v5415 = vpack.c.b16 %v4715, %v4714
        %v5416 = vpack.c.b16 %v4717, %v4716
        %v5417 = vpack.c.b16 %v4719, %v4718
        %v5418 = vpack.c.b16 %v4721, %v4720
        %v5419 = vpack.c.b16 %v4723, %v4722
        %6116 = vmatpush.bf16.msra.mxu0 %v4731
        %6117 = vmatpush.bf16.msra.mxu0 %v4730
        %6118 = vmatpush.bf16.msra.mxu0 %v4729
        %6119 = vmatpush.bf16.msra.mxu0 %v4728
        %6120 = vmatpush.bf16.msra.mxu0 %v4727
        %6121 = vmatpush.bf16.msra.mxu0 %v4726
        %6122 = vmatpush.bf16.msra.mxu0 %v4725
        %6123 = vmatpush.bf16.msra.mxu0 %v4724
        %6124 = vmatmul.bf16.gmra.mxu0 %v460
        %v6125 = vpop.f32.mrf.mxu0
        %v6126 = vadd.f32 0.0, %v6125
        %v6127 = vpop.f32.mrf.mxu0
        %6128 = vdwg.mxu0
        %6129 = vmatpush.bf16.msra.mxu0 %v4739
        %6130 = vmatpush.bf16.msra.mxu0 %v4738
        %6131 = vmatpush.bf16.msra.mxu0 %v4737
        %6132 = vmatpush.bf16.msra.mxu0 %v4736
        %6133 = vmatpush.bf16.msra.mxu0 %v4735
        %6134 = vmatpush.bf16.msra.mxu0 %v4734
        %6135 = vmatpush.bf16.msra.mxu0 %v4733
        %6136 = vmatpush.bf16.msra.mxu0 %v4732
        %6137 = vmatmul.bf16.gmra.mxu0 %v461
        %v6138 = vpop.f32.mrf.mxu0
        %v6139 = vadd.f32 %v6126, %v6138
        %v6140 = vpop.f32.mrf.mxu0
        %6141 = vdwg.mxu0
        %6142 = vmatpush.bf16.msra.mxu0 %v4747
        %6143 = vmatpush.bf16.msra.mxu0 %v4746
        %6144 = vmatpush.bf16.msra.mxu0 %v4745
        %6145 = vmatpush.bf16.msra.mxu0 %v4744
        %6146 = vmatpush.bf16.msra.mxu0 %v4743
        %6147 = vmatpush.bf16.msra.mxu0 %v4742
        %6148 = vmatpush.bf16.msra.mxu0 %v4741
        %6149 = vmatpush.bf16.msra.mxu0 %v4740
        %6150 = vmatmul.bf16.gmra.mxu0 %v462
        %v6151 = vpop.f32.mrf.mxu0
        %v6152 = vadd.f32 %v6139, %v6151
        %v6153 = vpop.f32.mrf.mxu0
        %6154 = vdwg.mxu0
        %6155 = vmatpush.bf16.msra.mxu0 %v4755
        %6156 = vmatpush.bf16.msra.mxu0 %v4754
        %6157 = vmatpush.bf16.msra.mxu0 %v4753
        %6158 = vmatpush.bf16.msra.mxu0 %v4752
        %6159 = vmatpush.bf16.msra.mxu0 %v4751
        %6160 = vmatpush.bf16.msra.mxu0 %v4750
        %6161 = vmatpush.bf16.msra.mxu0 %v4749
        %6162 = vmatpush.bf16.msra.mxu0 %v4748
        %6163 = vmatmul.bf16.gmra.mxu0 %v463
        %v6164 = vpop.f32.mrf.mxu0
        %v6165 = vadd.f32 %v6152, %v6164
        %v6166 = vpop.f32.mrf.mxu0
        %6167 = vdwg.mxu0
        %6168 = vmatpush.bf16.msra.mxu0 %v4763
        %6169 = vmatpush.bf16.msra.mxu0 %v4762
        %6170 = vmatpush.bf16.msra.mxu0 %v4761
        %6171 = vmatpush.bf16.msra.mxu0 %v4760
        %6172 = vmatpush.bf16.msra.mxu0 %v4759
        %6173 = vmatpush.bf16.msra.mxu0 %v4758
        %6174 = vmatpush.bf16.msra.mxu0 %v4757
        %6175 = vmatpush.bf16.msra.mxu0 %v4756
        %6176 = vmatmul.bf16.gmra.mxu0 %v464
        %v6177 = vpop.f32.mrf.mxu0
        %v6178 = vadd.f32 %v6165, %v6177
        %v6179 = vpop.f32.mrf.mxu0
        %6180 = vdwg.mxu0
        %6181 = vmatpush.bf16.msra.mxu0 %v4771
        %6182 = vmatpush.bf16.msra.mxu0 %v4770
        %6183 = vmatpush.bf16.msra.mxu0 %v4769
        %6184 = vmatpush.bf16.msra.mxu0 %v4768
        %6185 = vmatpush.bf16.msra.mxu0 %v4767
        %6186 = vmatpush.bf16.msra.mxu0 %v4766
        %6187 = vmatpush.bf16.msra.mxu0 %v4765
        %6188 = vmatpush.bf16.msra.mxu0 %v4764
        %6189 = vmatmul.bf16.gmra.mxu0 %v465
        %v6190 = vpop.f32.mrf.mxu0
        %v6191 = vadd.f32 %v6178, %v6190
        %v6192 = vpop.f32.mrf.mxu0
        %6193 = vdwg.mxu0
        %6194 = vmatpush.bf16.msra.mxu0 %v4779
        %6195 = vmatpush.bf16.msra.mxu0 %v4778
        %6196 = vmatpush.bf16.msra.mxu0 %v4777
        %6197 = vmatpush.bf16.msra.mxu0 %v4776
        %6198 = vmatpush.bf16.msra.mxu0 %v4775
        %6199 = vmatpush.bf16.msra.mxu0 %v4774
        %6200 = vmatpush.bf16.msra.mxu0 %v4773
        %6201 = vmatpush.bf16.msra.mxu0 %v4772
        %6202 = vmatmul.bf16.gmra.mxu0 %v466
        %v6203 = vpop.f32.mrf.mxu0
        %v6204 = vadd.f32 %v6191, %v6203
        %v6205 = vpop.f32.mrf.mxu0
        %6206 = vdwg.mxu0
        %6207 = vmatpush.bf16.msra.mxu0 %v4787
        %6208 = vmatpush.bf16.msra.mxu0 %v4786
        %6209 = vmatpush.bf16.msra.mxu0 %v4785
        %6210 = vmatpush.bf16.msra.mxu0 %v4784
        %6211 = vmatpush.bf16.msra.mxu0 %v4783
        %6212 = vmatpush.bf16.msra.mxu0 %v4782
        %6213 = vmatpush.bf16.msra.mxu0 %v4781
        %6214 = vmatpush.bf16.msra.mxu0 %v4780
        %6215 = vmatmul.bf16.gmra.mxu0 %v467
        %v6216 = vpop.f32.mrf.mxu0
        %v6217 = vadd.f32 %v6204, %v6216
        %v6218 = vpop.f32.mrf.mxu0
        %6219 = vdwg.mxu0
        %6220 = vmatpush.bf16.msra.mxu0 %v4795
        %6221 = vmatpush.bf16.msra.mxu0 %v4794
        %6222 = vmatpush.bf16.msra.mxu0 %v4793
        %6223 = vmatpush.bf16.msra.mxu0 %v4792
        %6224 = vmatpush.bf16.msra.mxu0 %v4791
        %6225 = vmatpush.bf16.msra.mxu0 %v4790
        %6226 = vmatpush.bf16.msra.mxu0 %v4789
        %6227 = vmatpush.bf16.msra.mxu0 %v4788
        %6228 = vmatmul.bf16.gmra.mxu0 %v468
        %v6229 = vpop.f32.mrf.mxu0
        %v6230 = vadd.f32 %v6217, %v6229
        %v6231 = vpop.f32.mrf.mxu0
        %6232 = vdwg.mxu0
        %6233 = vmatpush.bf16.msra.mxu0 %v4803
        %6234 = vmatpush.bf16.msra.mxu0 %v4802
        %6235 = vmatpush.bf16.msra.mxu0 %v4801
        %6236 = vmatpush.bf16.msra.mxu0 %v4800
        %6237 = vmatpush.bf16.msra.mxu0 %v4799
        %6238 = vmatpush.bf16.msra.mxu0 %v4798
        %6239 = vmatpush.bf16.msra.mxu0 %v4797
        %6240 = vmatpush.bf16.msra.mxu0 %v4796
        %6241 = vmatmul.bf16.gmra.mxu0 %v469
        %v6242 = vpop.f32.mrf.mxu0
        %v6243 = vadd.f32 %v6230, %v6242
        %v6244 = vpop.f32.mrf.mxu0
        %6245 = vdwg.mxu0
        %6246 = vmatpush.bf16.msra.mxu0 %v4811
        %6247 = vmatpush.bf16.msra.mxu0 %v4810
        %6248 = vmatpush.bf16.msra.mxu0 %v4809
        %6249 = vmatpush.bf16.msra.mxu0 %v4808
        %6250 = vmatpush.bf16.msra.mxu0 %v4807
        %6251 = vmatpush.bf16.msra.mxu0 %v4806
        %6252 = vmatpush.bf16.msra.mxu0 %v4805
        %6253 = vmatpush.bf16.msra.mxu0 %v4804
        %6254 = vmatmul.bf16.gmra.mxu0 %v470
        %v6255 = vpop.f32.mrf.mxu0
        %v6256 = vadd.f32 %v6243, %v6255
        %v6257 = vpop.f32.mrf.mxu0
        %6258 = vdwg.mxu0
        %6259 = vmatpush.bf16.msra.mxu0 %v4819
        %6260 = vmatpush.bf16.msra.mxu0 %v4818
        %6261 = vmatpush.bf16.msra.mxu0 %v4817
        %6262 = vmatpush.bf16.msra.mxu0 %v4816
        %6263 = vmatpush.bf16.msra.mxu0 %v4815
        %6264 = vmatpush.bf16.msra.mxu0 %v4814
        %6265 = vmatpush.bf16.msra.mxu0 %v4813
        %6266 = vmatpush.bf16.msra.mxu0 %v4812
        %6267 = vmatmul.bf16.gmra.mxu0 %v471
        %v6268 = vpop.f32.mrf.mxu0
        %v6269 = vadd.f32 %v6256, %v6268
        %v6270 = vpop.f32.mrf.mxu0
        %6271 = vdwg.mxu0
        %6272 = vmatpush.bf16.msra.mxu0 %v4827
        %6273 = vmatpush.bf16.msra.mxu0 %v4826
        %6274 = vmatpush.bf16.msra.mxu0 %v4825
        %6275 = vmatpush.bf16.msra.mxu0 %v4824
        %6276 = vmatpush.bf16.msra.mxu0 %v4823
        %6277 = vmatpush.bf16.msra.mxu0 %v4822
        %6278 = vmatpush.bf16.msra.mxu0 %v4821
        %6279 = vmatpush.bf16.msra.mxu0 %v4820
        %6280 = vmatmul.bf16.gmra.mxu0 %v472
        %v6281 = vpop.f32.mrf.mxu0
        %v6282 = vadd.f32 %v6269, %v6281
        %v6283 = vpop.f32.mrf.mxu0
        %6284 = vdwg.mxu0
        %6285 = vmatpush.bf16.msra.mxu0 %v4835
        %6286 = vmatpush.bf16.msra.mxu0 %v4834
        %6287 = vmatpush.bf16.msra.mxu0 %v4833
        %6288 = vmatpush.bf16.msra.mxu0 %v4832
        %6289 = vmatpush.bf16.msra.mxu0 %v4831
        %6290 = vmatpush.bf16.msra.mxu0 %v4830
        %6291 = vmatpush.bf16.msra.mxu0 %v4829
        %6292 = vmatpush.bf16.msra.mxu0 %v4828
        %6293 = vmatmul.bf16.gmra.mxu0 %v473
        %v6294 = vpop.f32.mrf.mxu0
        %v6295 = vadd.f32 %v6282, %v6294
        %v6296 = vpop.f32.mrf.mxu0
        %6297 = vdwg.mxu0
        %6298 = vmatpush.bf16.msra.mxu0 %v4843
        %6299 = vmatpush.bf16.msra.mxu0 %v4842
        %6300 = vmatpush.bf16.msra.mxu0 %v4841
        %6301 = vmatpush.bf16.msra.mxu0 %v4840
        %6302 = vmatpush.bf16.msra.mxu0 %v4839
        %6303 = vmatpush.bf16.msra.mxu0 %v4838
        %6304 = vmatpush.bf16.msra.mxu0 %v4837
        %6305 = vmatpush.bf16.msra.mxu0 %v4836
        %6306 = vmatmul.bf16.gmra.mxu0 %v474
        %v6307 = vpop.f32.mrf.mxu0
        %v6308 = vadd.f32 %v6295, %v6307
        %v6309 = vpop.f32.mrf.mxu0
        %6310 = vdwg.mxu0
        %6311 = vmatpush.bf16.msra.mxu0 %v4851
        %6312 = vmatpush.bf16.msra.mxu0 %v4850
        %6313 = vmatpush.bf16.msra.mxu0 %v4849
        %6314 = vmatpush.bf16.msra.mxu0 %v4848
        %6315 = vmatpush.bf16.msra.mxu0 %v4847
        %6316 = vmatpush.bf16.msra.mxu0 %v4846
        %6317 = vmatpush.bf16.msra.mxu0 %v4845
        %6318 = vmatpush.bf16.msra.mxu0 %v4844
        %6319 = vmatmul.bf16.gmra.mxu0 %v475
        %v6320 = vpop.f32.mrf.mxu0
        %v6321 = vadd.f32 %v6308, %v6320
        %v6322 = vpop.f32.mrf.mxu0
        %6323 = vdwg.mxu0
        %6324 = vmatpush.bf16.msra.mxu0 %v4859
        %6325 = vmatpush.bf16.msra.mxu0 %v4858
        %6326 = vmatpush.bf16.msra.mxu0 %v4857
        %6327 = vmatpush.bf16.msra.mxu0 %v4856
        %6328 = vmatpush.bf16.msra.mxu0 %v4855
        %6329 = vmatpush.bf16.msra.mxu0 %v4854
        %6330 = vmatpush.bf16.msra.mxu0 %v4853
        %6331 = vmatpush.bf16.msra.mxu0 %v4852
        %6332 = vmatmul.bf16.gmra.mxu0 %v476
        %v6333 = vpop.f32.mrf.mxu0
        %v6334 = vadd.f32 %v6321, %v6333
        %v6335 = vpop.f32.mrf.mxu0
        %6336 = vdwg.mxu0
        %6337 = vmatpush.bf16.msra.mxu0 %v4867
        %6338 = vmatpush.bf16.msra.mxu0 %v4866
        %6339 = vmatpush.bf16.msra.mxu0 %v4865
        %6340 = vmatpush.bf16.msra.mxu0 %v4864
        %6341 = vmatpush.bf16.msra.mxu0 %v4863
        %6342 = vmatpush.bf16.msra.mxu0 %v4862
        %6343 = vmatpush.bf16.msra.mxu0 %v4861
        %6344 = vmatpush.bf16.msra.mxu0 %v4860
        %6345 = vmatmul.bf16.gmra.mxu0 %v477
        %v6346 = vpop.f32.mrf.mxu0
        %v6347 = vadd.f32 %v6334, %v6346
        %v6348 = vpop.f32.mrf.mxu0
        %6349 = vdwg.mxu0
        %6350 = vmatpush.bf16.msra.mxu0 %v4875
        %6351 = vmatpush.bf16.msra.mxu0 %v4874
        %6352 = vmatpush.bf16.msra.mxu0 %v4873
        %6353 = vmatpush.bf16.msra.mxu0 %v4872
        %6354 = vmatpush.bf16.msra.mxu0 %v4871
        %6355 = vmatpush.bf16.msra.mxu0 %v4870
        %6356 = vmatpush.bf16.msra.mxu0 %v4869
        %6357 = vmatpush.bf16.msra.mxu0 %v4868
        %6358 = vmatmul.bf16.gmra.mxu0 %v478
        %v6359 = vpop.f32.mrf.mxu0
        %v6360 = vadd.f32 %v6347, %v6359
        %v6361 = vpop.f32.mrf.mxu0
        %6362 = vdwg.mxu0
        %6363 = vmatpush.bf16.msra.mxu0 %v4883
        %6364 = vmatpush.bf16.msra.mxu0 %v4882
        %6365 = vmatpush.bf16.msra.mxu0 %v4881
        %6366 = vmatpush.bf16.msra.mxu0 %v4880
        %6367 = vmatpush.bf16.msra.mxu0 %v4879
        %6368 = vmatpush.bf16.msra.mxu0 %v4878
        %6369 = vmatpush.bf16.msra.mxu0 %v4877
        %6370 = vmatpush.bf16.msra.mxu0 %v4876
        %6371 = vmatmul.bf16.gmra.mxu0 %v479
        %v6372 = vpop.f32.mrf.mxu0
        %v6373 = vadd.f32 %v6360, %v6372
        %v6374 = vpop.f32.mrf.mxu0
        %6375 = vdwg.mxu0
        %6376 = vmatpush.bf16.msra.mxu0 %v4891
        %6377 = vmatpush.bf16.msra.mxu0 %v4890
        %6378 = vmatpush.bf16.msra.mxu0 %v4889
        %6379 = vmatpush.bf16.msra.mxu0 %v4888
        %6380 = vmatpush.bf16.msra.mxu0 %v4887
        %6381 = vmatpush.bf16.msra.mxu0 %v4886
        %6382 = vmatpush.bf16.msra.mxu0 %v4885
        %6383 = vmatpush.bf16.msra.mxu0 %v4884
        %6384 = vmatmul.bf16.gmra.mxu0 %v480
        %v6385 = vpop.f32.mrf.mxu0
        %v6386 = vadd.f32 %v6373, %v6385
        %v6387 = vpop.f32.mrf.mxu0
        %6388 = vdwg.mxu0
        %6389 = vmatpush.bf16.msra.mxu0 %v4899
        %6390 = vmatpush.bf16.msra.mxu0 %v4898
        %6391 = vmatpush.bf16.msra.mxu0 %v4897
        %6392 = vmatpush.bf16.msra.mxu0 %v4896
        %6393 = vmatpush.bf16.msra.mxu0 %v4895
        %6394 = vmatpush.bf16.msra.mxu0 %v4894
        %6395 = vmatpush.bf16.msra.mxu0 %v4893
        %6396 = vmatpush.bf16.msra.mxu0 %v4892
        %6397 = vmatmul.bf16.gmra.mxu0 %v481
        %v6398 = vpop.f32.mrf.mxu0
        %v6399 = vadd.f32 %v6386, %v6398
        %v6400 = vpop.f32.mrf.mxu0
        %6401 = vdwg.mxu0
        %6402 = vmatpush.bf16.msra.mxu0 %v4907
        %6403 = vmatpush.bf16.msra.mxu0 %v4906
        %6404 = vmatpush.bf16.msra.mxu0 %v4905
        %6405 = vmatpush.bf16.msra.mxu0 %v4904
        %6406 = vmatpush.bf16.msra.mxu0 %v4903
        %6407 = vmatpush.bf16.msra.mxu0 %v4902
        %6408 = vmatpush.bf16.msra.mxu0 %v4901
        %6409 = vmatpush.bf16.msra.mxu0 %v4900
        %6410 = vmatmul.bf16.gmra.mxu0 %v482
        %v6411 = vpop.f32.mrf.mxu0
        %v6412 = vadd.f32 %v6399, %v6411
        %v6413 = vpop.f32.mrf.mxu0
        %6414 = vdwg.mxu0
        %6415 = vmatpush.bf16.msra.mxu0 %v4915
        %6416 = vmatpush.bf16.msra.mxu0 %v4914
        %6417 = vmatpush.bf16.msra.mxu0 %v4913
        %6418 = vmatpush.bf16.msra.mxu0 %v4912
        %6419 = vmatpush.bf16.msra.mxu0 %v4911
        %6420 = vmatpush.bf16.msra.mxu0 %v4910
        %6421 = vmatpush.bf16.msra.mxu0 %v4909
        %6422 = vmatpush.bf16.msra.mxu0 %v4908
        %6423 = vmatmul.bf16.gmra.mxu0 %v483
        %v6424 = vpop.f32.mrf.mxu0
        %v6425 = vadd.f32 %v6412, %v6424
        %v6426 = vpop.f32.mrf.mxu0
        %6427 = vdwg.mxu0
        %6428 = vmatpush.bf16.msra.mxu0 %v4923
        %6429 = vmatpush.bf16.msra.mxu0 %v4922
        %6430 = vmatpush.bf16.msra.mxu0 %v4921
        %6431 = vmatpush.bf16.msra.mxu0 %v4920
        %6432 = vmatpush.bf16.msra.mxu0 %v4919
        %6433 = vmatpush.bf16.msra.mxu0 %v4918
        %6434 = vmatpush.bf16.msra.mxu0 %v4917
        %6435 = vmatpush.bf16.msra.mxu0 %v4916
        %6436 = vmatmul.bf16.gmra.mxu0 %v484
        %v6437 = vpop.f32.mrf.mxu0
        %v6438 = vadd.f32 %v6425, %v6437
        %v6439 = vpop.f32.mrf.mxu0
        %6440 = vdwg.mxu0
        %6441 = vmatpush.bf16.msra.mxu0 %v4931
        %6442 = vmatpush.bf16.msra.mxu0 %v4930
        %6443 = vmatpush.bf16.msra.mxu0 %v4929
        %6444 = vmatpush.bf16.msra.mxu0 %v4928
        %6445 = vmatpush.bf16.msra.mxu0 %v4927
        %6446 = vmatpush.bf16.msra.mxu0 %v4926
        %6447 = vmatpush.bf16.msra.mxu0 %v4925
        %6448 = vmatpush.bf16.msra.mxu0 %v4924
        %6449 = vmatmul.bf16.gmra.mxu0 %v485
        %v6450 = vpop.f32.mrf.mxu0
        %v6451 = vadd.f32 %v6438, %v6450
        %v6452 = vpop.f32.mrf.mxu0
        %6453 = vdwg.mxu0
        %6454 = vmatpush.bf16.msra.mxu0 %v4939
        %6455 = vmatpush.bf16.msra.mxu0 %v4938
        %6456 = vmatpush.bf16.msra.mxu0 %v4937
        %6457 = vmatpush.bf16.msra.mxu0 %v4936
        %6458 = vmatpush.bf16.msra.mxu0 %v4935
        %6459 = vmatpush.bf16.msra.mxu0 %v4934
        %6460 = vmatpush.bf16.msra.mxu0 %v4933
        %6461 = vmatpush.bf16.msra.mxu0 %v4932
        %6462 = vmatmul.bf16.gmra.mxu0 %v486
        %v6463 = vpop.f32.mrf.mxu0
        %v6464 = vadd.f32 %v6451, %v6463
        %v6465 = vpop.f32.mrf.mxu0
        %6466 = vdwg.mxu0
        %6467 = vmatpush.bf16.msra.mxu0 %v4947
        %6468 = vmatpush.bf16.msra.mxu0 %v4946
        %6469 = vmatpush.bf16.msra.mxu0 %v4945
        %6470 = vmatpush.bf16.msra.mxu0 %v4944
        %6471 = vmatpush.bf16.msra.mxu0 %v4943
        %6472 = vmatpush.bf16.msra.mxu0 %v4942
        %6473 = vmatpush.bf16.msra.mxu0 %v4941
        %6474 = vmatpush.bf16.msra.mxu0 %v4940
        %6475 = vmatmul.bf16.gmra.mxu0 %v487
        %v6476 = vpop.f32.mrf.mxu0
        %v6477 = vadd.f32 %v6464, %v6476
        %v6478 = vpop.f32.mrf.mxu0
        %6479 = vdwg.mxu0
        %6480 = vmatpush.bf16.msra.mxu0 %v4955
        %6481 = vmatpush.bf16.msra.mxu0 %v4954
        %6482 = vmatpush.bf16.msra.mxu0 %v4953
        %6483 = vmatpush.bf16.msra.mxu0 %v4952
        %6484 = vmatpush.bf16.msra.mxu0 %v4951
        %6485 = vmatpush.bf16.msra.mxu0 %v4950
        %6486 = vmatpush.bf16.msra.mxu0 %v4949
        %6487 = vmatpush.bf16.msra.mxu0 %v4948
        %6488 = vmatmul.bf16.gmra.mxu0 %v488
        %v6489 = vpop.f32.mrf.mxu0
        %v6490 = vadd.f32 %v6477, %v6489
        %v6491 = vpop.f32.mrf.mxu0
        %6492 = vdwg.mxu0
        %6493 = vmatpush.bf16.msra.mxu0 %v4963
        %6494 = vmatpush.bf16.msra.mxu0 %v4962
        %6495 = vmatpush.bf16.msra.mxu0 %v4961
        %6496 = vmatpush.bf16.msra.mxu0 %v4960
        %6497 = vmatpush.bf16.msra.mxu0 %v4959
        %6498 = vmatpush.bf16.msra.mxu0 %v4958
        %6499 = vmatpush.bf16.msra.mxu0 %v4957
        %6500 = vmatpush.bf16.msra.mxu0 %v4956
        %6501 = vmatmul.bf16.gmra.mxu0 %v489
        %v6502 = vpop.f32.mrf.mxu0
        %v6503 = vadd.f32 %v6490, %v6502
        %v6504 = vpop.f32.mrf.mxu0
        %6505 = vdwg.mxu0
        %6506 = vmatpush.bf16.msra.mxu0 %v4971
        %6507 = vmatpush.bf16.msra.mxu0 %v4970
        %6508 = vmatpush.bf16.msra.mxu0 %v4969
        %6509 = vmatpush.bf16.msra.mxu0 %v4968
        %6510 = vmatpush.bf16.msra.mxu0 %v4967
        %6511 = vmatpush.bf16.msra.mxu0 %v4966
        %6512 = vmatpush.bf16.msra.mxu0 %v4965
        %6513 = vmatpush.bf16.msra.mxu0 %v4964
        %6514 = vmatmul.bf16.gmra.mxu0 %v490
        %v6515 = vpop.f32.mrf.mxu0
        %v6516 = vadd.f32 %v6503, %v6515
        %v6517 = vpop.f32.mrf.mxu0
        %6518 = vdwg.mxu0
        %6519 = vmatpush.bf16.msra.mxu0 %v4979
        %6520 = vmatpush.bf16.msra.mxu0 %v4978
        %6521 = vmatpush.bf16.msra.mxu0 %v4977
        %6522 = vmatpush.bf16.msra.mxu0 %v4976
        %6523 = vmatpush.bf16.msra.mxu0 %v4975
        %6524 = vmatpush.bf16.msra.mxu0 %v4974
        %6525 = vmatpush.bf16.msra.mxu0 %v4973
        %6526 = vmatpush.bf16.msra.mxu0 %v4972
        %6527 = vmatmul.bf16.gmra.mxu0 %v491
        %v6528 = vpop.f32.mrf.mxu0
        %v6529 = vadd.f32 %v6516, %v6528
        %v6530 = vpop.f32.mrf.mxu0
        %6531 = vdwg.mxu0
        %6532 = vmatpush.bf16.msra.mxu0 %v4987
        %6533 = vmatpush.bf16.msra.mxu0 %v4986
        %6534 = vmatpush.bf16.msra.mxu0 %v4985
        %6535 = vmatpush.bf16.msra.mxu0 %v4984
        %6536 = vmatpush.bf16.msra.mxu0 %v4983
        %6537 = vmatpush.bf16.msra.mxu0 %v4982
        %6538 = vmatpush.bf16.msra.mxu0 %v4981
        %6539 = vmatpush.bf16.msra.mxu0 %v4980
        %6540 = vmatmul.bf16.gmra.mxu0 %v492
        %v6541 = vpop.f32.mrf.mxu0
        %v6542 = vadd.f32 %v6529, %v6541
        %v6543 = vpop.f32.mrf.mxu0
        %6544 = vdwg.mxu0
        %6545 = vmatpush.bf16.msra.mxu0 %v4995
        %6546 = vmatpush.bf16.msra.mxu0 %v4994
        %6547 = vmatpush.bf16.msra.mxu0 %v4993
        %6548 = vmatpush.bf16.msra.mxu0 %v4992
        %6549 = vmatpush.bf16.msra.mxu0 %v4991
        %6550 = vmatpush.bf16.msra.mxu0 %v4990
        %6551 = vmatpush.bf16.msra.mxu0 %v4989
        %6552 = vmatpush.bf16.msra.mxu0 %v4988
        %6553 = vmatmul.bf16.gmra.mxu0 %v493
        %v6554 = vpop.f32.mrf.mxu0
        %v6555 = vadd.f32 %v6542, %v6554
        %v6556 = vpop.f32.mrf.mxu0
        %6557 = vdwg.mxu0
        %6558 = vmatpush.bf16.msra.mxu0 %v5003
        %6559 = vmatpush.bf16.msra.mxu0 %v5002
        %6560 = vmatpush.bf16.msra.mxu0 %v5001
        %6561 = vmatpush.bf16.msra.mxu0 %v5000
        %6562 = vmatpush.bf16.msra.mxu0 %v4999
        %6563 = vmatpush.bf16.msra.mxu0 %v4998
        %6564 = vmatpush.bf16.msra.mxu0 %v4997
        %6565 = vmatpush.bf16.msra.mxu0 %v4996
        %6566 = vmatmul.bf16.gmra.mxu0 %v494
        %v6567 = vpop.f32.mrf.mxu0
        %v6568 = vadd.f32 %v6555, %v6567
        %v6569 = vpop.f32.mrf.mxu0
        %6570 = vdwg.mxu0
        %6571 = vmatpush.bf16.msra.mxu0 %v5011
        %6572 = vmatpush.bf16.msra.mxu0 %v5010
        %6573 = vmatpush.bf16.msra.mxu0 %v5009
        %6574 = vmatpush.bf16.msra.mxu0 %v5008
        %6575 = vmatpush.bf16.msra.mxu0 %v5007
        %6576 = vmatpush.bf16.msra.mxu0 %v5006
        %6577 = vmatpush.bf16.msra.mxu0 %v5005
        %6578 = vmatpush.bf16.msra.mxu0 %v5004
        %6579 = vmatmul.bf16.gmra.mxu0 %v495
        %v6580 = vpop.f32.mrf.mxu0
        %v6581 = vadd.f32 %v6568, %v6580
        %v6582 = vpop.f32.mrf.mxu0
        %6583 = vdwg.mxu0
        %6584 = vmatpush.bf16.msra.mxu0 %v5019
        %6585 = vmatpush.bf16.msra.mxu0 %v5018
        %6586 = vmatpush.bf16.msra.mxu0 %v5017
        %6587 = vmatpush.bf16.msra.mxu0 %v5016
        %6588 = vmatpush.bf16.msra.mxu0 %v5015
        %6589 = vmatpush.bf16.msra.mxu0 %v5014
        %6590 = vmatpush.bf16.msra.mxu0 %v5013
        %6591 = vmatpush.bf16.msra.mxu0 %v5012
        %6592 = vmatmul.bf16.gmra.mxu0 %v496
        %v6593 = vpop.f32.mrf.mxu0
        %v6594 = vadd.f32 %v6581, %v6593
        %v6595 = vpop.f32.mrf.mxu0
        %6596 = vdwg.mxu0
        %6597 = vmatpush.bf16.msra.mxu0 %v5027
        %6598 = vmatpush.bf16.msra.mxu0 %v5026
        %6599 = vmatpush.bf16.msra.mxu0 %v5025
        %6600 = vmatpush.bf16.msra.mxu0 %v5024
        %6601 = vmatpush.bf16.msra.mxu0 %v5023
        %6602 = vmatpush.bf16.msra.mxu0 %v5022
        %6603 = vmatpush.bf16.msra.mxu0 %v5021
        %6604 = vmatpush.bf16.msra.mxu0 %v5020
        %6605 = vmatmul.bf16.gmra.mxu0 %v497
        %v6606 = vpop.f32.mrf.mxu0
        %v6607 = vadd.f32 %v6594, %v6606
        %v6608 = vpop.f32.mrf.mxu0
        %6609 = vdwg.mxu0
        %6610 = vmatpush.bf16.msra.mxu0 %v5035
        %6611 = vmatpush.bf16.msra.mxu0 %v5034
        %6612 = vmatpush.bf16.msra.mxu0 %v5033
        %6613 = vmatpush.bf16.msra.mxu0 %v5032
        %6614 = vmatpush.bf16.msra.mxu0 %v5031
        %6615 = vmatpush.bf16.msra.mxu0 %v5030
        %6616 = vmatpush.bf16.msra.mxu0 %v5029
        %6617 = vmatpush.bf16.msra.mxu0 %v5028
        %6618 = vmatmul.bf16.gmra.mxu0 %v498
        %v6619 = vpop.f32.mrf.mxu0
        %v6620 = vadd.f32 %v6607, %v6619
        %v6621 = vpop.f32.mrf.mxu0
        %6622 = vdwg.mxu0
        %6623 = vmatpush.bf16.msra.mxu0 %v5043
        %6624 = vmatpush.bf16.msra.mxu0 %v5042
        %6625 = vmatpush.bf16.msra.mxu0 %v5041
        %6626 = vmatpush.bf16.msra.mxu0 %v5040
        %6627 = vmatpush.bf16.msra.mxu0 %v5039
        %6628 = vmatpush.bf16.msra.mxu0 %v5038
        %6629 = vmatpush.bf16.msra.mxu0 %v5037
        %6630 = vmatpush.bf16.msra.mxu0 %v5036
        %6631 = vmatmul.bf16.gmra.mxu0 %v499
        %v6632 = vpop.f32.mrf.mxu0
        %v6633 = vadd.f32 %v6620, %v6632
        %v6634 = vpop.f32.mrf.mxu0
        %6635 = vdwg.mxu0
        %6636 = vmatpush.bf16.msra.mxu0 %v5051
        %6637 = vmatpush.bf16.msra.mxu0 %v5050
        %6638 = vmatpush.bf16.msra.mxu0 %v5049
        %6639 = vmatpush.bf16.msra.mxu0 %v5048
        %6640 = vmatpush.bf16.msra.mxu0 %v5047
        %6641 = vmatpush.bf16.msra.mxu0 %v5046
        %6642 = vmatpush.bf16.msra.mxu0 %v5045
        %6643 = vmatpush.bf16.msra.mxu0 %v5044
        %6644 = vmatmul.bf16.gmra.mxu0 %v500
        %v6645 = vpop.f32.mrf.mxu0
        %v6646 = vadd.f32 %v6633, %v6645
        %v6647 = vpop.f32.mrf.mxu0
        %6648 = vdwg.mxu0
        %6649 = vmatpush.bf16.msra.mxu0 %v5059
        %6650 = vmatpush.bf16.msra.mxu0 %v5058
        %6651 = vmatpush.bf16.msra.mxu0 %v5057
        %6652 = vmatpush.bf16.msra.mxu0 %v5056
        %6653 = vmatpush.bf16.msra.mxu0 %v5055
        %6654 = vmatpush.bf16.msra.mxu0 %v5054
        %6655 = vmatpush.bf16.msra.mxu0 %v5053
        %6656 = vmatpush.bf16.msra.mxu0 %v5052
        %6657 = vmatmul.bf16.gmra.mxu0 %v501
        %v6658 = vpop.f32.mrf.mxu0
        %v6659 = vadd.f32 %v6646, %v6658
        %v6660 = vpop.f32.mrf.mxu0
        %6661 = vdwg.mxu0
        %6662 = vmatpush.bf16.msra.mxu0 %v5067
        %6663 = vmatpush.bf16.msra.mxu0 %v5066
        %6664 = vmatpush.bf16.msra.mxu0 %v5065
        %6665 = vmatpush.bf16.msra.mxu0 %v5064
        %6666 = vmatpush.bf16.msra.mxu0 %v5063
        %6667 = vmatpush.bf16.msra.mxu0 %v5062
        %6668 = vmatpush.bf16.msra.mxu0 %v5061
        %6669 = vmatpush.bf16.msra.mxu0 %v5060
        %6670 = vmatmul.bf16.gmra.mxu0 %v502
        %v6671 = vpop.f32.mrf.mxu0
        %v6672 = vadd.f32 %v6659, %v6671
        %v6673 = vpop.f32.mrf.mxu0
        %6674 = vdwg.mxu0
        %6675 = vmatpush.bf16.msra.mxu0 %v5075
        %6676 = vmatpush.bf16.msra.mxu0 %v5074
        %6677 = vmatpush.bf16.msra.mxu0 %v5073
        %6678 = vmatpush.bf16.msra.mxu0 %v5072
        %6679 = vmatpush.bf16.msra.mxu0 %v5071
        %6680 = vmatpush.bf16.msra.mxu0 %v5070
        %6681 = vmatpush.bf16.msra.mxu0 %v5069
        %6682 = vmatpush.bf16.msra.mxu0 %v5068
        %6683 = vmatmul.bf16.gmra.mxu0 %v503
        %v6684 = vpop.f32.mrf.mxu0
        %v6685 = vadd.f32 %v6672, %v6684
        %v6686 = vpop.f32.mrf.mxu0
        %6687 = vdwg.mxu0
        %6688 = vmatpush.bf16.msra.mxu0 %v5083
        %6689 = vmatpush.bf16.msra.mxu0 %v5082
        %6690 = vmatpush.bf16.msra.mxu0 %v5081
        %6691 = vmatpush.bf16.msra.mxu0 %v5080
        %6692 = vmatpush.bf16.msra.mxu0 %v5079
        %6693 = vmatpush.bf16.msra.mxu0 %v5078
        %6694 = vmatpush.bf16.msra.mxu0 %v5077
        %6695 = vmatpush.bf16.msra.mxu0 %v5076
        %6696 = vmatmul.bf16.gmra.mxu0 %v504
        %v6697 = vpop.f32.mrf.mxu0
        %v6698 = vadd.f32 %v6685, %v6697
        %v6699 = vpop.f32.mrf.mxu0
        %6700 = vdwg.mxu0
        %6701 = vmatpush.bf16.msra.mxu0 %v5091
        %6702 = vmatpush.bf16.msra.mxu0 %v5090
        %6703 = vmatpush.bf16.msra.mxu0 %v5089
        %6704 = vmatpush.bf16.msra.mxu0 %v5088
        %6705 = vmatpush.bf16.msra.mxu0 %v5087
        %6706 = vmatpush.bf16.msra.mxu0 %v5086
        %6707 = vmatpush.bf16.msra.mxu0 %v5085
        %6708 = vmatpush.bf16.msra.mxu0 %v5084
        %6709 = vmatmul.bf16.gmra.mxu0 %v505
        %v6710 = vpop.f32.mrf.mxu0
        %v6711 = vadd.f32 %v6698, %v6710
        %v6712 = vpop.f32.mrf.mxu0
        %6713 = vdwg.mxu0
        %6714 = vmatpush.bf16.msra.mxu0 %v5099
        %6715 = vmatpush.bf16.msra.mxu0 %v5098
        %6716 = vmatpush.bf16.msra.mxu0 %v5097
        %6717 = vmatpush.bf16.msra.mxu0 %v5096
        %6718 = vmatpush.bf16.msra.mxu0 %v5095
        %6719 = vmatpush.bf16.msra.mxu0 %v5094
        %6720 = vmatpush.bf16.msra.mxu0 %v5093
        %6721 = vmatpush.bf16.msra.mxu0 %v5092
        %6722 = vmatmul.bf16.gmra.mxu0 %v506
        %v6723 = vpop.f32.mrf.mxu0
        %v6724 = vadd.f32 %v6711, %v6723
        %v6725 = vpop.f32.mrf.mxu0
        %6726 = vdwg.mxu0
        %6727 = vmatpush.bf16.msra.mxu0 %v5107
        %6728 = vmatpush.bf16.msra.mxu0 %v5106
        %6729 = vmatpush.bf16.msra.mxu0 %v5105
        %6730 = vmatpush.bf16.msra.mxu0 %v5104
        %6731 = vmatpush.bf16.msra.mxu0 %v5103
        %6732 = vmatpush.bf16.msra.mxu0 %v5102
        %6733 = vmatpush.bf16.msra.mxu0 %v5101
        %6734 = vmatpush.bf16.msra.mxu0 %v5100
        %6735 = vmatmul.bf16.gmra.mxu0 %v507
        %v6736 = vpop.f32.mrf.mxu0
        %v6737 = vadd.f32 %v6724, %v6736
        %v6738 = vpop.f32.mrf.mxu0
        %6739 = vdwg.mxu0
        %6740 = vmatpush.bf16.msra.mxu0 %v5115
        %6741 = vmatpush.bf16.msra.mxu0 %v5114
        %6742 = vmatpush.bf16.msra.mxu0 %v5113
        %6743 = vmatpush.bf16.msra.mxu0 %v5112
        %6744 = vmatpush.bf16.msra.mxu0 %v5111
        %6745 = vmatpush.bf16.msra.mxu0 %v5110
        %6746 = vmatpush.bf16.msra.mxu0 %v5109
        %6747 = vmatpush.bf16.msra.mxu0 %v5108
        %6748 = vmatmul.bf16.gmra.mxu0 %v508
        %v6749 = vpop.f32.mrf.mxu0
        %v6750 = vadd.f32 %v6737, %v6749
        %v6751 = vpop.f32.mrf.mxu0
        %6752 = vdwg.mxu0
        %6753 = vmatpush.bf16.msra.mxu0 %v5123
        %6754 = vmatpush.bf16.msra.mxu0 %v5122
        %6755 = vmatpush.bf16.msra.mxu0 %v5121
        %6756 = vmatpush.bf16.msra.mxu0 %v5120
        %6757 = vmatpush.bf16.msra.mxu0 %v5119
        %6758 = vmatpush.bf16.msra.mxu0 %v5118
        %6759 = vmatpush.bf16.msra.mxu0 %v5117
        %6760 = vmatpush.bf16.msra.mxu0 %v5116
        %6761 = vmatmul.bf16.gmra.mxu0 %v509
        %v6762 = vpop.f32.mrf.mxu0
        %v6763 = vadd.f32 %v6750, %v6762
        %v6764 = vpop.f32.mrf.mxu0
        %6765 = vdwg.mxu0
        %6766 = vmatpush.bf16.msra.mxu0 %v5131
        %6767 = vmatpush.bf16.msra.mxu0 %v5130
        %6768 = vmatpush.bf16.msra.mxu0 %v5129
        %6769 = vmatpush.bf16.msra.mxu0 %v5128
        %6770 = vmatpush.bf16.msra.mxu0 %v5127
        %6771 = vmatpush.bf16.msra.mxu0 %v5126
        %6772 = vmatpush.bf16.msra.mxu0 %v5125
        %6773 = vmatpush.bf16.msra.mxu0 %v5124
        %6774 = vmatmul.bf16.gmra.mxu0 %v510
        %v6775 = vpop.f32.mrf.mxu0
        %v6776 = vadd.f32 %v6763, %v6775
        %v6777 = vpop.f32.mrf.mxu0
        %6778 = vdwg.mxu0
        %6779 = vmatpush.bf16.msra.mxu0 %v5139
        %6780 = vmatpush.bf16.msra.mxu0 %v5138
        %6781 = vmatpush.bf16.msra.mxu0 %v5137
        %6782 = vmatpush.bf16.msra.mxu0 %v5136
        %6783 = vmatpush.bf16.msra.mxu0 %v5135
        %6784 = vmatpush.bf16.msra.mxu0 %v5134
        %6785 = vmatpush.bf16.msra.mxu0 %v5133
        %6786 = vmatpush.bf16.msra.mxu0 %v5132
        %6787 = vmatmul.bf16.gmra.mxu0 %v511
        %v6788 = vpop.f32.mrf.mxu0
        %v6789 = vadd.f32 %v6776, %v6788
        %v6790 = vpop.f32.mrf.mxu0
        %6791 = vdwg.mxu0
        %6792 = vmatpush.bf16.msra.mxu0 %v5147
        %6793 = vmatpush.bf16.msra.mxu0 %v5146
        %6794 = vmatpush.bf16.msra.mxu0 %v5145
        %6795 = vmatpush.bf16.msra.mxu0 %v5144
        %6796 = vmatpush.bf16.msra.mxu0 %v5143
        %6797 = vmatpush.bf16.msra.mxu0 %v5142
        %6798 = vmatpush.bf16.msra.mxu0 %v5141
        %6799 = vmatpush.bf16.msra.mxu0 %v5140
        %6800 = vmatmul.bf16.gmra.mxu0 %v512
        %v6801 = vpop.f32.mrf.mxu0
        %v6802 = vadd.f32 %v6789, %v6801
        %v6803 = vpop.f32.mrf.mxu0
        %6804 = vdwg.mxu0
        %6805 = vmatpush.bf16.msra.mxu0 %v5155
        %6806 = vmatpush.bf16.msra.mxu0 %v5154
        %6807 = vmatpush.bf16.msra.mxu0 %v5153
        %6808 = vmatpush.bf16.msra.mxu0 %v5152
        %6809 = vmatpush.bf16.msra.mxu0 %v5151
        %6810 = vmatpush.bf16.msra.mxu0 %v5150
        %6811 = vmatpush.bf16.msra.mxu0 %v5149
        %6812 = vmatpush.bf16.msra.mxu0 %v5148
        %6813 = vmatmul.bf16.gmra.mxu0 %v513
        %v6814 = vpop.f32.mrf.mxu0
        %v6815 = vadd.f32 %v6802, %v6814
        %v6816 = vpop.f32.mrf.mxu0
        %6817 = vdwg.mxu0
        %6818 = vmatpush.bf16.msra.mxu0 %v5163
        %6819 = vmatpush.bf16.msra.mxu0 %v5162
        %6820 = vmatpush.bf16.msra.mxu0 %v5161
        %6821 = vmatpush.bf16.msra.mxu0 %v5160
        %6822 = vmatpush.bf16.msra.mxu0 %v5159
        %6823 = vmatpush.bf16.msra.mxu0 %v5158
        %6824 = vmatpush.bf16.msra.mxu0 %v5157
        %6825 = vmatpush.bf16.msra.mxu0 %v5156
        %6826 = vmatmul.bf16.gmra.mxu0 %v514
        %v6827 = vpop.f32.mrf.mxu0
        %v6828 = vadd.f32 %v6815, %v6827
        %v6829 = vpop.f32.mrf.mxu0
        %6830 = vdwg.mxu0
        %6831 = vmatpush.bf16.msra.mxu0 %v5171
        %6832 = vmatpush.bf16.msra.mxu0 %v5170
        %6833 = vmatpush.bf16.msra.mxu0 %v5169
        %6834 = vmatpush.bf16.msra.mxu0 %v5168
        %6835 = vmatpush.bf16.msra.mxu0 %v5167
        %6836 = vmatpush.bf16.msra.mxu0 %v5166
        %6837 = vmatpush.bf16.msra.mxu0 %v5165
        %6838 = vmatpush.bf16.msra.mxu0 %v5164
        %6839 = vmatmul.bf16.gmra.mxu0 %v515
        %v6840 = vpop.f32.mrf.mxu0
        %v6841 = vadd.f32 %v6828, %v6840
        %v6842 = vpop.f32.mrf.mxu0
        %6843 = vdwg.mxu0
        %6844 = vmatpush.bf16.msra.mxu0 %v5179
        %6845 = vmatpush.bf16.msra.mxu0 %v5178
        %6846 = vmatpush.bf16.msra.mxu0 %v5177
        %6847 = vmatpush.bf16.msra.mxu0 %v5176
        %6848 = vmatpush.bf16.msra.mxu0 %v5175
        %6849 = vmatpush.bf16.msra.mxu0 %v5174
        %6850 = vmatpush.bf16.msra.mxu0 %v5173
        %6851 = vmatpush.bf16.msra.mxu0 %v5172
        %6852 = vmatmul.bf16.gmra.mxu0 %v516
        %v6853 = vpop.f32.mrf.mxu0
        %v6854 = vadd.f32 %v6841, %v6853
        %v6855 = vpop.f32.mrf.mxu0
        %6856 = vdwg.mxu0
        %6857 = vmatpush.bf16.msra.mxu0 %v5187
        %6858 = vmatpush.bf16.msra.mxu0 %v5186
        %6859 = vmatpush.bf16.msra.mxu0 %v5185
        %6860 = vmatpush.bf16.msra.mxu0 %v5184
        %6861 = vmatpush.bf16.msra.mxu0 %v5183
        %6862 = vmatpush.bf16.msra.mxu0 %v5182
        %6863 = vmatpush.bf16.msra.mxu0 %v5181
        %6864 = vmatpush.bf16.msra.mxu0 %v5180
        %6865 = vmatmul.bf16.gmra.mxu0 %v517
        %v6866 = vpop.f32.mrf.mxu0
        %v6867 = vadd.f32 %v6854, %v6866
        %v6868 = vpop.f32.mrf.mxu0
        %6869 = vdwg.mxu0
        %6870 = vmatpush.bf16.msra.mxu0 %v5195
        %6871 = vmatpush.bf16.msra.mxu0 %v5194
        %6872 = vmatpush.bf16.msra.mxu0 %v5193
        %6873 = vmatpush.bf16.msra.mxu0 %v5192
        %6874 = vmatpush.bf16.msra.mxu0 %v5191
        %6875 = vmatpush.bf16.msra.mxu0 %v5190
        %6876 = vmatpush.bf16.msra.mxu0 %v5189
        %6877 = vmatpush.bf16.msra.mxu0 %v5188
        %6878 = vmatmul.bf16.gmra.mxu0 %v518
        %v6879 = vpop.f32.mrf.mxu0
        %v6880 = vadd.f32 %v6867, %v6879
        %v6881 = vpop.f32.mrf.mxu0
        %6882 = vdwg.mxu0
        %6883 = vmatpush.bf16.msra.mxu0 %v5203
        %6884 = vmatpush.bf16.msra.mxu0 %v5202
        %6885 = vmatpush.bf16.msra.mxu0 %v5201
        %6886 = vmatpush.bf16.msra.mxu0 %v5200
        %6887 = vmatpush.bf16.msra.mxu0 %v5199
        %6888 = vmatpush.bf16.msra.mxu0 %v5198
        %6889 = vmatpush.bf16.msra.mxu0 %v5197
        %6890 = vmatpush.bf16.msra.mxu0 %v5196
        %6891 = vmatmul.bf16.gmra.mxu0 %v519
        %v6892 = vpop.f32.mrf.mxu0
        %v6893 = vadd.f32 %v6880, %v6892
        %v6894 = vpop.f32.mrf.mxu0
        %6895 = vdwg.mxu0
        %6896 = vmatpush.bf16.msra.mxu0 %v5211
        %6897 = vmatpush.bf16.msra.mxu0 %v5210
        %6898 = vmatpush.bf16.msra.mxu0 %v5209
        %6899 = vmatpush.bf16.msra.mxu0 %v5208
        %6900 = vmatpush.bf16.msra.mxu0 %v5207
        %6901 = vmatpush.bf16.msra.mxu0 %v5206
        %6902 = vmatpush.bf16.msra.mxu0 %v5205
        %6903 = vmatpush.bf16.msra.mxu0 %v5204
        %6904 = vmatmul.bf16.gmra.mxu0 %v520
        %v6905 = vpop.f32.mrf.mxu0
        %v6906 = vadd.f32 %v6893, %v6905
        %v6907 = vpop.f32.mrf.mxu0
        %6908 = vdwg.mxu0
        %6909 = vmatpush.bf16.msra.mxu0 %v5219
        %6910 = vmatpush.bf16.msra.mxu0 %v5218
        %6911 = vmatpush.bf16.msra.mxu0 %v5217
        %6912 = vmatpush.bf16.msra.mxu0 %v5216
        %6913 = vmatpush.bf16.msra.mxu0 %v5215
        %6914 = vmatpush.bf16.msra.mxu0 %v5214
        %6915 = vmatpush.bf16.msra.mxu0 %v5213
        %6916 = vmatpush.bf16.msra.mxu0 %v5212
        %6917 = vmatmul.bf16.gmra.mxu0 %v521
        %v6918 = vpop.f32.mrf.mxu0
        %v6919 = vadd.f32 %v6906, %v6918
        %v6920 = vpop.f32.mrf.mxu0
        %6921 = vdwg.mxu0
        %6922 = vmatpush.bf16.msra.mxu0 %v5227
        %6923 = vmatpush.bf16.msra.mxu0 %v5226
        %6924 = vmatpush.bf16.msra.mxu0 %v5225
        %6925 = vmatpush.bf16.msra.mxu0 %v5224
        %6926 = vmatpush.bf16.msra.mxu0 %v5223
        %6927 = vmatpush.bf16.msra.mxu0 %v5222
        %6928 = vmatpush.bf16.msra.mxu0 %v5221
        %6929 = vmatpush.bf16.msra.mxu0 %v5220
        %6930 = vmatmul.bf16.gmra.mxu0 %v522
        %v6931 = vpop.f32.mrf.mxu0
        %v6932 = vadd.f32 %v6919, %v6931
        %v6933 = vpop.f32.mrf.mxu0
        %6934 = vdwg.mxu0
        %6935 = vmatpush.bf16.msra.mxu0 %v5235
        %6936 = vmatpush.bf16.msra.mxu0 %v5234
        %6937 = vmatpush.bf16.msra.mxu0 %v5233
        %6938 = vmatpush.bf16.msra.mxu0 %v5232
        %6939 = vmatpush.bf16.msra.mxu0 %v5231
        %6940 = vmatpush.bf16.msra.mxu0 %v5230
        %6941 = vmatpush.bf16.msra.mxu0 %v5229
        %6942 = vmatpush.bf16.msra.mxu0 %v5228
        %6943 = vmatmul.bf16.gmra.mxu0 %v523
        %v6944 = vpop.f32.mrf.mxu0
        %v6945 = vadd.f32 %v6932, %v6944
        %v6946 = vpop.f32.mrf.mxu0
        %6947 = vdwg.mxu0
        %6948 = vmatpush.bf16.msra.mxu0 %v5243
        %6949 = vmatpush.bf16.msra.mxu0 %v5242
        %6950 = vmatpush.bf16.msra.mxu0 %v5241
        %6951 = vmatpush.bf16.msra.mxu0 %v5240
        %6952 = vmatpush.bf16.msra.mxu0 %v5239
        %6953 = vmatpush.bf16.msra.mxu0 %v5238
        %6954 = vmatpush.bf16.msra.mxu0 %v5237
        %6955 = vmatpush.bf16.msra.mxu0 %v5236
        %6956 = vmatmul.bf16.gmra.mxu0 %v524
        %v6957 = vpop.f32.mrf.mxu0
        %v6958 = vadd.f32 %v6945, %v6957
        %v6959 = vpop.f32.mrf.mxu0
        %6960 = vdwg.mxu0
        %6961 = vmatpush.bf16.msra.mxu0 %v5251
        %6962 = vmatpush.bf16.msra.mxu0 %v5250
        %6963 = vmatpush.bf16.msra.mxu0 %v5249
        %6964 = vmatpush.bf16.msra.mxu0 %v5248
        %6965 = vmatpush.bf16.msra.mxu0 %v5247
        %6966 = vmatpush.bf16.msra.mxu0 %v5246
        %6967 = vmatpush.bf16.msra.mxu0 %v5245
        %6968 = vmatpush.bf16.msra.mxu0 %v5244
        %6969 = vmatmul.bf16.gmra.mxu0 %v525
        %v6970 = vpop.f32.mrf.mxu0
        %v6971 = vadd.f32 %v6958, %v6970
        %v6972 = vpop.f32.mrf.mxu0
        %6973 = vdwg.mxu0
        %6974 = vmatpush.bf16.msra.mxu0 %v5259
        %6975 = vmatpush.bf16.msra.mxu0 %v5258
        %6976 = vmatpush.bf16.msra.mxu0 %v5257
        %6977 = vmatpush.bf16.msra.mxu0 %v5256
        %6978 = vmatpush.bf16.msra.mxu0 %v5255
        %6979 = vmatpush.bf16.msra.mxu0 %v5254
        %6980 = vmatpush.bf16.msra.mxu0 %v5253
        %6981 = vmatpush.bf16.msra.mxu0 %v5252
        %6982 = vmatmul.bf16.gmra.mxu0 %v526
        %v6983 = vpop.f32.mrf.mxu0
        %v6984 = vadd.f32 %v6971, %v6983
        %v6985 = vpop.f32.mrf.mxu0
        %6986 = vdwg.mxu0
        %6987 = vmatpush.bf16.msra.mxu0 %v5267
        %6988 = vmatpush.bf16.msra.mxu0 %v5266
        %6989 = vmatpush.bf16.msra.mxu0 %v5265
        %6990 = vmatpush.bf16.msra.mxu0 %v5264
        %6991 = vmatpush.bf16.msra.mxu0 %v5263
        %6992 = vmatpush.bf16.msra.mxu0 %v5262
        %6993 = vmatpush.bf16.msra.mxu0 %v5261
        %6994 = vmatpush.bf16.msra.mxu0 %v5260
        %6995 = vmatmul.bf16.gmra.mxu0 %v527
        %v6996 = vpop.f32.mrf.mxu0
        %v6997 = vadd.f32 %v6984, %v6996
        %v6998 = vpop.f32.mrf.mxu0
        %6999 = vdwg.mxu0
        %7000 = vmatpush.bf16.msra.mxu0 %v5275
        %7001 = vmatpush.bf16.msra.mxu0 %v5274
        %7002 = vmatpush.bf16.msra.mxu0 %v5273
        %7003 = vmatpush.bf16.msra.mxu0 %v5272
        %7004 = vmatpush.bf16.msra.mxu0 %v5271
        %7005 = vmatpush.bf16.msra.mxu0 %v5270
        %7006 = vmatpush.bf16.msra.mxu0 %v5269
        %7007 = vmatpush.bf16.msra.mxu0 %v5268
        %7008 = vmatmul.bf16.gmra.mxu0 %v528
        %v7009 = vpop.f32.mrf.mxu0
        %v7010 = vadd.f32 %v6997, %v7009
        %v7011 = vpop.f32.mrf.mxu0
        %7012 = vdwg.mxu0
        %7013 = vmatpush.bf16.msra.mxu0 %v5283
        %7014 = vmatpush.bf16.msra.mxu0 %v5282
        %7015 = vmatpush.bf16.msra.mxu0 %v5281
        %7016 = vmatpush.bf16.msra.mxu0 %v5280
        %7017 = vmatpush.bf16.msra.mxu0 %v5279
        %7018 = vmatpush.bf16.msra.mxu0 %v5278
        %7019 = vmatpush.bf16.msra.mxu0 %v5277
        %7020 = vmatpush.bf16.msra.mxu0 %v5276
        %7021 = vmatmul.bf16.gmra.mxu0 %v529
        %v7022 = vpop.f32.mrf.mxu0
        %v7023 = vadd.f32 %v7010, %v7022
        %v7024 = vpop.f32.mrf.mxu0
        %7025 = vdwg.mxu0
        %7026 = vmatpush.bf16.msra.mxu0 %v5291
        %7027 = vmatpush.bf16.msra.mxu0 %v5290
        %7028 = vmatpush.bf16.msra.mxu0 %v5289
        %7029 = vmatpush.bf16.msra.mxu0 %v5288
        %7030 = vmatpush.bf16.msra.mxu0 %v5287
        %7031 = vmatpush.bf16.msra.mxu0 %v5286
        %7032 = vmatpush.bf16.msra.mxu0 %v5285
        %7033 = vmatpush.bf16.msra.mxu0 %v5284
        %7034 = vmatmul.bf16.gmra.mxu0 %v530
        %v7035 = vpop.f32.mrf.mxu0
        %v7036 = vadd.f32 %v7023, %v7035
        %v7037 = vpop.f32.mrf.mxu0
        %7038 = vdwg.mxu0
        %7039 = vmatpush.bf16.msra.mxu0 %v5299
        %7040 = vmatpush.bf16.msra.mxu0 %v5298
        %7041 = vmatpush.bf16.msra.mxu0 %v5297
        %7042 = vmatpush.bf16.msra.mxu0 %v5296
        %7043 = vmatpush.bf16.msra.mxu0 %v5295
        %7044 = vmatpush.bf16.msra.mxu0 %v5294
        %7045 = vmatpush.bf16.msra.mxu0 %v5293
        %7046 = vmatpush.bf16.msra.mxu0 %v5292
        %7047 = vmatmul.bf16.gmra.mxu0 %v531
        %v7048 = vpop.f32.mrf.mxu0
        %v7049 = vadd.f32 %v7036, %v7048
        %v7050 = vpop.f32.mrf.mxu0
        %7051 = vdwg.mxu0
        %7052 = vmatpush.bf16.msra.mxu0 %v5307
        %7053 = vmatpush.bf16.msra.mxu0 %v5306
        %7054 = vmatpush.bf16.msra.mxu0 %v5305
        %7055 = vmatpush.bf16.msra.mxu0 %v5304
        %7056 = vmatpush.bf16.msra.mxu0 %v5303
        %7057 = vmatpush.bf16.msra.mxu0 %v5302
        %7058 = vmatpush.bf16.msra.mxu0 %v5301
        %7059 = vmatpush.bf16.msra.mxu0 %v5300
        %7060 = vmatmul.bf16.gmra.mxu0 %v532
        %v7061 = vpop.f32.mrf.mxu0
        %v7062 = vadd.f32 %v7049, %v7061
        %v7063 = vpop.f32.mrf.mxu0
        %7064 = vdwg.mxu0
        %7065 = vmatpush.bf16.msra.mxu0 %v5315
        %7066 = vmatpush.bf16.msra.mxu0 %v5314
        %7067 = vmatpush.bf16.msra.mxu0 %v5313
        %7068 = vmatpush.bf16.msra.mxu0 %v5312
        %7069 = vmatpush.bf16.msra.mxu0 %v5311
        %7070 = vmatpush.bf16.msra.mxu0 %v5310
        %7071 = vmatpush.bf16.msra.mxu0 %v5309
        %7072 = vmatpush.bf16.msra.mxu0 %v5308
        %7073 = vmatmul.bf16.gmra.mxu0 %v533
        %v7074 = vpop.f32.mrf.mxu0
        %v7075 = vadd.f32 %v7062, %v7074
        %v7076 = vpop.f32.mrf.mxu0
        %7077 = vdwg.mxu0
        %7078 = vmatpush.bf16.msra.mxu0 %v5323
        %7079 = vmatpush.bf16.msra.mxu0 %v5322
        %7080 = vmatpush.bf16.msra.mxu0 %v5321
        %7081 = vmatpush.bf16.msra.mxu0 %v5320
        %7082 = vmatpush.bf16.msra.mxu0 %v5319
        %7083 = vmatpush.bf16.msra.mxu0 %v5318
        %7084 = vmatpush.bf16.msra.mxu0 %v5317
        %7085 = vmatpush.bf16.msra.mxu0 %v5316
        %7086 = vmatmul.bf16.gmra.mxu0 %v534
        %v7087 = vpop.f32.mrf.mxu0
        %v7088 = vadd.f32 %v7075, %v7087
        %v7089 = vpop.f32.mrf.mxu0
        %7090 = vdwg.mxu0
        %7091 = vmatpush.bf16.msra.mxu0 %v5331
        %7092 = vmatpush.bf16.msra.mxu0 %v5330
        %7093 = vmatpush.bf16.msra.mxu0 %v5329
        %7094 = vmatpush.bf16.msra.mxu0 %v5328
        %7095 = vmatpush.bf16.msra.mxu0 %v5327
        %7096 = vmatpush.bf16.msra.mxu0 %v5326
        %7097 = vmatpush.bf16.msra.mxu0 %v5325
        %7098 = vmatpush.bf16.msra.mxu0 %v5324
        %7099 = vmatmul.bf16.gmra.mxu0 %v535
        %v7100 = vpop.f32.mrf.mxu0
        %v7101 = vadd.f32 %v7088, %v7100
        %v7102 = vpop.f32.mrf.mxu0
        %7103 = vdwg.mxu0
        %7104 = vmatpush.bf16.msra.mxu0 %v5339
        %7105 = vmatpush.bf16.msra.mxu0 %v5338
        %7106 = vmatpush.bf16.msra.mxu0 %v5337
        %7107 = vmatpush.bf16.msra.mxu0 %v5336
        %7108 = vmatpush.bf16.msra.mxu0 %v5335
        %7109 = vmatpush.bf16.msra.mxu0 %v5334
        %7110 = vmatpush.bf16.msra.mxu0 %v5333
        %7111 = vmatpush.bf16.msra.mxu0 %v5332
        %7112 = vmatmul.bf16.gmra.mxu0 %v536
        %v7113 = vpop.f32.mrf.mxu0
        %v7114 = vadd.f32 %v7101, %v7113
        %v7115 = vpop.f32.mrf.mxu0
        %7116 = vdwg.mxu0
        %7117 = vmatpush.bf16.msra.mxu0 %v5347
        %7118 = vmatpush.bf16.msra.mxu0 %v5346
        %7119 = vmatpush.bf16.msra.mxu0 %v5345
        %7120 = vmatpush.bf16.msra.mxu0 %v5344
        %7121 = vmatpush.bf16.msra.mxu0 %v5343
        %7122 = vmatpush.bf16.msra.mxu0 %v5342
        %7123 = vmatpush.bf16.msra.mxu0 %v5341
        %7124 = vmatpush.bf16.msra.mxu0 %v5340
        %7125 = vmatmul.bf16.gmra.mxu0 %v537
        %v7126 = vpop.f32.mrf.mxu0
        %v7127 = vadd.f32 %v7114, %v7126
        %v7128 = vpop.f32.mrf.mxu0
        %7129 = vdwg.mxu0
        %7130 = vmatpush.bf16.msra.mxu0 %v5355
        %7131 = vmatpush.bf16.msra.mxu0 %v5354
        %7132 = vmatpush.bf16.msra.mxu0 %v5353
        %7133 = vmatpush.bf16.msra.mxu0 %v5352
        %7134 = vmatpush.bf16.msra.mxu0 %v5351
        %7135 = vmatpush.bf16.msra.mxu0 %v5350
        %7136 = vmatpush.bf16.msra.mxu0 %v5349
        %7137 = vmatpush.bf16.msra.mxu0 %v5348
        %7138 = vmatmul.bf16.gmra.mxu0 %v538
        %v7139 = vpop.f32.mrf.mxu0
        %v7140 = vadd.f32 %v7127, %v7139
        %v7141 = vpop.f32.mrf.mxu0
        %7142 = vdwg.mxu0
        %7143 = vmatpush.bf16.msra.mxu0 %v5363
        %7144 = vmatpush.bf16.msra.mxu0 %v5362
        %7145 = vmatpush.bf16.msra.mxu0 %v5361
        %7146 = vmatpush.bf16.msra.mxu0 %v5360
        %7147 = vmatpush.bf16.msra.mxu0 %v5359
        %7148 = vmatpush.bf16.msra.mxu0 %v5358
        %7149 = vmatpush.bf16.msra.mxu0 %v5357
        %7150 = vmatpush.bf16.msra.mxu0 %v5356
        %7151 = vmatmul.bf16.gmra.mxu0 %v539
        %v7152 = vpop.f32.mrf.mxu0
        %v7153 = vadd.f32 %v7140, %v7152
        %v7154 = vpop.f32.mrf.mxu0
        %7155 = vdwg.mxu0
        %7156 = vmatpush.bf16.msra.mxu0 %v5371
        %7157 = vmatpush.bf16.msra.mxu0 %v5370
        %7158 = vmatpush.bf16.msra.mxu0 %v5369
        %7159 = vmatpush.bf16.msra.mxu0 %v5368
        %7160 = vmatpush.bf16.msra.mxu0 %v5367
        %7161 = vmatpush.bf16.msra.mxu0 %v5366
        %7162 = vmatpush.bf16.msra.mxu0 %v5365
        %7163 = vmatpush.bf16.msra.mxu0 %v5364
        %7164 = vmatmul.bf16.gmra.mxu0 %v540
        %v7165 = vpop.f32.mrf.mxu0
        %v7166 = vadd.f32 %v7153, %v7165
        %v7167 = vpop.f32.mrf.mxu0
        %7168 = vdwg.mxu0
        %7169 = vmatpush.bf16.msra.mxu0 %v5379
        %7170 = vmatpush.bf16.msra.mxu0 %v5378
        %7171 = vmatpush.bf16.msra.mxu0 %v5377
        %7172 = vmatpush.bf16.msra.mxu0 %v5376
        %7173 = vmatpush.bf16.msra.mxu0 %v5375
        %7174 = vmatpush.bf16.msra.mxu0 %v5374
        %7175 = vmatpush.bf16.msra.mxu0 %v5373
        %7176 = vmatpush.bf16.msra.mxu0 %v5372
        %7177 = vmatmul.bf16.gmra.mxu0 %v541
        %v7178 = vpop.f32.mrf.mxu0
        %v7179 = vadd.f32 %v7166, %v7178
        %v7180 = vpop.f32.mrf.mxu0
        %7181 = vdwg.mxu0
        %7182 = vmatpush.bf16.msra.mxu0 %v5387
        %7183 = vmatpush.bf16.msra.mxu0 %v5386
        %7184 = vmatpush.bf16.msra.mxu0 %v5385
        %7185 = vmatpush.bf16.msra.mxu0 %v5384
        %7186 = vmatpush.bf16.msra.mxu0 %v5383
        %7187 = vmatpush.bf16.msra.mxu0 %v5382
        %7188 = vmatpush.bf16.msra.mxu0 %v5381
        %7189 = vmatpush.bf16.msra.mxu0 %v5380
        %7190 = vmatmul.bf16.gmra.mxu0 %v542
        %v7191 = vpop.f32.mrf.mxu0
        %v7192 = vadd.f32 %v7179, %v7191
        %v7193 = vpop.f32.mrf.mxu0
        %7194 = vdwg.mxu0
        %7195 = vmatpush.bf16.msra.mxu0 %v5395
        %7196 = vmatpush.bf16.msra.mxu0 %v5394
        %7197 = vmatpush.bf16.msra.mxu0 %v5393
        %7198 = vmatpush.bf16.msra.mxu0 %v5392
        %7199 = vmatpush.bf16.msra.mxu0 %v5391
        %7200 = vmatpush.bf16.msra.mxu0 %v5390
        %7201 = vmatpush.bf16.msra.mxu0 %v5389
        %7202 = vmatpush.bf16.msra.mxu0 %v5388
        %7203 = vmatmul.bf16.gmra.mxu0 %v543
        %v7204 = vpop.f32.mrf.mxu0
        %v7205 = vadd.f32 %v7192, %v7204
        %v7206 = vpop.f32.mrf.mxu0
        %7207 = vdwg.mxu0
        %7208 = vmatpush.bf16.msra.mxu0 %v5403
        %7209 = vmatpush.bf16.msra.mxu0 %v5402
        %7210 = vmatpush.bf16.msra.mxu0 %v5401
        %7211 = vmatpush.bf16.msra.mxu0 %v5400
        %7212 = vmatpush.bf16.msra.mxu0 %v5399
        %7213 = vmatpush.bf16.msra.mxu0 %v5398
        %7214 = vmatpush.bf16.msra.mxu0 %v5397
        %7215 = vmatpush.bf16.msra.mxu0 %v5396
        %7216 = vmatmul.bf16.gmra.mxu0 %v544
        %v7217 = vpop.f32.mrf.mxu0
        %v7218 = vadd.f32 %v7205, %v7217
        %v7219 = vpop.f32.mrf.mxu0
        %7220 = vdwg.mxu0
        %7221 = vmatpush.bf16.msra.mxu0 %v5411
        %7222 = vmatpush.bf16.msra.mxu0 %v5410
        %7223 = vmatpush.bf16.msra.mxu0 %v5409
        %7224 = vmatpush.bf16.msra.mxu0 %v5408
        %7225 = vmatpush.bf16.msra.mxu0 %v5407
        %7226 = vmatpush.bf16.msra.mxu0 %v5406
        %7227 = vmatpush.bf16.msra.mxu0 %v5405
        %7228 = vmatpush.bf16.msra.mxu0 %v5404
        %7229 = vmatmul.bf16.gmra.mxu0 %v545
        %v7230 = vpop.f32.mrf.mxu0
        %v7231 = vadd.f32 %v7218, %v7230
        %v7232 = vpop.f32.mrf.mxu0
        %7233 = vdwg.mxu0
        %7234 = vmatpush.bf16.msra.mxu0 %v5419
        %7235 = vmatpush.bf16.msra.mxu0 %v5418
        %7236 = vmatpush.bf16.msra.mxu0 %v5417
        %7237 = vmatpush.bf16.msra.mxu0 %v5416
        %7238 = vmatpush.bf16.msra.mxu0 %v5415
        %7239 = vmatpush.bf16.msra.mxu0 %v5414
        %7240 = vmatpush.bf16.msra.mxu0 %v5413
        %7241 = vmatpush.bf16.msra.mxu0 %v5412
        %7242 = vmatmul.bf16.gmra.mxu0 %v546
        %v7243 = vpop.f32.mrf.mxu0
        %v7244 = vadd.f32 %v7231, %v7243
        %v7245 = vpop.f32.mrf.mxu0
        %7246 = vdwg.mxu0
        %v7247 = vadd.f32 %v547, %v7244
        %7248 = vst [vmem:[#allocation8] sm:$0x3] %v7247
        %p7249 = scmp.eq.s32.totalorder %s19, 1
        // Predicated region
        $region49: #{tpu_custom_call.1} parent=31 // pred_check
          %p7250 = pneg %p7249
        $region50: #{tpu_custom_call.1} parent=31 // pred_check_branch
          %7252 = sbr.rel (%p7250) target = $region52
        $region51: #{tpu_custom_call.1} parent=31 // pred_region
          %v7253 = vld [vmem:[#allocation8] sm:$0x3]
          %v7254 = vld [vmem:[#allocation7] sm:$0x1]
          %v7256 = vperm.slane %v7254, 0
          %v7258 = vadd.f32 %v7253, %v7256
          %7259 = vst [vmem:[#allocation8] sm:$0x3] %v7258
        $region52: #{tpu_custom_call.1} parent=31 // pred_fallthru
          _
        // Predicated region
        $region53: #{tpu_custom_call.1} parent=31 // pred_check
          %p7260 = pneg %p100
        $region54: #{tpu_custom_call.1} parent=31 // pred_check_branch
          %7262 = sbr.rel (%p7260) target = $region56
        $region55: #{tpu_custom_call.1} parent=31 // pred_region
          %7264 = vsyncadd [#allocation4], 0
          %s7266 = sshll.u32 [#allocation8], 4
          %s7267 = int_to_ptr.vmem [resolvable:$true] %s7266
          %s7268 = sshll.u32 %s3, 4
          %s7269 = int_to_ptr.hbm [resolvable:$true] %s7268
          %7271 = dma.vmem_to_hbm [thread:$0]  %s7267, 32, %s7269, [#allocation4]
        $region56: #{tpu_custom_call.1} parent=31 // pred_fallthru
          _
        // Predicated region
        $region57: #{tpu_custom_call.1} parent=31 // pred_check
          %p7272 = pneg %p100
        $region58: #{tpu_custom_call.1} parent=31 // pred_check_branch
          %7274 = sbr.rel (%p7272) target = $region60
        $region59: #{tpu_custom_call.1} parent=31 // pred_region
          %7276 = dma.done [#allocation4], 32
        $region60: #{tpu_custom_call.1} parent=31 // pred_fallthru
          _
      $region32: #{tpu_custom_call.1} parent=5 // pred_fallthru
        _
      %p7277 = scmp.le.s32.totalorder 2, %s14
      // Predicated region
      $region61: #{tpu_custom_call.1} parent=5 // pred_check
        %p7278 = pneg %p7277
      $region62: #{tpu_custom_call.1} parent=5 // pred_check_branch
        %7280 = sbr.rel (%p7278) target = $region64
      $region63: #{tpu_custom_call.1} parent=5 // pred_region
        %s7281 = ssub.s32 %s14, 2
      $region64: #{tpu_custom_call.1} parent=5 // pred_fallthru
        _
    $region6: #{tpu_custom_call.1} parent=1 // loop_footer
      %s18 = sadd.s32 1, %s14
    $region7: #{tpu_custom_call.1} parent=1 // loop_footer_branch
      %13 = sbr.rel target = $region3
    $region8: #{tpu_custom_call.1} parent=1 // loop_exit
      _
    %7282 = vsyncpa [#allocation3], 1
    %s7283 = scalar_lea.sflag [#allocation3], 1
    %7284 = vsyncpa %s7283, 1
    %7285 = vsyncpa [#allocation6], 1
    %s7286 = scalar_lea.sflag [#allocation6], 1
    %7287 = vsyncpa %s7286, 1
    %7288 = vsyncpa [#allocation4], 1
    %s7289 = scalar_lea.sflag [#allocation4], 1
    %7290 = vsyncpa %s7289, 1

</llo_original>
